<compile_context>
chip_gen: v6e
topology: v6e:2x2x1
jax: 0.10.0
libtpu: 0.0.40
codegen_flags: <defaults>
</compile_context>

<pallas_src>
import functools

import jax
import jax.numpy as jnp
from jax import lax
from jax.experimental import pallas as pl
from jax.experimental.pallas import tpu as pltpu


def encoder_kernel(
    emb_ref,                          # [T*B, E]  bf16  (B already padded to sublane quantum)
    wih_f_ref, wih_b_ref,             # [3, E, H] bf16  gate-major (r, z, n), pre-transposed
    gib_f_ref, gib_b_ref,             # [3, 1, H] f32   b_ih (+ b_hh folded for r/z gates)
    whh_f_ref, whh_b_ref,             # [3, H, H] f32   gate-major, pre-transposed
    bhhn_f_ref, bhhn_b_ref,           # [1, H]    f32   n-gate hidden bias (stays inside r*(.))
    fcw_f_ref, fcw_b_ref, fcb_ref,    # [H, DEC] f32 x2, [1, DEC] f32
    out_ref, hid_ref,                 # [T, B, 2H] f32, [B, DEC] f32
    gi_rf_ref, gi_zf_ref, gi_nf_ref,  # scratch [T*B, H] f32  fwd input-path gates
    gi_rb_ref, gi_zb_ref, gi_nb_ref,  # scratch [T*B, H] f32  bwd input-path gates
    out_f_ref, out_b_ref,             # scratch [T, B, H] f32 lane-dense output staging
    *, T, B, H):
    emb = emb_ref[...]

    # ---- Hoisted, gate-major input projections (off the serial recurrence path).
    # One batched MXU dot per (direction, gate), written directly into lane-dense scratch
    # (no [T*B,6H] intermediate, no copy loop, no lane-offset slicing at 3H).
    # NOTE: at production sizes make these scratches bf16 to halve VMEM (gate math below
    # still accumulates in f32 at use time).
    gi_rf_ref[...] = jnp.dot(emb, wih_f_ref[0], preferred_element_type=jnp.float32) + gib_f_ref[0]
    gi_zf_ref[...] = jnp.dot(emb, wih_f_ref[1], preferred_element_type=jnp.float32) + gib_f_ref[1]
    gi_nf_ref[...] = jnp.dot(emb, wih_f_ref[2], preferred_element_type=jnp.float32) + gib_f_ref[2]
    gi_rb_ref[...] = jnp.dot(emb, wih_b_ref[0], preferred_element_type=jnp.float32) + gib_b_ref[0]
    gi_zb_ref[...] = jnp.dot(emb, wih_b_ref[1], preferred_element_type=jnp.float32) + gib_b_ref[1]
    gi_nb_ref[...] = jnp.dot(emb, wih_b_ref[2], preferred_element_type=jnp.float32) + gib_b_ref[2]

    # ---- Loop-invariant weight reads and broadcasts hoisted OUT of the unrolled loop.
    whh_rf, whh_zf, whh_nf = whh_f_ref[0], whh_f_ref[1], whh_f_ref[2]
    whh_rb, whh_zb, whh_nb = whh_b_ref[0], whh_b_ref[1], whh_b_ref[2]
    bhhn_f = jnp.broadcast_to(bhhn_f_ref[...], (B, H))
    bhhn_b = jnp.broadcast_to(bhhn_b_ref[...], (B, H))

    def gru_step(h, gi_r, gi_z, gi_n, whh_r, whh_z, whh_n, bhh_n):
        # Three independent gate-major [B,H]@[H,H] dots; carried state and all gate math
        # stay in f32 (no per-step bf16 rounding drift).
        # TODO(synk): for large H, stage W_hh resident in the MXU (matmul_push_rhs /
        #             matmul_acc_lhs / matmul_pop) instead of re-streaming it every step.
        gh_r = jnp.dot(h, whh_r, preferred_element_type=jnp.float32)
        gh_z = jnp.dot(h, whh_z, preferred_element_type=jnp.float32)
        gh_n = jnp.dot(h, whh_n, preferred_element_type=jnp.float32)
        r = jax.nn.sigmoid(gi_r + gh_r)
        z = jax.nn.sigmoid(gi_z + gh_z)
        n = jnp.tanh(gi_n + r * (gh_n + bhh_n))
        return (1.0 - z) * n + z * h

    # ---- Fused fwd/bwd recurrence: iteration s does fwd step s and bwd step T-1-s.
    # The two independent serial chains give the scheduler ILP on a single TensorCore.
    def body(s, carry):
        h_f, h_b = carry
        rf = pl.multiple_of(s * B, B)              # sublane-aligned row offsets
        rb = pl.multiple_of((T - 1 - s) * B, B)
        h_f = gru_step(h_f,
                       gi_rf_ref[pl.ds(rf, B), :],
                       gi_zf_ref[pl.ds(rf, B), :],
                       gi_nf_ref[pl.ds(rf, B), :],
                       whh_rf, whh_zf, whh_nf, bhhn_f)
        h_b = gru_step(h_b,
                       gi_rb_ref[pl.ds(rb, B), :],
                       gi_zb_ref[pl.ds(rb, B), :],
                       gi_nb_ref[pl.ds(rb, B), :],
                       whh_rb, whh_zb, whh_nb, bhhn_b)
        out_f_ref[s] = h_f              # lane-dense staging writes (offset 0)
        out_b_ref[T - 1 - s] = h_b
        return (h_f, h_b)

    h0 = jnp.zeros((B, H), jnp.float32)
    h_f, h_b = lax.fori_loop(0, T, body, (h0, h0),
                             unroll=True if T <= 16 else 4)

    # ---- Two bulk stores of the fused output (vs 2T masked per-step lane-offset stores).
    out_ref[:, :, 0:H] = out_f_ref[...]
    out_ref[:, :, H:2 * H] = out_b_ref[...]

    # hidden = tanh(fc([h_fwd_final ; h_bwd_final])) as split dots (no lane-axis concat).
    hid_ref[...] = jnp.tanh(
        jnp.dot(h_f, fcw_f_ref[...], preferred_element_type=jnp.float32)
        + jnp.dot(h_b, fcw_b_ref[...], preferred_element_type=jnp.float32)
        + fcb_ref[...])


def init_encoder_params(key, input_dim, emb_dim, enc_hid_dim, dec_hid_dim):
    ks = jax.random.split(key, 12)
    s = 0.1
    p = {
        "embedding": jax.random.normal(ks[0], (input_dim, emb_dim), jnp.float32) * s,
        # forward GRU direction (PyTorch layout: [3H, E] / [3H, H], gate order r,z,n)
        "w_ih_f": jax.random.normal(ks[1], (3 * enc_hid_dim, emb_dim), jnp.float32) * s,
        "w_hh_f": jax.random.normal(ks[2], (3 * enc_hid_dim, enc_hid_dim), jnp.float32) * s,
        "b_ih_f": jax.random.normal(ks[3], (1, 3 * enc_hid_dim), jnp.float32) * s,
        "b_hh_f": jax.random.normal(ks[4], (1, 3 * enc_hid_dim), jnp.float32) * s,
        # backward GRU direction
        "w_ih_b": jax.random.normal(ks[5], (3 * enc_hid_dim, emb_dim), jnp.float32) * s,
        "w_hh_b": jax.random.normal(ks[6], (3 * enc_hid_dim, enc_hid_dim), jnp.float32) * s,
        "b_ih_b": jax.random.normal(ks[7], (1, 3 * enc_hid_dim), jnp.float32) * s,
        "b_hh_b": jax.random.normal(ks[8], (1, 3 * enc_hid_dim), jnp.float32) * s,
        # fc: Linear(2*enc_hid_dim -> dec_hid_dim)
        "fc_w": jax.random.normal(ks[9], (dec_hid_dim, 2 * enc_hid_dim), jnp.float32) * s,
        "fc_b": jax.random.normal(ks[10], (1, dec_hid_dim), jnp.float32) * s,
    }
    return p


@jax.jit
def encoder_forward(src, params):
    # src: [T, B] int32
    T, B = src.shape
    H = params["w_hh_f"].shape[1]
    DEC = params["fc_w"].shape[0]

    # Pad batch to the f32 sublane quantum (8) so every [B,H] operand is sublane-dense;
    # outputs are sliced back below.
    B_p = max(8, ((B + 7) // 8) * 8)
    src_p = jnp.pad(src, ((0, 0), (0, B_p - B)))            # pad with token id 0 (valid id)

    # Embedding lookup (glue) + dropout (identity at inference).
    # TODO(synk): training-mode dropout and in-kernel embedding gather (scalar prefetch /
    #             DMA row gather against the table in HBM) are not implemented.
    emb = jnp.take(params["embedding"], src_p.reshape(-1), axis=0).astype(jnp.bfloat16)  # [T*B_p, E]

    # ---- One-time weight prep (layout plumbing outside the kernel): gate-major,
    # pre-transposed, r/z hidden biases folded into the input-path biases (the n-gate
    # hidden bias stays separate because it is multiplied by r inside the cell).
    def prep_dir(w_ih, w_hh, b_ih, b_hh):
        wih = jnp.stack([w_ih[0:H].T, w_ih[H:2 * H].T, w_ih[2 * H:3 * H].T]
                        ).astype(jnp.bfloat16)                                   # [3, E, H]
        whh = jnp.stack([w_hh[0:H].T, w_hh[H:2 * H].T, w_hh[2 * H:3 * H].T])      # [3, H, H] f32
        gib = jnp.stack([b_ih[:, 0:H] + b_hh[:, 0:H],
                         b_ih[:, H:2 * H] + b_hh[:, H:2 * H],
                         b_ih[:, 2 * H:3 * H]])                                   # [3, 1, H]
        bhh_n = b_hh[:, 2 * H:3 * H]                                              # [1, H]
        return wih, whh, gib, bhh_n

    wih_f, whh_f, gib_f, bhhn_f = prep_dir(params["w_ih_f"], params["w_hh_f"],
                                           params["b_ih_f"], params["b_hh_f"])
    wih_b, whh_b, gib_b, bhhn_b = prep_dir(params["w_ih_b"], params["w_hh_b"],
                                           params["b_ih_b"], params["b_hh_b"])

    fcw_t = params["fc_w"].T                                                      # [2H, DEC]
    fcw_fwd = fcw_t[:H, :]                                                        # [H, DEC]
    fcw_bwd = fcw_t[H:, :]                                                        # [H, DEC]

    kernel = functools.partial(encoder_kernel, T=T, B=B_p, H=H)
    vmem = pl.BlockSpec(memory_space=pltpu.MemorySpace.VMEM)

    # TODO(synk): on v7x, split the two directions across the 2 TensorCores
    #             (grid=(2,), dimension_semantics=("parallel",)) with a tiny fc epilogue;
    #             kept fused here so single-TC generations (v5e/v6e) retain the
    #             interleaved-ILP dual recurrence chain.
    # TODO(synk): at production T/B/H, grid over T with BlockSpecs for emb/gi/out so the
    #             input projection and output write-back double-buffer around the loop.
    outputs_p, hidden_p = pl.pallas_call(
        kernel,
        out_shape=(
            jax.ShapeDtypeStruct((T, B_p, 2 * H), jnp.float32),
            jax.ShapeDtypeStruct((B_p, DEC), jnp.float32),
        ),
        in_specs=[vmem] * 12,
        out_specs=(vmem, vmem),
        scratch_shapes=[pltpu.VMEM((T * B_p, H), jnp.float32)] * 6
                     + [pltpu.VMEM((T, B_p, H), jnp.float32)] * 2,
        compiler_params=pltpu.CompilerParams(vmem_limit_bytes=32 * 1024 * 1024),
    )(
        emb,
        wih_f, wih_b,
        gib_f, gib_b,
        whh_f, whh_b,
        bhhn_f, bhhn_b,
        fcw_fwd, fcw_bwd, params["fc_b"],
    )
    return outputs_p[:, :B, :], hidden_p[:B, :]


if __name__ == "__main__":
    INPUT_DIM = 50     # vocab size
    EMB_DIM = 32
    ENC_HID_DIM = 16
    DEC_HID_DIM = 32
    T, B = 8, 2

    key = jax.random.PRNGKey(0)
    k_params, k_src = jax.random.split(key)

    params = init_encoder_params(k_params, INPUT_DIM, EMB_DIM, ENC_HID_DIM, DEC_HID_DIM)
    src = jax.random.randint(k_src, (T, B), 0, INPUT_DIM, dtype=jnp.int32)

    outputs, hidden = encoder_forward(src, params)
    jax.block_until_ready((outputs, hidden))

    assert outputs.shape == (T, B, 2 * ENC_HID_DIM)
    assert hidden.shape == (B, DEC_HID_DIM)
    print("KERNEL_OK")
</pallas_src>

<mosaic_0001>
module attributes {stable_mosaic.version = 11 : i64} {
  func.func @encoder_kernel(%arg0: memref<64x32xbf16, #tpu.memory_space<vmem>>, %arg1: memref<3x32x16xbf16, #tpu.memory_space<vmem>>, %arg2: memref<3x32x16xbf16, #tpu.memory_space<vmem>>, %arg3: memref<3x1x16xf32, #tpu.memory_space<vmem>>, %arg4: memref<3x1x16xf32, #tpu.memory_space<vmem>>, %arg5: memref<3x16x16xf32, #tpu.memory_space<vmem>>, %arg6: memref<3x16x16xf32, #tpu.memory_space<vmem>>, %arg7: memref<1x16xf32, #tpu.memory_space<vmem>>, %arg8: memref<1x16xf32, #tpu.memory_space<vmem>>, %arg9: memref<16x32xf32, #tpu.memory_space<vmem>>, %arg10: memref<16x32xf32, #tpu.memory_space<vmem>>, %arg11: memref<1x32xf32, #tpu.memory_space<vmem>>, %arg12: memref<8x8x32xf32, #tpu.memory_space<vmem>>, %arg13: memref<8x32xf32, #tpu.memory_space<vmem>>, %arg14: memref<64x16xf32, #tpu.memory_space<vmem>>, %arg15: memref<64x16xf32, #tpu.memory_space<vmem>>, %arg16: memref<64x16xf32, #tpu.memory_space<vmem>>, %arg17: memref<64x16xf32, #tpu.memory_space<vmem>>, %arg18: memref<64x16xf32, #tpu.memory_space<vmem>>, %arg19: memref<64x16xf32, #tpu.memory_space<vmem>>, %arg20: memref<8x8x16xf32, #tpu.memory_space<vmem>>, %arg21: memref<8x8x16xf32, #tpu.memory_space<vmem>>) attributes {dimension_semantics = [], scalar_prefetch = 0 : i64, scratch_operands = 8 : i64, tpu.core_type = #tpu.core_type<tc>} {
    %c0 = arith.constant 0 : index
    %c0_0 = arith.constant 0 : index
    %0 = vector.load %arg0[%c0, %c0_0] : memref<64x32xbf16, #tpu.memory_space<vmem>>, vector<64x32xbf16>
    %c0_1 = arith.constant 0 : index
    %c0_2 = arith.constant 0 : index
    %c0_3 = arith.constant 0 : index
    %1 = vector.load %arg1[%c0_1, %c0_2, %c0_3] : memref<3x32x16xbf16, #tpu.memory_space<vmem>>, vector<1x32x16xbf16>
    %2 = vector.shape_cast %1 : vector<1x32x16xbf16> to vector<32x16xbf16>
    %cst = arith.constant dense<0.000000e+00> : vector<64x16xf32>
    %3 = tpu.matmul %0, %2, %cst {dimension_numbers = #tpu.dot_dimension_numbers<[1], [0], [0], [1], [0, 0, 1, 1], [], []>} : vector<64x32xbf16>, vector<32x16xbf16>, vector<64x16xf32> -> vector<64x16xf32>
    %c0_4 = arith.constant 0 : index
    %c0_5 = arith.constant 0 : index
    %c0_6 = arith.constant 0 : index
    %4 = vector.load %arg3[%c0_4, %c0_5, %c0_6] : memref<3x1x16xf32, #tpu.memory_space<vmem>>, vector<1x1x16xf32>
    %5 = vector.shape_cast %4 : vector<1x1x16xf32> to vector<1x16xf32>
    %6 = vector.broadcast %5 : vector<1x16xf32> to vector<64x16xf32>
    %7 = arith.addf %3, %6 : vector<64x16xf32>
    %c0_7 = arith.constant 0 : index
    %c0_8 = arith.constant 0 : index
    %8 = vector.load %arg14[%c0_7, %c0_8] : memref<64x16xf32, #tpu.memory_space<vmem>>, vector<64x16xf32>
    tpu.vector_store %arg14[%c0_7, %c0_8], %7 {strides = array<i32>} : memref<64x16xf32, #tpu.memory_space<vmem>>, vector<64x16xf32>,
    %c1 = arith.constant 1 : index
    %c0_9 = arith.constant 0 : index
    %c0_10 = arith.constant 0 : index
    %9 = vector.load %arg1[%c1, %c0_9, %c0_10] : memref<3x32x16xbf16, #tpu.memory_space<vmem>>, vector<1x32x16xbf16>
    %10 = vector.shape_cast %9 : vector<1x32x16xbf16> to vector<32x16xbf16>
    %cst_11 = arith.constant dense<0.000000e+00> : vector<64x16xf32>
    %11 = tpu.matmul %0, %10, %cst_11 {dimension_numbers = #tpu.dot_dimension_numbers<[1], [0], [0], [1], [0, 0, 1, 1], [], []>} : vector<64x32xbf16>, vector<32x16xbf16>, vector<64x16xf32> -> vector<64x16xf32>
    %c1_12 = arith.constant 1 : index
    %c0_13 = arith.constant 0 : index
    %c0_14 = arith.constant 0 : index
    %12 = vector.load %arg3[%c1_12, %c0_13, %c0_14] : memref<3x1x16xf32, #tpu.memory_space<vmem>>, vector<1x1x16xf32>
    %13 = vector.shape_cast %12 : vector<1x1x16xf32> to vector<1x16xf32>
    %14 = vector.broadcast %13 : vector<1x16xf32> to vector<64x16xf32>
    %15 = arith.addf %11, %14 : vector<64x16xf32>
    %c0_15 = arith.constant 0 : index
    %c0_16 = arith.constant 0 : index
    %16 = vector.load %arg15[%c0_15, %c0_16] : memref<64x16xf32, #tpu.memory_space<vmem>>, vector<64x16xf32>
    tpu.vector_store %arg15[%c0_15, %c0_16], %15 {strides = array<i32>} : memref<64x16xf32, #tpu.memory_space<vmem>>, vector<64x16xf32>,
    %c2 = arith.constant 2 : index
    %c0_17 = arith.constant 0 : index
    %c0_18 = arith.constant 0 : index
    %17 = vector.load %arg1[%c2, %c0_17, %c0_18] : memref<3x32x16xbf16, #tpu.memory_space<vmem>>, vector<1x32x16xbf16>
    %18 = vector.shape_cast %17 : vector<1x32x16xbf16> to vector<32x16xbf16>
    %cst_19 = arith.constant dense<0.000000e+00> : vector<64x16xf32>
    %19 = tpu.matmul %0, %18, %cst_19 {dimension_numbers = #tpu.dot_dimension_numbers<[1], [0], [0], [1], [0, 0, 1, 1], [], []>} : vector<64x32xbf16>, vector<32x16xbf16>, vector<64x16xf32> -> vector<64x16xf32>
    %c2_20 = arith.constant 2 : index
    %c0_21 = arith.constant 0 : index
    %c0_22 = arith.constant 0 : index
    %20 = vector.load %arg3[%c2_20, %c0_21, %c0_22] : memref<3x1x16xf32, #tpu.memory_space<vmem>>, vector<1x1x16xf32>
    %21 = vector.shape_cast %20 : vector<1x1x16xf32> to vector<1x16xf32>
    %22 = vector.broadcast %21 : vector<1x16xf32> to vector<64x16xf32>
    %23 = arith.addf %19, %22 : vector<64x16xf32>
    %c0_23 = arith.constant 0 : index
    %c0_24 = arith.constant 0 : index
    %24 = vector.load %arg16[%c0_23, %c0_24] : memref<64x16xf32, #tpu.memory_space<vmem>>, vector<64x16xf32>
    tpu.vector_store %arg16[%c0_23, %c0_24], %23 {strides = array<i32>} : memref<64x16xf32, #tpu.memory_space<vmem>>, vector<64x16xf32>,
    %c0_25 = arith.constant 0 : index
    %c0_26 = arith.constant 0 : index
    %c0_27 = arith.constant 0 : index
    %25 = vector.load %arg2[%c0_25, %c0_26, %c0_27] : memref<3x32x16xbf16, #tpu.memory_space<vmem>>, vector<1x32x16xbf16>
    %26 = vector.shape_cast %25 : vector<1x32x16xbf16> to vector<32x16xbf16>
    %cst_28 = arith.constant dense<0.000000e+00> : vector<64x16xf32>
    %27 = tpu.matmul %0, %26, %cst_28 {dimension_numbers = #tpu.dot_dimension_numbers<[1], [0], [0], [1], [0, 0, 1, 1], [], []>} : vector<64x32xbf16>, vector<32x16xbf16>, vector<64x16xf32> -> vector<64x16xf32>
    %c0_29 = arith.constant 0 : index
    %c0_30 = arith.constant 0 : index
    %c0_31 = arith.constant 0 : index
    %28 = vector.load %arg4[%c0_29, %c0_30, %c0_31] : memref<3x1x16xf32, #tpu.memory_space<vmem>>, vector<1x1x16xf32>
    %29 = vector.shape_cast %28 : vector<1x1x16xf32> to vector<1x16xf32>
    %30 = vector.broadcast %29 : vector<1x16xf32> to vector<64x16xf32>
    %31 = arith.addf %27, %30 : vector<64x16xf32>
    %c0_32 = arith.constant 0 : index
    %c0_33 = arith.constant 0 : index
    %32 = vector.load %arg17[%c0_32, %c0_33] : memref<64x16xf32, #tpu.memory_space<vmem>>, vector<64x16xf32>
    tpu.vector_store %arg17[%c0_32, %c0_33], %31 {strides = array<i32>} : memref<64x16xf32, #tpu.memory_space<vmem>>, vector<64x16xf32>,
    %c1_34 = arith.constant 1 : index
    %c0_35 = arith.constant 0 : index
    %c0_36 = arith.constant 0 : index
    %33 = vector.load %arg2[%c1_34, %c0_35, %c0_36] : memref<3x32x16xbf16, #tpu.memory_space<vmem>>, vector<1x32x16xbf16>
    %34 = vector.shape_cast %33 : vector<1x32x16xbf16> to vector<32x16xbf16>
    %cst_37 = arith.constant dense<0.000000e+00> : vector<64x16xf32>
    %35 = tpu.matmul %0, %34, %cst_37 {dimension_numbers = #tpu.dot_dimension_numbers<[1], [0], [0], [1], [0, 0, 1, 1], [], []>} : vector<64x32xbf16>, vector<32x16xbf16>, vector<64x16xf32> -> vector<64x16xf32>
    %c1_38 = arith.constant 1 : index
    %c0_39 = arith.constant 0 : index
    %c0_40 = arith.constant 0 : index
    %36 = vector.load %arg4[%c1_38, %c0_39, %c0_40] : memref<3x1x16xf32, #tpu.memory_space<vmem>>, vector<1x1x16xf32>
    %37 = vector.shape_cast %36 : vector<1x1x16xf32> to vector<1x16xf32>
    %38 = vector.broadcast %37 : vector<1x16xf32> to vector<64x16xf32>
    %39 = arith.addf %35, %38 : vector<64x16xf32>
    %c0_41 = arith.constant 0 : index
    %c0_42 = arith.constant 0 : index
    %40 = vector.load %arg18[%c0_41, %c0_42] : memref<64x16xf32, #tpu.memory_space<vmem>>, vector<64x16xf32>
    tpu.vector_store %arg18[%c0_41, %c0_42], %39 {strides = array<i32>} : memref<64x16xf32, #tpu.memory_space<vmem>>, vector<64x16xf32>,
    %c2_43 = arith.constant 2 : index
    %c0_44 = arith.constant 0 : index
    %c0_45 = arith.constant 0 : index
    %41 = vector.load %arg2[%c2_43, %c0_44, %c0_45] : memref<3x32x16xbf16, #tpu.memory_space<vmem>>, vector<1x32x16xbf16>
    %42 = vector.shape_cast %41 : vector<1x32x16xbf16> to vector<32x16xbf16>
    %cst_46 = arith.constant dense<0.000000e+00> : vector<64x16xf32>
    %43 = tpu.matmul %0, %42, %cst_46 {dimension_numbers = #tpu.dot_dimension_numbers<[1], [0], [0], [1], [0, 0, 1, 1], [], []>} : vector<64x32xbf16>, vector<32x16xbf16>, vector<64x16xf32> -> vector<64x16xf32>
    %c2_47 = arith.constant 2 : index
    %c0_48 = arith.constant 0 : index
    %c0_49 = arith.constant 0 : index
    %44 = vector.load %arg4[%c2_47, %c0_48, %c0_49] : memref<3x1x16xf32, #tpu.memory_space<vmem>>, vector<1x1x16xf32>
    %45 = vector.shape_cast %44 : vector<1x1x16xf32> to vector<1x16xf32>
    %46 = vector.broadcast %45 : vector<1x16xf32> to vector<64x16xf32>
    %47 = arith.addf %43, %46 : vector<64x16xf32>
    %c0_50 = arith.constant 0 : index
    %c0_51 = arith.constant 0 : index
    %48 = vector.load %arg19[%c0_50, %c0_51] : memref<64x16xf32, #tpu.memory_space<vmem>>, vector<64x16xf32>
    tpu.vector_store %arg19[%c0_50, %c0_51], %47 {strides = array<i32>} : memref<64x16xf32, #tpu.memory_space<vmem>>, vector<64x16xf32>,
    %c0_52 = arith.constant 0 : index
    %c0_53 = arith.constant 0 : index
    %c0_54 = arith.constant 0 : index
    %49 = vector.load %arg5[%c0_52, %c0_53, %c0_54] : memref<3x16x16xf32, #tpu.memory_space<vmem>>, vector<1x16x16xf32>
    %50 = vector.shape_cast %49 : vector<1x16x16xf32> to vector<16x16xf32>
    %c1_55 = arith.constant 1 : index
    %c0_56 = arith.constant 0 : index
    %c0_57 = arith.constant 0 : index
    %51 = vector.load %arg5[%c1_55, %c0_56, %c0_57] : memref<3x16x16xf32, #tpu.memory_space<vmem>>, vector<1x16x16xf32>
    %52 = vector.shape_cast %51 : vector<1x16x16xf32> to vector<16x16xf32>
    %c2_58 = arith.constant 2 : index
    %c0_59 = arith.constant 0 : index
    %c0_60 = arith.constant 0 : index
    %53 = vector.load %arg5[%c2_58, %c0_59, %c0_60] : memref<3x16x16xf32, #tpu.memory_space<vmem>>, vector<1x16x16xf32>
    %54 = vector.shape_cast %53 : vector<1x16x16xf32> to vector<16x16xf32>
    %c0_61 = arith.constant 0 : index
    %c0_62 = arith.constant 0 : index
    %c0_63 = arith.constant 0 : index
    %55 = vector.load %arg6[%c0_61, %c0_62, %c0_63] : memref<3x16x16xf32, #tpu.memory_space<vmem>>, vector<1x16x16xf32>
    %56 = vector.shape_cast %55 : vector<1x16x16xf32> to vector<16x16xf32>
    %c1_64 = arith.constant 1 : index
    %c0_65 = arith.constant 0 : index
    %c0_66 = arith.constant 0 : index
    %57 = vector.load %arg6[%c1_64, %c0_65, %c0_66] : memref<3x16x16xf32, #tpu.memory_space<vmem>>, vector<1x16x16xf32>
    %58 = vector.shape_cast %57 : vector<1x16x16xf32> to vector<16x16xf32>
    %c2_67 = arith.constant 2 : index
    %c0_68 = arith.constant 0 : index
    %c0_69 = arith.constant 0 : index
    %59 = vector.load %arg6[%c2_67, %c0_68, %c0_69] : memref<3x16x16xf32, #tpu.memory_space<vmem>>, vector<1x16x16xf32>
    %60 = vector.shape_cast %59 : vector<1x16x16xf32> to vector<16x16xf32>
    %c0_70 = arith.constant 0 : index
    %c0_71 = arith.constant 0 : index
    %61 = vector.load %arg7[%c0_70, %c0_71] : memref<1x16xf32, #tpu.memory_space<vmem>>, vector<1x16xf32>
    %62 = vector.shape_cast %61 : vector<1x16xf32> to vector<1x16xf32>
    %63 = vector.broadcast %62 : vector<1x16xf32> to vector<8x16xf32>
    %c0_72 = arith.constant 0 : index
    %c0_73 = arith.constant 0 : index
    %64 = vector.load %arg8[%c0_72, %c0_73] : memref<1x16xf32, #tpu.memory_space<vmem>>, vector<1x16xf32>
    %65 = vector.shape_cast %64 : vector<1x16xf32> to vector<1x16xf32>
    %66 = vector.broadcast %65 : vector<1x16xf32> to vector<8x16xf32>
    %cst_74 = arith.constant 0.000000e+00 : f32
    %67 = vector.broadcast %cst_74 : f32 to vector<8x16xf32>
    %c0_i32 = arith.constant 0 : i32
    %c8_i32 = arith.constant 8 : i32
    %68 = arith.muli %c0_i32, %c8_i32 : i32
    %69 = tpu.assume_multiple %68, 8 : i32
    %c7_i32 = arith.constant 7 : i32
    %70 = arith.subi %c7_i32, %c0_i32 : i32
    %c8_i32_75 = arith.constant 8 : i32
    %71 = arith.muli %70, %c8_i32_75 : i32
    %72 = tpu.assume_multiple %71, 8 : i32
    %73 = arith.index_cast %69 : i32 to index
    %c0_76 = arith.constant 0 : index
    %74 = vector.load %arg14[%73, %c0_76] : memref<64x16xf32, #tpu.memory_space<vmem>>, vector<8x16xf32>
    %75 = arith.index_cast %69 : i32 to index
    %c0_77 = arith.constant 0 : index
    %76 = vector.load %arg15[%75, %c0_77] : memref<64x16xf32, #tpu.memory_space<vmem>>, vector<8x16xf32>
    %77 = arith.index_cast %69 : i32 to index
    %c0_78 = arith.constant 0 : index
    %78 = vector.load %arg16[%77, %c0_78] : memref<64x16xf32, #tpu.memory_space<vmem>>, vector<8x16xf32>
    %cst_79 = arith.constant dense<0.000000e+00> : vector<8x16xf32>
    %79 = tpu.matmul %67, %50, %cst_79 {dimension_numbers = #tpu.dot_dimension_numbers<[1], [0], [0], [1], [0, 0, 1, 1], [], []>} : vector<8x16xf32>, vector<16x16xf32>, vector<8x16xf32> -> vector<8x16xf32>
    %cst_80 = arith.constant dense<0.000000e+00> : vector<8x16xf32>
    %80 = tpu.matmul %67, %52, %cst_80 {dimension_numbers = #tpu.dot_dimension_numbers<[1], [0], [0], [1], [0, 0, 1, 1], [], []>} : vector<8x16xf32>, vector<16x16xf32>, vector<8x16xf32> -> vector<8x16xf32>
    %cst_81 = arith.constant dense<0.000000e+00> : vector<8x16xf32>
    %81 = tpu.matmul %67, %54, %cst_81 {dimension_numbers = #tpu.dot_dimension_numbers<[1], [0], [0], [1], [0, 0, 1, 1], [], []>} : vector<8x16xf32>, vector<16x16xf32>, vector<8x16xf32> -> vector<8x16xf32>
    %82 = arith.addf %74, %79 : vector<8x16xf32>
    %83 = arith.negf %82 : vector<8x16xf32>
    %84 = math.exp %83 : vector<8x16xf32>
    %cst_82 = arith.constant 1.000000e+00 : f32
    %85 = vector.broadcast %cst_82 : f32 to vector<8x16xf32>
    %86 = arith.addf %85, %84 : vector<8x16xf32>
    %87 = arith.divf %85, %86 : vector<8x16xf32>
    %88 = arith.addf %76, %80 : vector<8x16xf32>
    %89 = arith.negf %88 : vector<8x16xf32>
    %90 = math.exp %89 : vector<8x16xf32>
    %cst_83 = arith.constant 1.000000e+00 : f32
    %91 = vector.broadcast %cst_83 : f32 to vector<8x16xf32>
    %92 = arith.addf %91, %90 : vector<8x16xf32>
    %93 = arith.divf %91, %92 : vector<8x16xf32>
    %94 = arith.addf %81, %63 : vector<8x16xf32>
    %95 = arith.mulf %87, %94 : vector<8x16xf32>
    %96 = arith.addf %78, %95 : vector<8x16xf32>
    %97 = math.tanh %96 : vector<8x16xf32>
    %cst_84 = arith.constant 1.000000e+00 : f32
    %98 = vector.broadcast %cst_84 : f32 to vector<8x16xf32>
    %99 = arith.subf %98, %93 : vector<8x16xf32>
    %100 = arith.mulf %99, %97 : vector<8x16xf32>
    %101 = arith.mulf %93, %67 : vector<8x16xf32>
    %102 = arith.addf %100, %101 : vector<8x16xf32>
    %103 = arith.index_cast %72 : i32 to index
    %c0_85 = arith.constant 0 : index
    %104 = vector.load %arg17[%103, %c0_85] : memref<64x16xf32, #tpu.memory_space<vmem>>, vector<8x16xf32>
    %105 = arith.index_cast %72 : i32 to index
    %c0_86 = arith.constant 0 : index
    %106 = vector.load %arg18[%105, %c0_86] : memref<64x16xf32, #tpu.memory_space<vmem>>, vector<8x16xf32>
    %107 = arith.index_cast %72 : i32 to index
    %c0_87 = arith.constant 0 : index
    %108 = vector.load %arg19[%107, %c0_87] : memref<64x16xf32, #tpu.memory_space<vmem>>, vector<8x16xf32>
    %cst_88 = arith.constant dense<0.000000e+00> : vector<8x16xf32>
    %109 = tpu.matmul %67, %56, %cst_88 {dimension_numbers = #tpu.dot_dimension_numbers<[1], [0], [0], [1], [0, 0, 1, 1], [], []>} : vector<8x16xf32>, vector<16x16xf32>, vector<8x16xf32> -> vector<8x16xf32>
    %cst_89 = arith.constant dense<0.000000e+00> : vector<8x16xf32>
    %110 = tpu.matmul %67, %58, %cst_89 {dimension_numbers = #tpu.dot_dimension_numbers<[1], [0], [0], [1], [0, 0, 1, 1], [], []>} : vector<8x16xf32>, vector<16x16xf32>, vector<8x16xf32> -> vector<8x16xf32>
    %cst_90 = arith.constant dense<0.000000e+00> : vector<8x16xf32>
    %111 = tpu.matmul %67, %60, %cst_90 {dimension_numbers = #tpu.dot_dimension_numbers<[1], [0], [0], [1], [0, 0, 1, 1], [], []>} : vector<8x16xf32>, vector<16x16xf32>, vector<8x16xf32> -> vector<8x16xf32>
    %112 = arith.addf %104, %109 : vector<8x16xf32>
    %113 = arith.negf %112 : vector<8x16xf32>
    %114 = math.exp %113 : vector<8x16xf32>
    %cst_91 = arith.constant 1.000000e+00 : f32
    %115 = vector.broadcast %cst_91 : f32 to vector<8x16xf32>
    %116 = arith.addf %115, %114 : vector<8x16xf32>
    %117 = arith.divf %115, %116 : vector<8x16xf32>
    %118 = arith.addf %106, %110 : vector<8x16xf32>
    %119 = arith.negf %118 : vector<8x16xf32>
    %120 = math.exp %119 : vector<8x16xf32>
    %cst_92 = arith.constant 1.000000e+00 : f32
    %121 = vector.broadcast %cst_92 : f32 to vector<8x16xf32>
    %122 = arith.addf %121, %120 : vector<8x16xf32>
    %123 = arith.divf %121, %122 : vector<8x16xf32>
    %124 = arith.addf %111, %66 : vector<8x16xf32>
    %125 = arith.mulf %117, %124 : vector<8x16xf32>
    %126 = arith.addf %108, %125 : vector<8x16xf32>
    %127 = math.tanh %126 : vector<8x16xf32>
    %cst_93 = arith.constant 1.000000e+00 : f32
    %128 = vector.broadcast %cst_93 : f32 to vector<8x16xf32>
    %129 = arith.subf %128, %123 : vector<8x16xf32>
    %130 = arith.mulf %129, %127 : vector<8x16xf32>
    %131 = arith.mulf %123, %67 : vector<8x16xf32>
    %132 = arith.addf %130, %131 : vector<8x16xf32>
    %133 = arith.index_cast %c0_i32 : i32 to index
    %c0_94 = arith.constant 0 : index
    %c0_95 = arith.constant 0 : index
    %134 = vector.load %arg20[%133, %c0_94, %c0_95] : memref<8x8x16xf32, #tpu.memory_space<vmem>>, vector<1x8x16xf32>
    %135 = vector.shape_cast %134 : vector<1x8x16xf32> to vector<8x16xf32>
    %136 = vector.shape_cast %102 : vector<8x16xf32> to vector<1x8x16xf32>
    tpu.vector_store %arg20[%133, %c0_94, %c0_95], %136 {strides = array<i32>} : memref<8x8x16xf32, #tpu.memory_space<vmem>>, vector<1x8x16xf32>,
    %c7_i32_96 = arith.constant 7 : i32
    %137 = arith.subi %c7_i32_96, %c0_i32 : i32
    %138 = arith.index_cast %137 : i32 to index
    %c0_97 = arith.constant 0 : index
    %c0_98 = arith.constant 0 : index
    %139 = vector.load %arg21[%138, %c0_97, %c0_98] : memref<8x8x16xf32, #tpu.memory_space<vmem>>, vector<1x8x16xf32>
    %140 = vector.shape_cast %139 : vector<1x8x16xf32> to vector<8x16xf32>
    %141 = vector.shape_cast %132 : vector<8x16xf32> to vector<1x8x16xf32>
    tpu.vector_store %arg21[%138, %c0_97, %c0_98], %141 {strides = array<i32>} : memref<8x8x16xf32, #tpu.memory_space<vmem>>, vector<1x8x16xf32>,
    %c1_i32 = arith.constant 1 : i32
    %c8_i32_99 = arith.constant 8 : i32
    %142 = arith.muli %c1_i32, %c8_i32_99 : i32
    %143 = tpu.assume_multiple %142, 8 : i32
    %c7_i32_100 = arith.constant 7 : i32
    %144 = arith.subi %c7_i32_100, %c1_i32 : i32
    %c8_i32_101 = arith.constant 8 : i32
    %145 = arith.muli %144, %c8_i32_101 : i32
    %146 = tpu.assume_multiple %145, 8 : i32
    %147 = arith.index_cast %143 : i32 to index
    %c0_102 = arith.constant 0 : index
    %148 = vector.load %arg14[%147, %c0_102] : memref<64x16xf32, #tpu.memory_space<vmem>>, vector<8x16xf32>
    %149 = arith.index_cast %143 : i32 to index
    %c0_103 = arith.constant 0 : index
    %150 = vector.load %arg15[%149, %c0_103] : memref<64x16xf32, #tpu.memory_space<vmem>>, vector<8x16xf32>
    %151 = arith.index_cast %143 : i32 to index
    %c0_104 = arith.constant 0 : index
    %152 = vector.load %arg16[%151, %c0_104] : memref<64x16xf32, #tpu.memory_space<vmem>>, vector<8x16xf32>
    %cst_105 = arith.constant dense<0.000000e+00> : vector<8x16xf32>
    %153 = tpu.matmul %102, %50, %cst_105 {dimension_numbers = #tpu.dot_dimension_numbers<[1], [0], [0], [1], [0, 0, 1, 1], [], []>} : vector<8x16xf32>, vector<16x16xf32>, vector<8x16xf32> -> vector<8x16xf32>
    %cst_106 = arith.constant dense<0.000000e+00> : vector<8x16xf32>
    %154 = tpu.matmul %102, %52, %cst_106 {dimension_numbers = #tpu.dot_dimension_numbers<[1], [0], [0], [1], [0, 0, 1, 1], [], []>} : vector<8x16xf32>, vector<16x16xf32>, vector<8x16xf32> -> vector<8x16xf32>
    %cst_107 = arith.constant dense<0.000000e+00> : vector<8x16xf32>
    %155 = tpu.matmul %102, %54, %cst_107 {dimension_numbers = #tpu.dot_dimension_numbers<[1], [0], [0], [1], [0, 0, 1, 1], [], []>} : vector<8x16xf32>, vector<16x16xf32>, vector<8x16xf32> -> vector<8x16xf32>
    %156 = arith.addf %148, %153 : vector<8x16xf32>
    %157 = arith.negf %156 : vector<8x16xf32>
    %158 = math.exp %157 : vector<8x16xf32>
    %cst_108 = arith.constant 1.000000e+00 : f32
    %159 = vector.broadcast %cst_108 : f32 to vector<8x16xf32>
    %160 = arith.addf %159, %158 : vector<8x16xf32>
    %161 = arith.divf %159, %160 : vector<8x16xf32>
    %162 = arith.addf %150, %154 : vector<8x16xf32>
    %163 = arith.negf %162 : vector<8x16xf32>
    %164 = math.exp %163 : vector<8x16xf32>
    %cst_109 = arith.constant 1.000000e+00 : f32
    %165 = vector.broadcast %cst_109 : f32 to vector<8x16xf32>
    %166 = arith.addf %165, %164 : vector<8x16xf32>
    %167 = arith.divf %165, %166 : vector<8x16xf32>
    %168 = arith.addf %155, %63 : vector<8x16xf32>
    %169 = arith.mulf %161, %168 : vector<8x16xf32>
    %170 = arith.addf %152, %169 : vector<8x16xf32>
    %171 = math.tanh %170 : vector<8x16xf32>
    %cst_110 = arith.constant 1.000000e+00 : f32
    %172 = vector.broadcast %cst_110 : f32 to vector<8x16xf32>
    %173 = arith.subf %172, %167 : vector<8x16xf32>
    %174 = arith.mulf %173, %171 : vector<8x16xf32>
    %175 = arith.mulf %167, %102 : vector<8x16xf32>
    %176 = arith.addf %174, %175 : vector<8x16xf32>
    %177 = arith.index_cast %146 : i32 to index
    %c0_111 = arith.constant 0 : index
    %178 = vector.load %arg17[%177, %c0_111] : memref<64x16xf32, #tpu.memory_space<vmem>>, vector<8x16xf32>
    %179 = arith.index_cast %146 : i32 to index
    %c0_112 = arith.constant 0 : index
    %180 = vector.load %arg18[%179, %c0_112] : memref<64x16xf32, #tpu.memory_space<vmem>>, vector<8x16xf32>
    %181 = arith.index_cast %146 : i32 to index
    %c0_113 = arith.constant 0 : index
    %182 = vector.load %arg19[%181, %c0_113] : memref<64x16xf32, #tpu.memory_space<vmem>>, vector<8x16xf32>
    %cst_114 = arith.constant dense<0.000000e+00> : vector<8x16xf32>
    %183 = tpu.matmul %132, %56, %cst_114 {dimension_numbers = #tpu.dot_dimension_numbers<[1], [0], [0], [1], [0, 0, 1, 1], [], []>} : vector<8x16xf32>, vector<16x16xf32>, vector<8x16xf32> -> vector<8x16xf32>
    %cst_115 = arith.constant dense<0.000000e+00> : vector<8x16xf32>
    %184 = tpu.matmul %132, %58, %cst_115 {dimension_numbers = #tpu.dot_dimension_numbers<[1], [0], [0], [1], [0, 0, 1, 1], [], []>} : vector<8x16xf32>, vector<16x16xf32>, vector<8x16xf32> -> vector<8x16xf32>
    %cst_116 = arith.constant dense<0.000000e+00> : vector<8x16xf32>
    %185 = tpu.matmul %132, %60, %cst_116 {dimension_numbers = #tpu.dot_dimension_numbers<[1], [0], [0], [1], [0, 0, 1, 1], [], []>} : vector<8x16xf32>, vector<16x16xf32>, vector<8x16xf32> -> vector<8x16xf32>
    %186 = arith.addf %178, %183 : vector<8x16xf32>
    %187 = arith.negf %186 : vector<8x16xf32>
    %188 = math.exp %187 : vector<8x16xf32>
    %cst_117 = arith.constant 1.000000e+00 : f32
    %189 = vector.broadcast %cst_117 : f32 to vector<8x16xf32>
    %190 = arith.addf %189, %188 : vector<8x16xf32>
    %191 = arith.divf %189, %190 : vector<8x16xf32>
    %192 = arith.addf %180, %184 : vector<8x16xf32>
    %193 = arith.negf %192 : vector<8x16xf32>
    %194 = math.exp %193 : vector<8x16xf32>
    %cst_118 = arith.constant 1.000000e+00 : f32
    %195 = vector.broadcast %cst_118 : f32 to vector<8x16xf32>
    %196 = arith.addf %195, %194 : vector<8x16xf32>
    %197 = arith.divf %195, %196 : vector<8x16xf32>
    %198 = arith.addf %185, %66 : vector<8x16xf32>
    %199 = arith.mulf %191, %198 : vector<8x16xf32>
    %200 = arith.addf %182, %199 : vector<8x16xf32>
    %201 = math.tanh %200 : vector<8x16xf32>
    %cst_119 = arith.constant 1.000000e+00 : f32
    %202 = vector.broadcast %cst_119 : f32 to vector<8x16xf32>
    %203 = arith.subf %202, %197 : vector<8x16xf32>
    %204 = arith.mulf %203, %201 : vector<8x16xf32>
    %205 = arith.mulf %197, %132 : vector<8x16xf32>
    %206 = arith.addf %204, %205 : vector<8x16xf32>
    %207 = arith.index_cast %c1_i32 : i32 to index
    %c0_120 = arith.constant 0 : index
    %c0_121 = arith.constant 0 : index
    %208 = vector.load %arg20[%207, %c0_120, %c0_121] : memref<8x8x16xf32, #tpu.memory_space<vmem>>, vector<1x8x16xf32>
    %209 = vector.shape_cast %208 : vector<1x8x16xf32> to vector<8x16xf32>
    %210 = vector.shape_cast %176 : vector<8x16xf32> to vector<1x8x16xf32>
    tpu.vector_store %arg20[%207, %c0_120, %c0_121], %210 {strides = array<i32>} : memref<8x8x16xf32, #tpu.memory_space<vmem>>, vector<1x8x16xf32>,
    %c7_i32_122 = arith.constant 7 : i32
    %211 = arith.subi %c7_i32_122, %c1_i32 : i32
    %212 = arith.index_cast %211 : i32 to index
    %c0_123 = arith.constant 0 : index
    %c0_124 = arith.constant 0 : index
    %213 = vector.load %arg21[%212, %c0_123, %c0_124] : memref<8x8x16xf32, #tpu.memory_space<vmem>>, vector<1x8x16xf32>
    %214 = vector.shape_cast %213 : vector<1x8x16xf32> to vector<8x16xf32>
    %215 = vector.shape_cast %206 : vector<8x16xf32> to vector<1x8x16xf32>
    tpu.vector_store %arg21[%212, %c0_123, %c0_124], %215 {strides = array<i32>} : memref<8x8x16xf32, #tpu.memory_space<vmem>>, vector<1x8x16xf32>,
    %c2_i32 = arith.constant 2 : i32
    %c8_i32_125 = arith.constant 8 : i32
    %216 = arith.muli %c2_i32, %c8_i32_125 : i32
    %217 = tpu.assume_multiple %216, 8 : i32
    %c7_i32_126 = arith.constant 7 : i32
    %218 = arith.subi %c7_i32_126, %c2_i32 : i32
    %c8_i32_127 = arith.constant 8 : i32
    %219 = arith.muli %218, %c8_i32_127 : i32
    %220 = tpu.assume_multiple %219, 8 : i32
    %221 = arith.index_cast %217 : i32 to index
    %c0_128 = arith.constant 0 : index
    %222 = vector.load %arg14[%221, %c0_128] : memref<64x16xf32, #tpu.memory_space<vmem>>, vector<8x16xf32>
    %223 = arith.index_cast %217 : i32 to index
    %c0_129 = arith.constant 0 : index
    %224 = vector.load %arg15[%223, %c0_129] : memref<64x16xf32, #tpu.memory_space<vmem>>, vector<8x16xf32>
    %225 = arith.index_cast %217 : i32 to index
    %c0_130 = arith.constant 0 : index
    %226 = vector.load %arg16[%225, %c0_130] : memref<64x16xf32, #tpu.memory_space<vmem>>, vector<8x16xf32>
    %cst_131 = arith.constant dense<0.000000e+00> : vector<8x16xf32>
    %227 = tpu.matmul %176, %50, %cst_131 {dimension_numbers = #tpu.dot_dimension_numbers<[1], [0], [0], [1], [0, 0, 1, 1], [], []>} : vector<8x16xf32>, vector<16x16xf32>, vector<8x16xf32> -> vector<8x16xf32>
    %cst_132 = arith.constant dense<0.000000e+00> : vector<8x16xf32>
    %228 = tpu.matmul %176, %52, %cst_132 {dimension_numbers = #tpu.dot_dimension_numbers<[1], [0], [0], [1], [0, 0, 1, 1], [], []>} : vector<8x16xf32>, vector<16x16xf32>, vector<8x16xf32> -> vector<8x16xf32>
    %cst_133 = arith.constant dense<0.000000e+00> : vector<8x16xf32>
    %229 = tpu.matmul %176, %54, %cst_133 {dimension_numbers = #tpu.dot_dimension_numbers<[1], [0], [0], [1], [0, 0, 1, 1], [], []>} : vector<8x16xf32>, vector<16x16xf32>, vector<8x16xf32> -> vector<8x16xf32>
    %230 = arith.addf %222, %227 : vector<8x16xf32>
    %231 = arith.negf %230 : vector<8x16xf32>
    %232 = math.exp %231 : vector<8x16xf32>
    %cst_134 = arith.constant 1.000000e+00 : f32
    %233 = vector.broadcast %cst_134 : f32 to vector<8x16xf32>
    %234 = arith.addf %233, %232 : vector<8x16xf32>
    %235 = arith.divf %233, %234 : vector<8x16xf32>
    %236 = arith.addf %224, %228 : vector<8x16xf32>
    %237 = arith.negf %236 : vector<8x16xf32>
    %238 = math.exp %237 : vector<8x16xf32>
    %cst_135 = arith.constant 1.000000e+00 : f32
    %239 = vector.broadcast %cst_135 : f32 to vector<8x16xf32>
    %240 = arith.addf %239, %238 : vector<8x16xf32>
    %241 = arith.divf %239, %240 : vector<8x16xf32>
    %242 = arith.addf %229, %63 : vector<8x16xf32>
    %243 = arith.mulf %235, %242 : vector<8x16xf32>
    %244 = arith.addf %226, %243 : vector<8x16xf32>
    %245 = math.tanh %244 : vector<8x16xf32>
    %cst_136 = arith.constant 1.000000e+00 : f32
    %246 = vector.broadcast %cst_136 : f32 to vector<8x16xf32>
    %247 = arith.subf %246, %241 : vector<8x16xf32>
    %248 = arith.mulf %247, %245 : vector<8x16xf32>
    %249 = arith.mulf %241, %176 : vector<8x16xf32>
    %250 = arith.addf %248, %249 : vector<8x16xf32>
    %251 = arith.index_cast %220 : i32 to index
    %c0_137 = arith.constant 0 : index
    %252 = vector.load %arg17[%251, %c0_137] : memref<64x16xf32, #tpu.memory_space<vmem>>, vector<8x16xf32>
    %253 = arith.index_cast %220 : i32 to index
    %c0_138 = arith.constant 0 : index
    %254 = vector.load %arg18[%253, %c0_138] : memref<64x16xf32, #tpu.memory_space<vmem>>, vector<8x16xf32>
    %255 = arith.index_cast %220 : i32 to index
    %c0_139 = arith.constant 0 : index
    %256 = vector.load %arg19[%255, %c0_139] : memref<64x16xf32, #tpu.memory_space<vmem>>, vector<8x16xf32>
    %cst_140 = arith.constant dense<0.000000e+00> : vector<8x16xf32>
    %257 = tpu.matmul %206, %56, %cst_140 {dimension_numbers = #tpu.dot_dimension_numbers<[1], [0], [0], [1], [0, 0, 1, 1], [], []>} : vector<8x16xf32>, vector<16x16xf32>, vector<8x16xf32> -> vector<8x16xf32>
    %cst_141 = arith.constant dense<0.000000e+00> : vector<8x16xf32>
    %258 = tpu.matmul %206, %58, %cst_141 {dimension_numbers = #tpu.dot_dimension_numbers<[1], [0], [0], [1], [0, 0, 1, 1], [], []>} : vector<8x16xf32>, vector<16x16xf32>, vector<8x16xf32> -> vector<8x16xf32>
    %cst_142 = arith.constant dense<0.000000e+00> : vector<8x16xf32>
    %259 = tpu.matmul %206, %60, %cst_142 {dimension_numbers = #tpu.dot_dimension_numbers<[1], [0], [0], [1], [0, 0, 1, 1], [], []>} : vector<8x16xf32>, vector<16x16xf32>, vector<8x16xf32> -> vector<8x16xf32>
    %260 = arith.addf %252, %257 : vector<8x16xf32>
    %261 = arith.negf %260 : vector<8x16xf32>
    %262 = math.exp %261 : vector<8x16xf32>
    %cst_143 = arith.constant 1.000000e+00 : f32
    %263 = vector.broadcast %cst_143 : f32 to vector<8x16xf32>
    %264 = arith.addf %263, %262 : vector<8x16xf32>
    %265 = arith.divf %263, %264 : vector<8x16xf32>
    %266 = arith.addf %254, %258 : vector<8x16xf32>
    %267 = arith.negf %266 : vector<8x16xf32>
    %268 = math.exp %267 : vector<8x16xf32>
    %cst_144 = arith.constant 1.000000e+00 : f32
    %269 = vector.broadcast %cst_144 : f32 to vector<8x16xf32>
    %270 = arith.addf %269, %268 : vector<8x16xf32>
    %271 = arith.divf %269, %270 : vector<8x16xf32>
    %272 = arith.addf %259, %66 : vector<8x16xf32>
    %273 = arith.mulf %265, %272 : vector<8x16xf32>
    %274 = arith.addf %256, %273 : vector<8x16xf32>
    %275 = math.tanh %274 : vector<8x16xf32>
    %cst_145 = arith.constant 1.000000e+00 : f32
    %276 = vector.broadcast %cst_145 : f32 to vector<8x16xf32>
    %277 = arith.subf %276, %271 : vector<8x16xf32>
    %278 = arith.mulf %277, %275 : vector<8x16xf32>
    %279 = arith.mulf %271, %206 : vector<8x16xf32>
    %280 = arith.addf %278, %279 : vector<8x16xf32>
    %281 = arith.index_cast %c2_i32 : i32 to index
    %c0_146 = arith.constant 0 : index
    %c0_147 = arith.constant 0 : index
    %282 = vector.load %arg20[%281, %c0_146, %c0_147] : memref<8x8x16xf32, #tpu.memory_space<vmem>>, vector<1x8x16xf32>
    %283 = vector.shape_cast %282 : vector<1x8x16xf32> to vector<8x16xf32>
    %284 = vector.shape_cast %250 : vector<8x16xf32> to vector<1x8x16xf32>
    tpu.vector_store %arg20[%281, %c0_146, %c0_147], %284 {strides = array<i32>} : memref<8x8x16xf32, #tpu.memory_space<vmem>>, vector<1x8x16xf32>,
    %c7_i32_148 = arith.constant 7 : i32
    %285 = arith.subi %c7_i32_148, %c2_i32 : i32
    %286 = arith.index_cast %285 : i32 to index
    %c0_149 = arith.constant 0 : index
    %c0_150 = arith.constant 0 : index
    %287 = vector.load %arg21[%286, %c0_149, %c0_150] : memref<8x8x16xf32, #tpu.memory_space<vmem>>, vector<1x8x16xf32>
    %288 = vector.shape_cast %287 : vector<1x8x16xf32> to vector<8x16xf32>
    %289 = vector.shape_cast %280 : vector<8x16xf32> to vector<1x8x16xf32>
    tpu.vector_store %arg21[%286, %c0_149, %c0_150], %289 {strides = array<i32>} : memref<8x8x16xf32, #tpu.memory_space<vmem>>, vector<1x8x16xf32>,
    %c3_i32 = arith.constant 3 : i32
    %c8_i32_151 = arith.constant 8 : i32
    %290 = arith.muli %c3_i32, %c8_i32_151 : i32
    %291 = tpu.assume_multiple %290, 8 : i32
    %c7_i32_152 = arith.constant 7 : i32
    %292 = arith.subi %c7_i32_152, %c3_i32 : i32
    %c8_i32_153 = arith.constant 8 : i32
    %293 = arith.muli %292, %c8_i32_153 : i32
    %294 = tpu.assume_multiple %293, 8 : i32
    %295 = arith.index_cast %291 : i32 to index
    %c0_154 = arith.constant 0 : index
    %296 = vector.load %arg14[%295, %c0_154] : memref<64x16xf32, #tpu.memory_space<vmem>>, vector<8x16xf32>
    %297 = arith.index_cast %291 : i32 to index
    %c0_155 = arith.constant 0 : index
    %298 = vector.load %arg15[%297, %c0_155] : memref<64x16xf32, #tpu.memory_space<vmem>>, vector<8x16xf32>
    %299 = arith.index_cast %291 : i32 to index
    %c0_156 = arith.constant 0 : index
    %300 = vector.load %arg16[%299, %c0_156] : memref<64x16xf32, #tpu.memory_space<vmem>>, vector<8x16xf32>
    %cst_157 = arith.constant dense<0.000000e+00> : vector<8x16xf32>
    %301 = tpu.matmul %250, %50, %cst_157 {dimension_numbers = #tpu.dot_dimension_numbers<[1], [0], [0], [1], [0, 0, 1, 1], [], []>} : vector<8x16xf32>, vector<16x16xf32>, vector<8x16xf32> -> vector<8x16xf32>
    %cst_158 = arith.constant dense<0.000000e+00> : vector<8x16xf32>
    %302 = tpu.matmul %250, %52, %cst_158 {dimension_numbers = #tpu.dot_dimension_numbers<[1], [0], [0], [1], [0, 0, 1, 1], [], []>} : vector<8x16xf32>, vector<16x16xf32>, vector<8x16xf32> -> vector<8x16xf32>
    %cst_159 = arith.constant dense<0.000000e+00> : vector<8x16xf32>
    %303 = tpu.matmul %250, %54, %cst_159 {dimension_numbers = #tpu.dot_dimension_numbers<[1], [0], [0], [1], [0, 0, 1, 1], [], []>} : vector<8x16xf32>, vector<16x16xf32>, vector<8x16xf32> -> vector<8x16xf32>
    %304 = arith.addf %296, %301 : vector<8x16xf32>
    %305 = arith.negf %304 : vector<8x16xf32>
    %306 = math.exp %305 : vector<8x16xf32>
    %cst_160 = arith.constant 1.000000e+00 : f32
    %307 = vector.broadcast %cst_160 : f32 to vector<8x16xf32>
    %308 = arith.addf %307, %306 : vector<8x16xf32>
    %309 = arith.divf %307, %308 : vector<8x16xf32>
    %310 = arith.addf %298, %302 : vector<8x16xf32>
    %311 = arith.negf %310 : vector<8x16xf32>
    %312 = math.exp %311 : vector<8x16xf32>
    %cst_161 = arith.constant 1.000000e+00 : f32
    %313 = vector.broadcast %cst_161 : f32 to vector<8x16xf32>
    %314 = arith.addf %313, %312 : vector<8x16xf32>
    %315 = arith.divf %313, %314 : vector<8x16xf32>
    %316 = arith.addf %303, %63 : vector<8x16xf32>
    %317 = arith.mulf %309, %316 : vector<8x16xf32>
    %318 = arith.addf %300, %317 : vector<8x16xf32>
    %319 = math.tanh %318 : vector<8x16xf32>
    %cst_162 = arith.constant 1.000000e+00 : f32
    %320 = vector.broadcast %cst_162 : f32 to vector<8x16xf32>
    %321 = arith.subf %320, %315 : vector<8x16xf32>
    %322 = arith.mulf %321, %319 : vector<8x16xf32>
    %323 = arith.mulf %315, %250 : vector<8x16xf32>
    %324 = arith.addf %322, %323 : vector<8x16xf32>
    %325 = arith.index_cast %294 : i32 to index
    %c0_163 = arith.constant 0 : index
    %326 = vector.load %arg17[%325, %c0_163] : memref<64x16xf32, #tpu.memory_space<vmem>>, vector<8x16xf32>
    %327 = arith.index_cast %294 : i32 to index
    %c0_164 = arith.constant 0 : index
    %328 = vector.load %arg18[%327, %c0_164] : memref<64x16xf32, #tpu.memory_space<vmem>>, vector<8x16xf32>
    %329 = arith.index_cast %294 : i32 to index
    %c0_165 = arith.constant 0 : index
    %330 = vector.load %arg19[%329, %c0_165] : memref<64x16xf32, #tpu.memory_space<vmem>>, vector<8x16xf32>
    %cst_166 = arith.constant dense<0.000000e+00> : vector<8x16xf32>
    %331 = tpu.matmul %280, %56, %cst_166 {dimension_numbers = #tpu.dot_dimension_numbers<[1], [0], [0], [1], [0, 0, 1, 1], [], []>} : vector<8x16xf32>, vector<16x16xf32>, vector<8x16xf32> -> vector<8x16xf32>
    %cst_167 = arith.constant dense<0.000000e+00> : vector<8x16xf32>
    %332 = tpu.matmul %280, %58, %cst_167 {dimension_numbers = #tpu.dot_dimension_numbers<[1], [0], [0], [1], [0, 0, 1, 1], [], []>} : vector<8x16xf32>, vector<16x16xf32>, vector<8x16xf32> -> vector<8x16xf32>
    %cst_168 = arith.constant dense<0.000000e+00> : vector<8x16xf32>
    %333 = tpu.matmul %280, %60, %cst_168 {dimension_numbers = #tpu.dot_dimension_numbers<[1], [0], [0], [1], [0, 0, 1, 1], [], []>} : vector<8x16xf32>, vector<16x16xf32>, vector<8x16xf32> -> vector<8x16xf32>
    %334 = arith.addf %326, %331 : vector<8x16xf32>
    %335 = arith.negf %334 : vector<8x16xf32>
    %336 = math.exp %335 : vector<8x16xf32>
    %cst_169 = arith.constant 1.000000e+00 : f32
    %337 = vector.broadcast %cst_169 : f32 to vector<8x16xf32>
    %338 = arith.addf %337, %336 : vector<8x16xf32>
    %339 = arith.divf %337, %338 : vector<8x16xf32>
    %340 = arith.addf %328, %332 : vector<8x16xf32>
    %341 = arith.negf %340 : vector<8x16xf32>
    %342 = math.exp %341 : vector<8x16xf32>
    %cst_170 = arith.constant 1.000000e+00 : f32
    %343 = vector.broadcast %cst_170 : f32 to vector<8x16xf32>
    %344 = arith.addf %343, %342 : vector<8x16xf32>
    %345 = arith.divf %343, %344 : vector<8x16xf32>
    %346 = arith.addf %333, %66 : vector<8x16xf32>
    %347 = arith.mulf %339, %346 : vector<8x16xf32>
    %348 = arith.addf %330, %347 : vector<8x16xf32>
    %349 = math.tanh %348 : vector<8x16xf32>
    %cst_171 = arith.constant 1.000000e+00 : f32
    %350 = vector.broadcast %cst_171 : f32 to vector<8x16xf32>
    %351 = arith.subf %350, %345 : vector<8x16xf32>
    %352 = arith.mulf %351, %349 : vector<8x16xf32>
    %353 = arith.mulf %345, %280 : vector<8x16xf32>
    %354 = arith.addf %352, %353 : vector<8x16xf32>
    %355 = arith.index_cast %c3_i32 : i32 to index
    %c0_172 = arith.constant 0 : index
    %c0_173 = arith.constant 0 : index
    %356 = vector.load %arg20[%355, %c0_172, %c0_173] : memref<8x8x16xf32, #tpu.memory_space<vmem>>, vector<1x8x16xf32>
    %357 = vector.shape_cast %356 : vector<1x8x16xf32> to vector<8x16xf32>
    %358 = vector.shape_cast %324 : vector<8x16xf32> to vector<1x8x16xf32>
    tpu.vector_store %arg20[%355, %c0_172, %c0_173], %358 {strides = array<i32>} : memref<8x8x16xf32, #tpu.memory_space<vmem>>, vector<1x8x16xf32>,
    %c7_i32_174 = arith.constant 7 : i32
    %359 = arith.subi %c7_i32_174, %c3_i32 : i32
    %360 = arith.index_cast %359 : i32 to index
    %c0_175 = arith.constant 0 : index
    %c0_176 = arith.constant 0 : index
    %361 = vector.load %arg21[%360, %c0_175, %c0_176] : memref<8x8x16xf32, #tpu.memory_space<vmem>>, vector<1x8x16xf32>
    %362 = vector.shape_cast %361 : vector<1x8x16xf32> to vector<8x16xf32>
    %363 = vector.shape_cast %354 : vector<8x16xf32> to vector<1x8x16xf32>
    tpu.vector_store %arg21[%360, %c0_175, %c0_176], %363 {strides = array<i32>} : memref<8x8x16xf32, #tpu.memory_space<vmem>>, vector<1x8x16xf32>,
    %c4_i32 = arith.constant 4 : i32
    %c8_i32_177 = arith.constant 8 : i32
    %364 = arith.muli %c4_i32, %c8_i32_177 : i32
    %365 = tpu.assume_multiple %364, 8 : i32
    %c7_i32_178 = arith.constant 7 : i32
    %366 = arith.subi %c7_i32_178, %c4_i32 : i32
    %c8_i32_179 = arith.constant 8 : i32
    %367 = arith.muli %366, %c8_i32_179 : i32
    %368 = tpu.assume_multiple %367, 8 : i32
    %369 = arith.index_cast %365 : i32 to index
    %c0_180 = arith.constant 0 : index
    %370 = vector.load %arg14[%369, %c0_180] : memref<64x16xf32, #tpu.memory_space<vmem>>, vector<8x16xf32>
    %371 = arith.index_cast %365 : i32 to index
    %c0_181 = arith.constant 0 : index
    %372 = vector.load %arg15[%371, %c0_181] : memref<64x16xf32, #tpu.memory_space<vmem>>, vector<8x16xf32>
    %373 = arith.index_cast %365 : i32 to index
    %c0_182 = arith.constant 0 : index
    %374 = vector.load %arg16[%373, %c0_182] : memref<64x16xf32, #tpu.memory_space<vmem>>, vector<8x16xf32>
    %cst_183 = arith.constant dense<0.000000e+00> : vector<8x16xf32>
    %375 = tpu.matmul %324, %50, %cst_183 {dimension_numbers = #tpu.dot_dimension_numbers<[1], [0], [0], [1], [0, 0, 1, 1], [], []>} : vector<8x16xf32>, vector<16x16xf32>, vector<8x16xf32> -> vector<8x16xf32>
    %cst_184 = arith.constant dense<0.000000e+00> : vector<8x16xf32>
    %376 = tpu.matmul %324, %52, %cst_184 {dimension_numbers = #tpu.dot_dimension_numbers<[1], [0], [0], [1], [0, 0, 1, 1], [], []>} : vector<8x16xf32>, vector<16x16xf32>, vector<8x16xf32> -> vector<8x16xf32>
    %cst_185 = arith.constant dense<0.000000e+00> : vector<8x16xf32>
    %377 = tpu.matmul %324, %54, %cst_185 {dimension_numbers = #tpu.dot_dimension_numbers<[1], [0], [0], [1], [0, 0, 1, 1], [], []>} : vector<8x16xf32>, vector<16x16xf32>, vector<8x16xf32> -> vector<8x16xf32>
    %378 = arith.addf %370, %375 : vector<8x16xf32>
    %379 = arith.negf %378 : vector<8x16xf32>
    %380 = math.exp %379 : vector<8x16xf32>
    %cst_186 = arith.constant 1.000000e+00 : f32
    %381 = vector.broadcast %cst_186 : f32 to vector<8x16xf32>
    %382 = arith.addf %381, %380 : vector<8x16xf32>
    %383 = arith.divf %381, %382 : vector<8x16xf32>
    %384 = arith.addf %372, %376 : vector<8x16xf32>
    %385 = arith.negf %384 : vector<8x16xf32>
    %386 = math.exp %385 : vector<8x16xf32>
    %cst_187 = arith.constant 1.000000e+00 : f32
    %387 = vector.broadcast %cst_187 : f32 to vector<8x16xf32>
    %388 = arith.addf %387, %386 : vector<8x16xf32>
    %389 = arith.divf %387, %388 : vector<8x16xf32>
    %390 = arith.addf %377, %63 : vector<8x16xf32>
    %391 = arith.mulf %383, %390 : vector<8x16xf32>
    %392 = arith.addf %374, %391 : vector<8x16xf32>
    %393 = math.tanh %392 : vector<8x16xf32>
    %cst_188 = arith.constant 1.000000e+00 : f32
    %394 = vector.broadcast %cst_188 : f32 to vector<8x16xf32>
    %395 = arith.subf %394, %389 : vector<8x16xf32>
    %396 = arith.mulf %395, %393 : vector<8x16xf32>
    %397 = arith.mulf %389, %324 : vector<8x16xf32>
    %398 = arith.addf %396, %397 : vector<8x16xf32>
    %399 = arith.index_cast %368 : i32 to index
    %c0_189 = arith.constant 0 : index
    %400 = vector.load %arg17[%399, %c0_189] : memref<64x16xf32, #tpu.memory_space<vmem>>, vector<8x16xf32>
    %401 = arith.index_cast %368 : i32 to index
    %c0_190 = arith.constant 0 : index
    %402 = vector.load %arg18[%401, %c0_190] : memref<64x16xf32, #tpu.memory_space<vmem>>, vector<8x16xf32>
    %403 = arith.index_cast %368 : i32 to index
    %c0_191 = arith.constant 0 : index
    %404 = vector.load %arg19[%403, %c0_191] : memref<64x16xf32, #tpu.memory_space<vmem>>, vector<8x16xf32>
    %cst_192 = arith.constant dense<0.000000e+00> : vector<8x16xf32>
    %405 = tpu.matmul %354, %56, %cst_192 {dimension_numbers = #tpu.dot_dimension_numbers<[1], [0], [0], [1], [0, 0, 1, 1], [], []>} : vector<8x16xf32>, vector<16x16xf32>, vector<8x16xf32> -> vector<8x16xf32>
    %cst_193 = arith.constant dense<0.000000e+00> : vector<8x16xf32>
    %406 = tpu.matmul %354, %58, %cst_193 {dimension_numbers = #tpu.dot_dimension_numbers<[1], [0], [0], [1], [0, 0, 1, 1], [], []>} : vector<8x16xf32>, vector<16x16xf32>, vector<8x16xf32> -> vector<8x16xf32>
    %cst_194 = arith.constant dense<0.000000e+00> : vector<8x16xf32>
    %407 = tpu.matmul %354, %60, %cst_194 {dimension_numbers = #tpu.dot_dimension_numbers<[1], [0], [0], [1], [0, 0, 1, 1], [], []>} : vector<8x16xf32>, vector<16x16xf32>, vector<8x16xf32> -> vector<8x16xf32>
    %408 = arith.addf %400, %405 : vector<8x16xf32>
    %409 = arith.negf %408 : vector<8x16xf32>
    %410 = math.exp %409 : vector<8x16xf32>
    %cst_195 = arith.constant 1.000000e+00 : f32
    %411 = vector.broadcast %cst_195 : f32 to vector<8x16xf32>
    %412 = arith.addf %411, %410 : vector<8x16xf32>
    %413 = arith.divf %411, %412 : vector<8x16xf32>
    %414 = arith.addf %402, %406 : vector<8x16xf32>
    %415 = arith.negf %414 : vector<8x16xf32>
    %416 = math.exp %415 : vector<8x16xf32>
    %cst_196 = arith.constant 1.000000e+00 : f32
    %417 = vector.broadcast %cst_196 : f32 to vector<8x16xf32>
    %418 = arith.addf %417, %416 : vector<8x16xf32>
    %419 = arith.divf %417, %418 : vector<8x16xf32>
    %420 = arith.addf %407, %66 : vector<8x16xf32>
    %421 = arith.mulf %413, %420 : vector<8x16xf32>
    %422 = arith.addf %404, %421 : vector<8x16xf32>
    %423 = math.tanh %422 : vector<8x16xf32>
    %cst_197 = arith.constant 1.000000e+00 : f32
    %424 = vector.broadcast %cst_197 : f32 to vector<8x16xf32>
    %425 = arith.subf %424, %419 : vector<8x16xf32>
    %426 = arith.mulf %425, %423 : vector<8x16xf32>
    %427 = arith.mulf %419, %354 : vector<8x16xf32>
    %428 = arith.addf %426, %427 : vector<8x16xf32>
    %429 = arith.index_cast %c4_i32 : i32 to index
    %c0_198 = arith.constant 0 : index
    %c0_199 = arith.constant 0 : index
    %430 = vector.load %arg20[%429, %c0_198, %c0_199] : memref<8x8x16xf32, #tpu.memory_space<vmem>>, vector<1x8x16xf32>
    %431 = vector.shape_cast %430 : vector<1x8x16xf32> to vector<8x16xf32>
    %432 = vector.shape_cast %398 : vector<8x16xf32> to vector<1x8x16xf32>
    tpu.vector_store %arg20[%429, %c0_198, %c0_199], %432 {strides = array<i32>} : memref<8x8x16xf32, #tpu.memory_space<vmem>>, vector<1x8x16xf32>,
    %c7_i32_200 = arith.constant 7 : i32
    %433 = arith.subi %c7_i32_200, %c4_i32 : i32
    %434 = arith.index_cast %433 : i32 to index
    %c0_201 = arith.constant 0 : index
    %c0_202 = arith.constant 0 : index
    %435 = vector.load %arg21[%434, %c0_201, %c0_202] : memref<8x8x16xf32, #tpu.memory_space<vmem>>, vector<1x8x16xf32>
    %436 = vector.shape_cast %435 : vector<1x8x16xf32> to vector<8x16xf32>
    %437 = vector.shape_cast %428 : vector<8x16xf32> to vector<1x8x16xf32>
    tpu.vector_store %arg21[%434, %c0_201, %c0_202], %437 {strides = array<i32>} : memref<8x8x16xf32, #tpu.memory_space<vmem>>, vector<1x8x16xf32>,
    %c5_i32 = arith.constant 5 : i32
    %c8_i32_203 = arith.constant 8 : i32
    %438 = arith.muli %c5_i32, %c8_i32_203 : i32
    %439 = tpu.assume_multiple %438, 8 : i32
    %c7_i32_204 = arith.constant 7 : i32
    %440 = arith.subi %c7_i32_204, %c5_i32 : i32
    %c8_i32_205 = arith.constant 8 : i32
    %441 = arith.muli %440, %c8_i32_205 : i32
    %442 = tpu.assume_multiple %441, 8 : i32
    %443 = arith.index_cast %439 : i32 to index
    %c0_206 = arith.constant 0 : index
    %444 = vector.load %arg14[%443, %c0_206] : memref<64x16xf32, #tpu.memory_space<vmem>>, vector<8x16xf32>
    %445 = arith.index_cast %439 : i32 to index
    %c0_207 = arith.constant 0 : index
    %446 = vector.load %arg15[%445, %c0_207] : memref<64x16xf32, #tpu.memory_space<vmem>>, vector<8x16xf32>
    %447 = arith.index_cast %439 : i32 to index
    %c0_208 = arith.constant 0 : index
    %448 = vector.load %arg16[%447, %c0_208] : memref<64x16xf32, #tpu.memory_space<vmem>>, vector<8x16xf32>
    %cst_209 = arith.constant dense<0.000000e+00> : vector<8x16xf32>
    %449 = tpu.matmul %398, %50, %cst_209 {dimension_numbers = #tpu.dot_dimension_numbers<[1], [0], [0], [1], [0, 0, 1, 1], [], []>} : vector<8x16xf32>, vector<16x16xf32>, vector<8x16xf32> -> vector<8x16xf32>
    %cst_210 = arith.constant dense<0.000000e+00> : vector<8x16xf32>
    %450 = tpu.matmul %398, %52, %cst_210 {dimension_numbers = #tpu.dot_dimension_numbers<[1], [0], [0], [1], [0, 0, 1, 1], [], []>} : vector<8x16xf32>, vector<16x16xf32>, vector<8x16xf32> -> vector<8x16xf32>
    %cst_211 = arith.constant dense<0.000000e+00> : vector<8x16xf32>
    %451 = tpu.matmul %398, %54, %cst_211 {dimension_numbers = #tpu.dot_dimension_numbers<[1], [0], [0], [1], [0, 0, 1, 1], [], []>} : vector<8x16xf32>, vector<16x16xf32>, vector<8x16xf32> -> vector<8x16xf32>
    %452 = arith.addf %444, %449 : vector<8x16xf32>
    %453 = arith.negf %452 : vector<8x16xf32>
    %454 = math.exp %453 : vector<8x16xf32>
    %cst_212 = arith.constant 1.000000e+00 : f32
    %455 = vector.broadcast %cst_212 : f32 to vector<8x16xf32>
    %456 = arith.addf %455, %454 : vector<8x16xf32>
    %457 = arith.divf %455, %456 : vector<8x16xf32>
    %458 = arith.addf %446, %450 : vector<8x16xf32>
    %459 = arith.negf %458 : vector<8x16xf32>
    %460 = math.exp %459 : vector<8x16xf32>
    %cst_213 = arith.constant 1.000000e+00 : f32
    %461 = vector.broadcast %cst_213 : f32 to vector<8x16xf32>
    %462 = arith.addf %461, %460 : vector<8x16xf32>
    %463 = arith.divf %461, %462 : vector<8x16xf32>
    %464 = arith.addf %451, %63 : vector<8x16xf32>
    %465 = arith.mulf %457, %464 : vector<8x16xf32>
    %466 = arith.addf %448, %465 : vector<8x16xf32>
    %467 = math.tanh %466 : vector<8x16xf32>
    %cst_214 = arith.constant 1.000000e+00 : f32
    %468 = vector.broadcast %cst_214 : f32 to vector<8x16xf32>
    %469 = arith.subf %468, %463 : vector<8x16xf32>
    %470 = arith.mulf %469, %467 : vector<8x16xf32>
    %471 = arith.mulf %463, %398 : vector<8x16xf32>
    %472 = arith.addf %470, %471 : vector<8x16xf32>
    %473 = arith.index_cast %442 : i32 to index
    %c0_215 = arith.constant 0 : index
    %474 = vector.load %arg17[%473, %c0_215] : memref<64x16xf32, #tpu.memory_space<vmem>>, vector<8x16xf32>
    %475 = arith.index_cast %442 : i32 to index
    %c0_216 = arith.constant 0 : index
    %476 = vector.load %arg18[%475, %c0_216] : memref<64x16xf32, #tpu.memory_space<vmem>>, vector<8x16xf32>
    %477 = arith.index_cast %442 : i32 to index
    %c0_217 = arith.constant 0 : index
    %478 = vector.load %arg19[%477, %c0_217] : memref<64x16xf32, #tpu.memory_space<vmem>>, vector<8x16xf32>
    %cst_218 = arith.constant dense<0.000000e+00> : vector<8x16xf32>
    %479 = tpu.matmul %428, %56, %cst_218 {dimension_numbers = #tpu.dot_dimension_numbers<[1], [0], [0], [1], [0, 0, 1, 1], [], []>} : vector<8x16xf32>, vector<16x16xf32>, vector<8x16xf32> -> vector<8x16xf32>
    %cst_219 = arith.constant dense<0.000000e+00> : vector<8x16xf32>
    %480 = tpu.matmul %428, %58, %cst_219 {dimension_numbers = #tpu.dot_dimension_numbers<[1], [0], [0], [1], [0, 0, 1, 1], [], []>} : vector<8x16xf32>, vector<16x16xf32>, vector<8x16xf32> -> vector<8x16xf32>
    %cst_220 = arith.constant dense<0.000000e+00> : vector<8x16xf32>
    %481 = tpu.matmul %428, %60, %cst_220 {dimension_numbers = #tpu.dot_dimension_numbers<[1], [0], [0], [1], [0, 0, 1, 1], [], []>} : vector<8x16xf32>, vector<16x16xf32>, vector<8x16xf32> -> vector<8x16xf32>
    %482 = arith.addf %474, %479 : vector<8x16xf32>
    %483 = arith.negf %482 : vector<8x16xf32>
    %484 = math.exp %483 : vector<8x16xf32>
    %cst_221 = arith.constant 1.000000e+00 : f32
    %485 = vector.broadcast %cst_221 : f32 to vector<8x16xf32>
    %486 = arith.addf %485, %484 : vector<8x16xf32>
    %487 = arith.divf %485, %486 : vector<8x16xf32>
    %488 = arith.addf %476, %480 : vector<8x16xf32>
    %489 = arith.negf %488 : vector<8x16xf32>
    %490 = math.exp %489 : vector<8x16xf32>
    %cst_222 = arith.constant 1.000000e+00 : f32
    %491 = vector.broadcast %cst_222 : f32 to vector<8x16xf32>
    %492 = arith.addf %491, %490 : vector<8x16xf32>
    %493 = arith.divf %491, %492 : vector<8x16xf32>
    %494 = arith.addf %481, %66 : vector<8x16xf32>
    %495 = arith.mulf %487, %494 : vector<8x16xf32>
    %496 = arith.addf %478, %495 : vector<8x16xf32>
    %497 = math.tanh %496 : vector<8x16xf32>
    %cst_223 = arith.constant 1.000000e+00 : f32
    %498 = vector.broadcast %cst_223 : f32 to vector<8x16xf32>
    %499 = arith.subf %498, %493 : vector<8x16xf32>
    %500 = arith.mulf %499, %497 : vector<8x16xf32>
    %501 = arith.mulf %493, %428 : vector<8x16xf32>
    %502 = arith.addf %500, %501 : vector<8x16xf32>
    %503 = arith.index_cast %c5_i32 : i32 to index
    %c0_224 = arith.constant 0 : index
    %c0_225 = arith.constant 0 : index
    %504 = vector.load %arg20[%503, %c0_224, %c0_225] : memref<8x8x16xf32, #tpu.memory_space<vmem>>, vector<1x8x16xf32>
    %505 = vector.shape_cast %504 : vector<1x8x16xf32> to vector<8x16xf32>
    %506 = vector.shape_cast %472 : vector<8x16xf32> to vector<1x8x16xf32>
    tpu.vector_store %arg20[%503, %c0_224, %c0_225], %506 {strides = array<i32>} : memref<8x8x16xf32, #tpu.memory_space<vmem>>, vector<1x8x16xf32>,
    %c7_i32_226 = arith.constant 7 : i32
    %507 = arith.subi %c7_i32_226, %c5_i32 : i32
    %508 = arith.index_cast %507 : i32 to index
    %c0_227 = arith.constant 0 : index
    %c0_228 = arith.constant 0 : index
    %509 = vector.load %arg21[%508, %c0_227, %c0_228] : memref<8x8x16xf32, #tpu.memory_space<vmem>>, vector<1x8x16xf32>
    %510 = vector.shape_cast %509 : vector<1x8x16xf32> to vector<8x16xf32>
    %511 = vector.shape_cast %502 : vector<8x16xf32> to vector<1x8x16xf32>
    tpu.vector_store %arg21[%508, %c0_227, %c0_228], %511 {strides = array<i32>} : memref<8x8x16xf32, #tpu.memory_space<vmem>>, vector<1x8x16xf32>,
    %c6_i32 = arith.constant 6 : i32
    %c8_i32_229 = arith.constant 8 : i32
    %512 = arith.muli %c6_i32, %c8_i32_229 : i32
    %513 = tpu.assume_multiple %512, 8 : i32
    %c7_i32_230 = arith.constant 7 : i32
    %514 = arith.subi %c7_i32_230, %c6_i32 : i32
    %c8_i32_231 = arith.constant 8 : i32
    %515 = arith.muli %514, %c8_i32_231 : i32
    %516 = tpu.assume_multiple %515, 8 : i32
    %517 = arith.index_cast %513 : i32 to index
    %c0_232 = arith.constant 0 : index
    %518 = vector.load %arg14[%517, %c0_232] : memref<64x16xf32, #tpu.memory_space<vmem>>, vector<8x16xf32>
    %519 = arith.index_cast %513 : i32 to index
    %c0_233 = arith.constant 0 : index
    %520 = vector.load %arg15[%519, %c0_233] : memref<64x16xf32, #tpu.memory_space<vmem>>, vector<8x16xf32>
    %521 = arith.index_cast %513 : i32 to index
    %c0_234 = arith.constant 0 : index
    %522 = vector.load %arg16[%521, %c0_234] : memref<64x16xf32, #tpu.memory_space<vmem>>, vector<8x16xf32>
    %cst_235 = arith.constant dense<0.000000e+00> : vector<8x16xf32>
    %523 = tpu.matmul %472, %50, %cst_235 {dimension_numbers = #tpu.dot_dimension_numbers<[1], [0], [0], [1], [0, 0, 1, 1], [], []>} : vector<8x16xf32>, vector<16x16xf32>, vector<8x16xf32> -> vector<8x16xf32>
    %cst_236 = arith.constant dense<0.000000e+00> : vector<8x16xf32>
    %524 = tpu.matmul %472, %52, %cst_236 {dimension_numbers = #tpu.dot_dimension_numbers<[1], [0], [0], [1], [0, 0, 1, 1], [], []>} : vector<8x16xf32>, vector<16x16xf32>, vector<8x16xf32> -> vector<8x16xf32>
    %cst_237 = arith.constant dense<0.000000e+00> : vector<8x16xf32>
    %525 = tpu.matmul %472, %54, %cst_237 {dimension_numbers = #tpu.dot_dimension_numbers<[1], [0], [0], [1], [0, 0, 1, 1], [], []>} : vector<8x16xf32>, vector<16x16xf32>, vector<8x16xf32> -> vector<8x16xf32>
    %526 = arith.addf %518, %523 : vector<8x16xf32>
    %527 = arith.negf %526 : vector<8x16xf32>
    %528 = math.exp %527 : vector<8x16xf32>
    %cst_238 = arith.constant 1.000000e+00 : f32
    %529 = vector.broadcast %cst_238 : f32 to vector<8x16xf32>
    %530 = arith.addf %529, %528 : vector<8x16xf32>
    %531 = arith.divf %529, %530 : vector<8x16xf32>
    %532 = arith.addf %520, %524 : vector<8x16xf32>
    %533 = arith.negf %532 : vector<8x16xf32>
    %534 = math.exp %533 : vector<8x16xf32>
    %cst_239 = arith.constant 1.000000e+00 : f32
    %535 = vector.broadcast %cst_239 : f32 to vector<8x16xf32>
    %536 = arith.addf %535, %534 : vector<8x16xf32>
    %537 = arith.divf %535, %536 : vector<8x16xf32>
    %538 = arith.addf %525, %63 : vector<8x16xf32>
    %539 = arith.mulf %531, %538 : vector<8x16xf32>
    %540 = arith.addf %522, %539 : vector<8x16xf32>
    %541 = math.tanh %540 : vector<8x16xf32>
    %cst_240 = arith.constant 1.000000e+00 : f32
    %542 = vector.broadcast %cst_240 : f32 to vector<8x16xf32>
    %543 = arith.subf %542, %537 : vector<8x16xf32>
    %544 = arith.mulf %543, %541 : vector<8x16xf32>
    %545 = arith.mulf %537, %472 : vector<8x16xf32>
    %546 = arith.addf %544, %545 : vector<8x16xf32>
    %547 = arith.index_cast %516 : i32 to index
    %c0_241 = arith.constant 0 : index
    %548 = vector.load %arg17[%547, %c0_241] : memref<64x16xf32, #tpu.memory_space<vmem>>, vector<8x16xf32>
    %549 = arith.index_cast %516 : i32 to index
    %c0_242 = arith.constant 0 : index
    %550 = vector.load %arg18[%549, %c0_242] : memref<64x16xf32, #tpu.memory_space<vmem>>, vector<8x16xf32>
    %551 = arith.index_cast %516 : i32 to index
    %c0_243 = arith.constant 0 : index
    %552 = vector.load %arg19[%551, %c0_243] : memref<64x16xf32, #tpu.memory_space<vmem>>, vector<8x16xf32>
    %cst_244 = arith.constant dense<0.000000e+00> : vector<8x16xf32>
    %553 = tpu.matmul %502, %56, %cst_244 {dimension_numbers = #tpu.dot_dimension_numbers<[1], [0], [0], [1], [0, 0, 1, 1], [], []>} : vector<8x16xf32>, vector<16x16xf32>, vector<8x16xf32> -> vector<8x16xf32>
    %cst_245 = arith.constant dense<0.000000e+00> : vector<8x16xf32>
    %554 = tpu.matmul %502, %58, %cst_245 {dimension_numbers = #tpu.dot_dimension_numbers<[1], [0], [0], [1], [0, 0, 1, 1], [], []>} : vector<8x16xf32>, vector<16x16xf32>, vector<8x16xf32> -> vector<8x16xf32>
    %cst_246 = arith.constant dense<0.000000e+00> : vector<8x16xf32>
    %555 = tpu.matmul %502, %60, %cst_246 {dimension_numbers = #tpu.dot_dimension_numbers<[1], [0], [0], [1], [0, 0, 1, 1], [], []>} : vector<8x16xf32>, vector<16x16xf32>, vector<8x16xf32> -> vector<8x16xf32>
    %556 = arith.addf %548, %553 : vector<8x16xf32>
    %557 = arith.negf %556 : vector<8x16xf32>
    %558 = math.exp %557 : vector<8x16xf32>
    %cst_247 = arith.constant 1.000000e+00 : f32
    %559 = vector.broadcast %cst_247 : f32 to vector<8x16xf32>
    %560 = arith.addf %559, %558 : vector<8x16xf32>
    %561 = arith.divf %559, %560 : vector<8x16xf32>
    %562 = arith.addf %550, %554 : vector<8x16xf32>
    %563 = arith.negf %562 : vector<8x16xf32>
    %564 = math.exp %563 : vector<8x16xf32>
    %cst_248 = arith.constant 1.000000e+00 : f32
    %565 = vector.broadcast %cst_248 : f32 to vector<8x16xf32>
    %566 = arith.addf %565, %564 : vector<8x16xf32>
    %567 = arith.divf %565, %566 : vector<8x16xf32>
    %568 = arith.addf %555, %66 : vector<8x16xf32>
    %569 = arith.mulf %561, %568 : vector<8x16xf32>
    %570 = arith.addf %552, %569 : vector<8x16xf32>
    %571 = math.tanh %570 : vector<8x16xf32>
    %cst_249 = arith.constant 1.000000e+00 : f32
    %572 = vector.broadcast %cst_249 : f32 to vector<8x16xf32>
    %573 = arith.subf %572, %567 : vector<8x16xf32>
    %574 = arith.mulf %573, %571 : vector<8x16xf32>
    %575 = arith.mulf %567, %502 : vector<8x16xf32>
    %576 = arith.addf %574, %575 : vector<8x16xf32>
    %577 = arith.index_cast %c6_i32 : i32 to index
    %c0_250 = arith.constant 0 : index
    %c0_251 = arith.constant 0 : index
    %578 = vector.load %arg20[%577, %c0_250, %c0_251] : memref<8x8x16xf32, #tpu.memory_space<vmem>>, vector<1x8x16xf32>
    %579 = vector.shape_cast %578 : vector<1x8x16xf32> to vector<8x16xf32>
    %580 = vector.shape_cast %546 : vector<8x16xf32> to vector<1x8x16xf32>
    tpu.vector_store %arg20[%577, %c0_250, %c0_251], %580 {strides = array<i32>} : memref<8x8x16xf32, #tpu.memory_space<vmem>>, vector<1x8x16xf32>,
    %c7_i32_252 = arith.constant 7 : i32
    %581 = arith.subi %c7_i32_252, %c6_i32 : i32
    %582 = arith.index_cast %581 : i32 to index
    %c0_253 = arith.constant 0 : index
    %c0_254 = arith.constant 0 : index
    %583 = vector.load %arg21[%582, %c0_253, %c0_254] : memref<8x8x16xf32, #tpu.memory_space<vmem>>, vector<1x8x16xf32>
    %584 = vector.shape_cast %583 : vector<1x8x16xf32> to vector<8x16xf32>
    %585 = vector.shape_cast %576 : vector<8x16xf32> to vector<1x8x16xf32>
    tpu.vector_store %arg21[%582, %c0_253, %c0_254], %585 {strides = array<i32>} : memref<8x8x16xf32, #tpu.memory_space<vmem>>, vector<1x8x16xf32>,
    %c7_i32_255 = arith.constant 7 : i32
    %c8_i32_256 = arith.constant 8 : i32
    %586 = arith.muli %c7_i32_255, %c8_i32_256 : i32
    %587 = tpu.assume_multiple %586, 8 : i32
    %c7_i32_257 = arith.constant 7 : i32
    %588 = arith.subi %c7_i32_257, %c7_i32_255 : i32
    %c8_i32_258 = arith.constant 8 : i32
    %589 = arith.muli %588, %c8_i32_258 : i32
    %590 = tpu.assume_multiple %589, 8 : i32
    %591 = arith.index_cast %587 : i32 to index
    %c0_259 = arith.constant 0 : index
    %592 = vector.load %arg14[%591, %c0_259] : memref<64x16xf32, #tpu.memory_space<vmem>>, vector<8x16xf32>
    %593 = arith.index_cast %587 : i32 to index
    %c0_260 = arith.constant 0 : index
    %594 = vector.load %arg15[%593, %c0_260] : memref<64x16xf32, #tpu.memory_space<vmem>>, vector<8x16xf32>
    %595 = arith.index_cast %587 : i32 to index
    %c0_261 = arith.constant 0 : index
    %596 = vector.load %arg16[%595, %c0_261] : memref<64x16xf32, #tpu.memory_space<vmem>>, vector<8x16xf32>
    %cst_262 = arith.constant dense<0.000000e+00> : vector<8x16xf32>
    %597 = tpu.matmul %546, %50, %cst_262 {dimension_numbers = #tpu.dot_dimension_numbers<[1], [0], [0], [1], [0, 0, 1, 1], [], []>} : vector<8x16xf32>, vector<16x16xf32>, vector<8x16xf32> -> vector<8x16xf32>
    %cst_263 = arith.constant dense<0.000000e+00> : vector<8x16xf32>
    %598 = tpu.matmul %546, %52, %cst_263 {dimension_numbers = #tpu.dot_dimension_numbers<[1], [0], [0], [1], [0, 0, 1, 1], [], []>} : vector<8x16xf32>, vector<16x16xf32>, vector<8x16xf32> -> vector<8x16xf32>
    %cst_264 = arith.constant dense<0.000000e+00> : vector<8x16xf32>
    %599 = tpu.matmul %546, %54, %cst_264 {dimension_numbers = #tpu.dot_dimension_numbers<[1], [0], [0], [1], [0, 0, 1, 1], [], []>} : vector<8x16xf32>, vector<16x16xf32>, vector<8x16xf32> -> vector<8x16xf32>
    %600 = arith.addf %592, %597 : vector<8x16xf32>
    %601 = arith.negf %600 : vector<8x16xf32>
    %602 = math.exp %601 : vector<8x16xf32>
    %cst_265 = arith.constant 1.000000e+00 : f32
    %603 = vector.broadcast %cst_265 : f32 to vector<8x16xf32>
    %604 = arith.addf %603, %602 : vector<8x16xf32>
    %605 = arith.divf %603, %604 : vector<8x16xf32>
    %606 = arith.addf %594, %598 : vector<8x16xf32>
    %607 = arith.negf %606 : vector<8x16xf32>
    %608 = math.exp %607 : vector<8x16xf32>
    %cst_266 = arith.constant 1.000000e+00 : f32
    %609 = vector.broadcast %cst_266 : f32 to vector<8x16xf32>
    %610 = arith.addf %609, %608 : vector<8x16xf32>
    %611 = arith.divf %609, %610 : vector<8x16xf32>
    %612 = arith.addf %599, %63 : vector<8x16xf32>
    %613 = arith.mulf %605, %612 : vector<8x16xf32>
    %614 = arith.addf %596, %613 : vector<8x16xf32>
    %615 = math.tanh %614 : vector<8x16xf32>
    %cst_267 = arith.constant 1.000000e+00 : f32
    %616 = vector.broadcast %cst_267 : f32 to vector<8x16xf32>
    %617 = arith.subf %616, %611 : vector<8x16xf32>
    %618 = arith.mulf %617, %615 : vector<8x16xf32>
    %619 = arith.mulf %611, %546 : vector<8x16xf32>
    %620 = arith.addf %618, %619 : vector<8x16xf32>
    %621 = arith.index_cast %590 : i32 to index
    %c0_268 = arith.constant 0 : index
    %622 = vector.load %arg17[%621, %c0_268] : memref<64x16xf32, #tpu.memory_space<vmem>>, vector<8x16xf32>
    %623 = arith.index_cast %590 : i32 to index
    %c0_269 = arith.constant 0 : index
    %624 = vector.load %arg18[%623, %c0_269] : memref<64x16xf32, #tpu.memory_space<vmem>>, vector<8x16xf32>
    %625 = arith.index_cast %590 : i32 to index
    %c0_270 = arith.constant 0 : index
    %626 = vector.load %arg19[%625, %c0_270] : memref<64x16xf32, #tpu.memory_space<vmem>>, vector<8x16xf32>
    %cst_271 = arith.constant dense<0.000000e+00> : vector<8x16xf32>
    %627 = tpu.matmul %576, %56, %cst_271 {dimension_numbers = #tpu.dot_dimension_numbers<[1], [0], [0], [1], [0, 0, 1, 1], [], []>} : vector<8x16xf32>, vector<16x16xf32>, vector<8x16xf32> -> vector<8x16xf32>
    %cst_272 = arith.constant dense<0.000000e+00> : vector<8x16xf32>
    %628 = tpu.matmul %576, %58, %cst_272 {dimension_numbers = #tpu.dot_dimension_numbers<[1], [0], [0], [1], [0, 0, 1, 1], [], []>} : vector<8x16xf32>, vector<16x16xf32>, vector<8x16xf32> -> vector<8x16xf32>
    %cst_273 = arith.constant dense<0.000000e+00> : vector<8x16xf32>
    %629 = tpu.matmul %576, %60, %cst_273 {dimension_numbers = #tpu.dot_dimension_numbers<[1], [0], [0], [1], [0, 0, 1, 1], [], []>} : vector<8x16xf32>, vector<16x16xf32>, vector<8x16xf32> -> vector<8x16xf32>
    %630 = arith.addf %622, %627 : vector<8x16xf32>
    %631 = arith.negf %630 : vector<8x16xf32>
    %632 = math.exp %631 : vector<8x16xf32>
    %cst_274 = arith.constant 1.000000e+00 : f32
    %633 = vector.broadcast %cst_274 : f32 to vector<8x16xf32>
    %634 = arith.addf %633, %632 : vector<8x16xf32>
    %635 = arith.divf %633, %634 : vector<8x16xf32>
    %636 = arith.addf %624, %628 : vector<8x16xf32>
    %637 = arith.negf %636 : vector<8x16xf32>
    %638 = math.exp %637 : vector<8x16xf32>
    %cst_275 = arith.constant 1.000000e+00 : f32
    %639 = vector.broadcast %cst_275 : f32 to vector<8x16xf32>
    %640 = arith.addf %639, %638 : vector<8x16xf32>
    %641 = arith.divf %639, %640 : vector<8x16xf32>
    %642 = arith.addf %629, %66 : vector<8x16xf32>
    %643 = arith.mulf %635, %642 : vector<8x16xf32>
    %644 = arith.addf %626, %643 : vector<8x16xf32>
    %645 = math.tanh %644 : vector<8x16xf32>
    %cst_276 = arith.constant 1.000000e+00 : f32
    %646 = vector.broadcast %cst_276 : f32 to vector<8x16xf32>
    %647 = arith.subf %646, %641 : vector<8x16xf32>
    %648 = arith.mulf %647, %645 : vector<8x16xf32>
    %649 = arith.mulf %641, %576 : vector<8x16xf32>
    %650 = arith.addf %648, %649 : vector<8x16xf32>
    %651 = arith.index_cast %c7_i32_255 : i32 to index
    %c0_277 = arith.constant 0 : index
    %c0_278 = arith.constant 0 : index
    %652 = vector.load %arg20[%651, %c0_277, %c0_278] : memref<8x8x16xf32, #tpu.memory_space<vmem>>, vector<1x8x16xf32>
    %653 = vector.shape_cast %652 : vector<1x8x16xf32> to vector<8x16xf32>
    %654 = vector.shape_cast %620 : vector<8x16xf32> to vector<1x8x16xf32>
    tpu.vector_store %arg20[%651, %c0_277, %c0_278], %654 {strides = array<i32>} : memref<8x8x16xf32, #tpu.memory_space<vmem>>, vector<1x8x16xf32>,
    %c7_i32_279 = arith.constant 7 : i32
    %655 = arith.subi %c7_i32_279, %c7_i32_255 : i32
    %656 = arith.index_cast %655 : i32 to index
    %c0_280 = arith.constant 0 : index
    %c0_281 = arith.constant 0 : index
    %657 = vector.load %arg21[%656, %c0_280, %c0_281] : memref<8x8x16xf32, #tpu.memory_space<vmem>>, vector<1x8x16xf32>
    %658 = vector.shape_cast %657 : vector<1x8x16xf32> to vector<8x16xf32>
    %659 = vector.shape_cast %650 : vector<8x16xf32> to vector<1x8x16xf32>
    tpu.vector_store %arg21[%656, %c0_280, %c0_281], %659 {strides = array<i32>} : memref<8x8x16xf32, #tpu.memory_space<vmem>>, vector<1x8x16xf32>,
    %c8_i32_282 = arith.constant 8 : i32
    %c0_283 = arith.constant 0 : index
    %c0_284 = arith.constant 0 : index
    %c0_285 = arith.constant 0 : index
    %660 = vector.load %arg20[%c0_283, %c0_284, %c0_285] : memref<8x8x16xf32, #tpu.memory_space<vmem>>, vector<8x8x16xf32>
    %c0_286 = arith.constant 0 : index
    %c0_287 = arith.constant 0 : index
    %c0_288 = arith.constant 0 : index
    %661 = vector.load %arg12[%c0_286, %c0_287, %c0_288] : memref<8x8x32xf32, #tpu.memory_space<vmem>>, vector<8x8x16xf32>
    tpu.vector_store %arg12[%c0_286, %c0_287, %c0_288], %660 {strides = array<i32>} : memref<8x8x32xf32, #tpu.memory_space<vmem>>, vector<8x8x16xf32>,
    %c0_289 = arith.constant 0 : index
    %c0_290 = arith.constant 0 : index
    %c0_291 = arith.constant 0 : index
    %662 = vector.load %arg21[%c0_289, %c0_290, %c0_291] : memref<8x8x16xf32, #tpu.memory_space<vmem>>, vector<8x8x16xf32>
    %c0_292 = arith.constant 0 : index
    %c0_293 = arith.constant 0 : index
    %c16 = arith.constant 16 : index
    %663 = vector.load %arg12[%c0_292, %c0_293, %c16] : memref<8x8x32xf32, #tpu.memory_space<vmem>>, vector<8x8x16xf32>
    tpu.vector_store %arg12[%c0_292, %c0_293, %c16], %662 {strides = array<i32>} : memref<8x8x32xf32, #tpu.memory_space<vmem>>, vector<8x8x16xf32>,
    %c0_294 = arith.constant 0 : index
    %c0_295 = arith.constant 0 : index
    %664 = vector.load %arg9[%c0_294, %c0_295] : memref<16x32xf32, #tpu.memory_space<vmem>>, vector<16x32xf32>
    %cst_296 = arith.constant dense<0.000000e+00> : vector<8x32xf32>
    %665 = tpu.matmul %620, %664, %cst_296 {dimension_numbers = #tpu.dot_dimension_numbers<[1], [0], [0], [1], [0, 0, 1, 1], [], []>} : vector<8x16xf32>, vector<16x32xf32>, vector<8x32xf32> -> vector<8x32xf32>
    %c0_297 = arith.constant 0 : index
    %c0_298 = arith.constant 0 : index
    %666 = vector.load %arg10[%c0_297, %c0_298] : memref<16x32xf32, #tpu.memory_space<vmem>>, vector<16x32xf32>
    %cst_299 = arith.constant dense<0.000000e+00> : vector<8x32xf32>
    %667 = tpu.matmul %650, %666, %cst_299 {dimension_numbers = #tpu.dot_dimension_numbers<[1], [0], [0], [1], [0, 0, 1, 1], [], []>} : vector<8x16xf32>, vector<16x32xf32>, vector<8x32xf32> -> vector<8x32xf32>
    %668 = arith.addf %665, %667 : vector<8x32xf32>
    %c0_300 = arith.constant 0 : index
    %c0_301 = arith.constant 0 : index
    %669 = vector.load %arg11[%c0_300, %c0_301] : memref<1x32xf32, #tpu.memory_space<vmem>>, vector<1x32xf32>
    %670 = vector.broadcast %669 : vector<1x32xf32> to vector<8x32xf32>
    %671 = arith.addf %668, %670 : vector<8x32xf32>
    %672 = math.tanh %671 : vector<8x32xf32>
    %c0_302 = arith.constant 0 : index
    %c0_303 = arith.constant 0 : index
    %673 = vector.load %arg13[%c0_302, %c0_303] : memref<8x32xf32, #tpu.memory_space<vmem>>, vector<8x32xf32>
    tpu.vector_store %arg13[%c0_302, %c0_303], %672 {strides = array<i32>} : memref<8x32xf32, #tpu.memory_space<vmem>>, vector<8x32xf32>,
    return
  }
}

</mosaic_0001>

<llo_original>
// kernel: encoder_forward.1
$region0: #{encoder_forward.1}
  #allocation0 [shape = 'u32[]', space=smem, size = 0x4, offset = 0x4, fixed_abs, tag = 'smem constant byte address 0x4 - core index']
  #allocation1 [shape = 'u32[144,128]{1,0:T(1,128)}', space=vmem, size = 0x12000, scoped, tag = 'internal scratch']
  #allocation2 [shape = 'f32[64,16]{1,0:T(8,128)}', space=vmem, size = 0x8000, scoped, tag = 'scratch operand']
  #allocation3 [shape = 'f32[64,16]{1,0:T(8,128)}', space=vmem, size = 0x8000, scoped, tag = 'scratch operand']
  #allocation4 [shape = 'f32[64,16]{1,0:T(8,128)}', space=vmem, size = 0x8000, scoped, tag = 'scratch operand']
  #allocation5 [shape = 'f32[64,16]{1,0:T(8,128)}', space=vmem, size = 0x8000, scoped, tag = 'scratch operand']
  #allocation6 [shape = 'f32[64,16]{1,0:T(8,128)}', space=vmem, size = 0x8000, scoped, tag = 'scratch operand']
  #allocation7 [shape = 'f32[64,16]{1,0:T(8,128)}', space=vmem, size = 0x8000, scoped, tag = 'scratch operand']
  #allocation8 [shape = 'f32[8,8,16]{2,1,0:T(8,128)}', space=vmem, size = 0x8000, scoped, tag = 'scratch operand']
  #allocation9 [shape = 'f32[8,8,16]{2,1,0:T(8,128)}', space=vmem, size = 0x8000, scoped, tag = 'scratch operand']
  %s0 = inlined_call_operand.vmem [shape: bf16[64,32], index: 0, kind: input, shape index: {}]
  %s1 = inlined_call_operand.vmem [shape: bf16[3,32,16], index: 1, kind: input, shape index: {}]
  %s2 = inlined_call_operand.vmem [shape: bf16[3,32,16], index: 2, kind: input, shape index: {}]
  %s3 = inlined_call_operand.vmem [shape: f32[3,1,16], index: 3, kind: input, shape index: {}]
  %s4 = inlined_call_operand.vmem [shape: f32[3,1,16], index: 4, kind: input, shape index: {}]
  %s5 = inlined_call_operand.vmem [shape: f32[3,16,16], index: 5, kind: input, shape index: {}]
  %s6 = inlined_call_operand.vmem [shape: f32[3,16,16], index: 6, kind: input, shape index: {}]
  %s7 = inlined_call_operand.vmem [shape: f32[1,16], index: 7, kind: input, shape index: {}]
  %s8 = inlined_call_operand.vmem [shape: f32[1,16], index: 8, kind: input, shape index: {}]
  %s9 = inlined_call_operand.vmem [shape: f32[16,32], index: 9, kind: input, shape index: {}]
  %s10 = inlined_call_operand.vmem [shape: f32[16,32], index: 10, kind: input, shape index: {}]
  %s11 = inlined_call_operand.vmem [shape: f32[1,32], index: 11, kind: input, shape index: {}]
  %s12 = inlined_call_operand.vmem [shape: f32[8,8,32], index: 12, kind: output, shape index: {0}]
  %s13 = inlined_call_operand.vmem [shape: f32[8,32], index: 13, kind: output, shape index: {1}]
  %14 = xla_tuple %s12, %s13
  %s15 = sld [smem:[#allocation0]]
  $region66: #{encoder_forward.1} parent=0
    _
  %s17 = ssub.s32 1, %s15
  %s18 = scalar_select 0, %s17, %s15
  // Predicated region
  $region2: #{encoder_forward.1} parent=0 // pred_check
    _
  $region3: #{encoder_forward.1} parent=0 // pred_check_branch
    %20 = sbr.rel (0) target = $region5
  $region4: #{encoder_forward.1} parent=0 // pred_region
    _
  $region5: #{encoder_forward.1} parent=0 // pred_fallthru
    _
  // Predicated region
  $region6: #{encoder_forward.1} parent=0 // pred_check
    _
  $region7: #{encoder_forward.1} parent=0 // pred_check_branch
    %22 = sbr.rel (0) target = $region9
  $region8: #{encoder_forward.1} parent=0 // pred_region
    _
  $region9: #{encoder_forward.1} parent=0 // pred_fallthru
    _
  // Predicated region
  $region10: #{encoder_forward.1} parent=0 // pred_check
    _
  $region11: #{encoder_forward.1} parent=0 // pred_check_branch
    %24 = sbr.rel (0) target = $region13
  $region12: #{encoder_forward.1} parent=0 // pred_region
    _
  $region13: #{encoder_forward.1} parent=0 // pred_fallthru
    _
  // Predicated region
  $region14: #{encoder_forward.1} parent=0 // pred_check
    _
  $region15: #{encoder_forward.1} parent=0 // pred_check_branch
    %26 = sbr.rel (0) target = $region17
  $region16: #{encoder_forward.1} parent=0 // pred_region
    _
  $region17: #{encoder_forward.1} parent=0 // pred_fallthru
    _
  // Predicated region
  $region18: #{encoder_forward.1} parent=0 // pred_check
    _
  $region19: #{encoder_forward.1} parent=0 // pred_check_branch
    %28 = sbr.rel (0) target = $region21
  $region20: #{encoder_forward.1} parent=0 // pred_region
    _
  $region21: #{encoder_forward.1} parent=0 // pred_fallthru
    _
  // Predicated region
  $region22: #{encoder_forward.1} parent=0 // pred_check
    _
  $region23: #{encoder_forward.1} parent=0 // pred_check_branch
    %30 = sbr.rel (0) target = $region25
  $region24: #{encoder_forward.1} parent=0 // pred_region
    _
  $region25: #{encoder_forward.1} parent=0 // pred_fallthru
    _
  // Predicated region
  $region26: #{encoder_forward.1} parent=0 // pred_check
    _
  $region27: #{encoder_forward.1} parent=0 // pred_check_branch
    %32 = sbr.rel (0) target = $region29
  $region28: #{encoder_forward.1} parent=0 // pred_region
    _
  $region29: #{encoder_forward.1} parent=0 // pred_fallthru
    _
  // Predicated region
  $region30: #{encoder_forward.1} parent=0 // pred_check
    _
  $region31: #{encoder_forward.1} parent=0 // pred_check_branch
    %34 = sbr.rel (0) target = $region33
  $region32: #{encoder_forward.1} parent=0 // pred_region
    _
  $region33: #{encoder_forward.1} parent=0 // pred_fallthru
    _
  // Predicated region
  $region34: #{encoder_forward.1} parent=0 // pred_check
    _
  $region35: #{encoder_forward.1} parent=0 // pred_check_branch
    %36 = sbr.rel (0) target = $region37
  $region36: #{encoder_forward.1} parent=0 // pred_region
    _
  $region37: #{encoder_forward.1} parent=0 // pred_fallthru
    _
  // Predicated region
  $region38: #{encoder_forward.1} parent=0 // pred_check
    _
  $region39: #{encoder_forward.1} parent=0 // pred_check_branch
    %38 = sbr.rel (0) target = $region41
  $region40: #{encoder_forward.1} parent=0 // pred_region
    _
  $region41: #{encoder_forward.1} parent=0 // pred_fallthru
    _
  // Predicated region
  $region42: #{encoder_forward.1} parent=0 // pred_check
    _
  $region43: #{encoder_forward.1} parent=0 // pred_check_branch
    %40 = sbr.rel (0) target = $region45
  $region44: #{encoder_forward.1} parent=0 // pred_region
    _
  $region45: #{encoder_forward.1} parent=0 // pred_fallthru
    _
  // Predicated region
  $region46: #{encoder_forward.1} parent=0 // pred_check
    _
  $region47: #{encoder_forward.1} parent=0 // pred_check_branch
    %42 = sbr.rel (0) target = $region49
  $region48: #{encoder_forward.1} parent=0 // pred_region
    _
  $region49: #{encoder_forward.1} parent=0 // pred_fallthru
    _
  %v44 = vld [vmem:[%s0] sm:$0xf]
  %v45 = vld [vmem:[%s0 + $0x4] sm:$0xf]
  %v46 = vld [vmem:[%s0 + $0x8] sm:$0xf]
  %v47 = vld [vmem:[%s0 + $0xc] sm:$0xf]
  %v48 = vld [vmem:[%s0 + $0x10] sm:$0xf]
  %v49 = vld [vmem:[%s0 + $0x14] sm:$0xf]
  %v50 = vld [vmem:[%s0 + $0x18] sm:$0xf]
  %v51 = vld [vmem:[%s0 + $0x1c] sm:$0xf]
  %v52 = vld [vmem:[%s1] sm:$0xf]
  %v53 = vld [vmem:[%s1 + $0x4] sm:$0xf]
  %v54 = vld [vmem:[%s1 + $0x8] sm:$0xf]
  %v55 = vld [vmem:[%s1 + $0xc] sm:$0xf]
  %v56 = vld [vmem:[%s3] sm:$0x1]
  %v58 = vlaneseq
  %v59 = vshrl.u32 %v58, 7
  %v60 = vsub.s32 0, %v59
  %v61 = vrot.slane %v56, %v60
  %v71 = vunpack.c.l.b16 %v44
  %v72 = vunpack.c.l.b16 %v45
  %v73 = vunpack.c.l.b16 %v46
  %v74 = vunpack.c.l.b16 %v47
  %v75 = vunpack.c.l.b16 %v48
  %v76 = vunpack.c.l.b16 %v49
  %v77 = vunpack.c.l.b16 %v50
  %v78 = vunpack.c.l.b16 %v51
  %v79 = vpack.c.b16 %v72, %v71
  %v80 = vpack.c.b16 %v74, %v73
  %v81 = vpack.c.b16 %v76, %v75
  %v82 = vpack.c.b16 %v78, %v77
  %v87 = vunpack.c.l.b16 %v52
  %v88 = vunpack.c.l.b16 %v53
  %v89 = vunpack.c.l.b16 %v54
  %v90 = vunpack.c.l.b16 %v55
  %v91 = vpack.c.b16 %v88, %v87
  %v92 = vpack.c.b16 %v90, %v89
  %vm95 = vcmask 261120
  %v97 = vsel %vm95, %v79, 0
  %v100 = vsel %vm95, %v80, 0
  %v103 = vsel %vm95, %v81, 0
  %v106 = vsel %vm95, %v82, 0
  %108 = vmatprep.subr.bf16.mxu0 0
  %109 = vmatpush1.bf16.msra.mxu0 0
  %110 = vmatprep.subr.bf16.mxu0 0
  %111 = vmatpush1.bf16.msra.mxu0 0
  %112 = vmatprep.subr.bf16.mxu0 0
  %113 = vmatpush1.bf16.msra.mxu0 0
  %114 = vmatprep.subr.bf16.mxu0 0
  %115 = vmatpush1.bf16.msra.mxu0 0
  %116 = vmatprep.subr.bf16.mxu0 0
  %117 = vmatpush1.bf16.msra.mxu0 0
  %118 = vmatprep.subr.bf16.mxu0 0
  %119 = vmatpush1.bf16.msra.mxu0 0
  %120 = vmatprep.subr.bf16.mxu0 0
  %121 = vmatpush1.bf16.msra.mxu0 %v92
  %122 = vmatprep.subr.bf16.mxu0 0
  %123 = vmatpush1.bf16.msra.mxu0 %v91
  %124 = vmatprep.subr.bf16.mxu0 0
  %125 = vmatpush2.bf16.msra.mxu0 0
  %126 = vmatprep.subr.bf16.mxu0 0
  %127 = vmatpush2.bf16.msra.mxu0 0
  %128 = vmatprep.subr.bf16.mxu0 0
  %129 = vmatpush2.bf16.msra.mxu0 0
  %130 = vmatprep.subr.bf16.mxu0 0
  %131 = vmatpush2.bf16.msra.mxu0 0
  %132 = vmatprep.subr.bf16.mxu0 0
  %133 = vmatpush2.bf16.msra.mxu0 0
  %134 = vmatprep.subr.bf16.mxu0 0
  %135 = vmatpush2.bf16.msra.mxu0 0
  %136 = vmatprep.subr.bf16.mxu0 0
  %137 = vmatpush2.bf16.msra.mxu0 0
  %138 = vmatprep.subr.bf16.mxu0 0
  %139 = vmatpush2.bf16.msra.mxu0 0
  %140 = vmatprep.mubr.bf16.mxu0 0
  %141 = vmatmul.mubr.bf16.gmra.mxu0 %v97
  %v142 = vpop.f32.mrf.mxu0
  %v143 = vadd.f32 %v61, %v142
  %v144 = vpop.f32.mrf.mxu0
  %v145 = vpop.f32.mrf.mxu0
  %v146 = vadd.f32 %v61, %v145
  %v147 = vpop.f32.mrf.mxu0
  %148 = vmatprep.mubr.bf16.mxu0 0
  %149 = vmatmul.mubr.bf16.gmra.mxu0 %v100
  %v150 = vpop.f32.mrf.mxu0
  %v151 = vadd.f32 %v61, %v150
  %v152 = vpop.f32.mrf.mxu0
  %v153 = vpop.f32.mrf.mxu0
  %v154 = vadd.f32 %v61, %v153
  %v155 = vpop.f32.mrf.mxu0
  %156 = vmatprep.mubr.bf16.mxu0 0
  %157 = vmatmul.mubr.bf16.gmra.mxu0 %v103
  %v158 = vpop.f32.mrf.mxu0
  %v159 = vadd.f32 %v61, %v158
  %v160 = vpop.f32.mrf.mxu0
  %v161 = vpop.f32.mrf.mxu0
  %v162 = vadd.f32 %v61, %v161
  %v163 = vpop.f32.mrf.mxu0
  %164 = vmatprep.mubr.bf16.mxu0 0
  %165 = vmatmul.mubr.bf16.gmra.mxu0 %v106
  %v166 = vpop.f32.mrf.mxu0
  %v167 = vadd.f32 %v61, %v166
  %v168 = vpop.f32.mrf.mxu0
  %v169 = vpop.f32.mrf.mxu0
  %v170 = vadd.f32 %v61, %v169
  %v171 = vpop.f32.mrf.mxu0
  %172 = vdwg.mxu0
  %vm173 = vcmask 130048
  %174 = vst.msk [vmem:[#allocation2] sm:$0xff] %vm173, %v143
  %175 = vst.msk [vmem:[#allocation2 + $0x8] sm:$0xff] %vm173, %v146
  %176 = vst.msk [vmem:[#allocation2 + $0x10] sm:$0xff] %vm173, %v151
  %177 = vst.msk [vmem:[#allocation2 + $0x18] sm:$0xff] %vm173, %v154
  %178 = vst.msk [vmem:[#allocation2 + $0x20] sm:$0xff] %vm173, %v159
  %179 = vst.msk [vmem:[#allocation2 + $0x28] sm:$0xff] %vm173, %v162
  %180 = vst.msk [vmem:[#allocation2 + $0x30] sm:$0xff] %vm173, %v167
  %181 = vst.msk [vmem:[#allocation2 + $0x38] sm:$0xff] %vm173, %v170
  %s182 = scalar_lea.vmem %s1, 16
  %v183 = vld [vmem:[%s182] sm:$0xf]
  %v184 = vld [vmem:[%s182 + $0x4] sm:$0xf]
  %v185 = vld [vmem:[%s182 + $0x8] sm:$0xf]
  %v186 = vld [vmem:[%s182 + $0xc] sm:$0xf]
  %s187 = scalar_lea.vmem %s3, 1
  %v188 = vld [vmem:[%s187] sm:$0x1]
  %v190 = vlaneseq
  %v191 = vshrl.u32 %v190, 7
  %v192 = vsub.s32 0, %v191
  %v193 = vrot.slane %v188, %v192
  %v199 = vunpack.c.l.b16 %v183
  %v200 = vunpack.c.l.b16 %v184
  %v201 = vunpack.c.l.b16 %v185
  %v202 = vunpack.c.l.b16 %v186
  %v203 = vpack.c.b16 %v200, %v199
  %v204 = vpack.c.b16 %v202, %v201
  %207 = vmatprep.subr.bf16.mxu0 0
  %208 = vmatpush1.bf16.msra.mxu0 0
  %209 = vmatprep.subr.bf16.mxu0 0
  %210 = vmatpush1.bf16.msra.mxu0 0
  %211 = vmatprep.subr.bf16.mxu0 0
  %212 = vmatpush1.bf16.msra.mxu0 0
  %213 = vmatprep.subr.bf16.mxu0 0
  %214 = vmatpush1.bf16.msra.mxu0 0
  %215 = vmatprep.subr.bf16.mxu0 0
  %216 = vmatpush1.bf16.msra.mxu0 0
  %217 = vmatprep.subr.bf16.mxu0 0
  %218 = vmatpush1.bf16.msra.mxu0 0
  %219 = vmatprep.subr.bf16.mxu0 0
  %220 = vmatpush1.bf16.msra.mxu0 %v204
  %221 = vmatprep.subr.bf16.mxu0 0
  %222 = vmatpush1.bf16.msra.mxu0 %v203
  %223 = vmatprep.subr.bf16.mxu0 0
  %224 = vmatpush2.bf16.msra.mxu0 0
  %225 = vmatprep.subr.bf16.mxu0 0
  %226 = vmatpush2.bf16.msra.mxu0 0
  %227 = vmatprep.subr.bf16.mxu0 0
  %228 = vmatpush2.bf16.msra.mxu0 0
  %229 = vmatprep.subr.bf16.mxu0 0
  %230 = vmatpush2.bf16.msra.mxu0 0
  %231 = vmatprep.subr.bf16.mxu0 0
  %232 = vmatpush2.bf16.msra.mxu0 0
  %233 = vmatprep.subr.bf16.mxu0 0
  %234 = vmatpush2.bf16.msra.mxu0 0
  %235 = vmatprep.subr.bf16.mxu0 0
  %236 = vmatpush2.bf16.msra.mxu0 0
  %237 = vmatprep.subr.bf16.mxu0 0
  %238 = vmatpush2.bf16.msra.mxu0 0
  %239 = vmatprep.mubr.bf16.mxu0 0
  %240 = vmatmul.mubr.bf16.gmra.mxu0 %v97
  %v241 = vpop.f32.mrf.mxu0
  %v242 = vadd.f32 %v193, %v241
  %v243 = vpop.f32.mrf.mxu0
  %v244 = vpop.f32.mrf.mxu0
  %v245 = vadd.f32 %v193, %v244
  %v246 = vpop.f32.mrf.mxu0
  %247 = vmatprep.mubr.bf16.mxu0 0
  %248 = vmatmul.mubr.bf16.gmra.mxu0 %v100
  %v249 = vpop.f32.mrf.mxu0
  %v250 = vadd.f32 %v193, %v249
  %v251 = vpop.f32.mrf.mxu0
  %v252 = vpop.f32.mrf.mxu0
  %v253 = vadd.f32 %v193, %v252
  %v254 = vpop.f32.mrf.mxu0
  %255 = vmatprep.mubr.bf16.mxu0 0
  %256 = vmatmul.mubr.bf16.gmra.mxu0 %v103
  %v257 = vpop.f32.mrf.mxu0
  %v258 = vadd.f32 %v193, %v257
  %v259 = vpop.f32.mrf.mxu0
  %v260 = vpop.f32.mrf.mxu0
  %v261 = vadd.f32 %v193, %v260
  %v262 = vpop.f32.mrf.mxu0
  %263 = vmatprep.mubr.bf16.mxu0 0
  %264 = vmatmul.mubr.bf16.gmra.mxu0 %v106
  %v265 = vpop.f32.mrf.mxu0
  %v266 = vadd.f32 %v193, %v265
  %v267 = vpop.f32.mrf.mxu0
  %v268 = vpop.f32.mrf.mxu0
  %v269 = vadd.f32 %v193, %v268
  %v270 = vpop.f32.mrf.mxu0
  %271 = vdwg.mxu0
  %272 = vst.msk [vmem:[#allocation3] sm:$0xff] %vm173, %v242
  %273 = vst.msk [vmem:[#allocation3 + $0x8] sm:$0xff] %vm173, %v245
  %274 = vst.msk [vmem:[#allocation3 + $0x10] sm:$0xff] %vm173, %v250
  %275 = vst.msk [vmem:[#allocation3 + $0x18] sm:$0xff] %vm173, %v253
  %276 = vst.msk [vmem:[#allocation3 + $0x20] sm:$0xff] %vm173, %v258
  %277 = vst.msk [vmem:[#allocation3 + $0x28] sm:$0xff] %vm173, %v261
  %278 = vst.msk [vmem:[#allocation3 + $0x30] sm:$0xff] %vm173, %v266
  %279 = vst.msk [vmem:[#allocation3 + $0x38] sm:$0xff] %vm173, %v269
  %s280 = scalar_lea.vmem %s1, 32
  %v281 = vld [vmem:[%s280] sm:$0xf]
  %v282 = vld [vmem:[%s280 + $0x4] sm:$0xf]
  %v283 = vld [vmem:[%s280 + $0x8] sm:$0xf]
  %v284 = vld [vmem:[%s280 + $0xc] sm:$0xf]
  %s285 = scalar_lea.vmem %s3, 2
  %v286 = vld [vmem:[%s285] sm:$0x1]
  %v288 = vlaneseq
  %v289 = vshrl.u32 %v288, 7
  %v290 = vsub.s32 0, %v289
  %v291 = vrot.slane %v286, %v290
  %v297 = vunpack.c.l.b16 %v281
  %v298 = vunpack.c.l.b16 %v282
  %v299 = vunpack.c.l.b16 %v283
  %v300 = vunpack.c.l.b16 %v284
  %v301 = vpack.c.b16 %v298, %v297
  %v302 = vpack.c.b16 %v300, %v299
  %305 = vmatprep.subr.bf16.mxu0 0
  %306 = vmatpush1.bf16.msra.mxu0 0
  %307 = vmatprep.subr.bf16.mxu0 0
  %308 = vmatpush1.bf16.msra.mxu0 0
  %309 = vmatprep.subr.bf16.mxu0 0
  %310 = vmatpush1.bf16.msra.mxu0 0
  %311 = vmatprep.subr.bf16.mxu0 0
  %312 = vmatpush1.bf16.msra.mxu0 0
  %313 = vmatprep.subr.bf16.mxu0 0
  %314 = vmatpush1.bf16.msra.mxu0 0
  %315 = vmatprep.subr.bf16.mxu0 0
  %316 = vmatpush1.bf16.msra.mxu0 0
  %317 = vmatprep.subr.bf16.mxu0 0
  %318 = vmatpush1.bf16.msra.mxu0 %v302
  %319 = vmatprep.subr.bf16.mxu0 0
  %320 = vmatpush1.bf16.msra.mxu0 %v301
  %321 = vmatprep.subr.bf16.mxu0 0
  %322 = vmatpush2.bf16.msra.mxu0 0
  %323 = vmatprep.subr.bf16.mxu0 0
  %324 = vmatpush2.bf16.msra.mxu0 0
  %325 = vmatprep.subr.bf16.mxu0 0
  %326 = vmatpush2.bf16.msra.mxu0 0
  %327 = vmatprep.subr.bf16.mxu0 0
  %328 = vmatpush2.bf16.msra.mxu0 0
  %329 = vmatprep.subr.bf16.mxu0 0
  %330 = vmatpush2.bf16.msra.mxu0 0
  %331 = vmatprep.subr.bf16.mxu0 0
  %332 = vmatpush2.bf16.msra.mxu0 0
  %333 = vmatprep.subr.bf16.mxu0 0
  %334 = vmatpush2.bf16.msra.mxu0 0
  %335 = vmatprep.subr.bf16.mxu0 0
  %336 = vmatpush2.bf16.msra.mxu0 0
  %337 = vmatprep.mubr.bf16.mxu0 0
  %338 = vmatmul.mubr.bf16.gmra.mxu0 %v97
  %v339 = vpop.f32.mrf.mxu0
  %v340 = vadd.f32 %v291, %v339
  %v341 = vpop.f32.mrf.mxu0
  %v342 = vpop.f32.mrf.mxu0
  %v343 = vadd.f32 %v291, %v342
  %v344 = vpop.f32.mrf.mxu0
  %345 = vmatprep.mubr.bf16.mxu0 0
  %346 = vmatmul.mubr.bf16.gmra.mxu0 %v100
  %v347 = vpop.f32.mrf.mxu0
  %v348 = vadd.f32 %v291, %v347
  %v349 = vpop.f32.mrf.mxu0
  %v350 = vpop.f32.mrf.mxu0
  %v351 = vadd.f32 %v291, %v350
  %v352 = vpop.f32.mrf.mxu0
  %353 = vmatprep.mubr.bf16.mxu0 0
  %354 = vmatmul.mubr.bf16.gmra.mxu0 %v103
  %v355 = vpop.f32.mrf.mxu0
  %v356 = vadd.f32 %v291, %v355
  %v357 = vpop.f32.mrf.mxu0
  %v358 = vpop.f32.mrf.mxu0
  %v359 = vadd.f32 %v291, %v358
  %v360 = vpop.f32.mrf.mxu0
  %361 = vmatprep.mubr.bf16.mxu0 0
  %362 = vmatmul.mubr.bf16.gmra.mxu0 %v106
  %v363 = vpop.f32.mrf.mxu0
  %v364 = vadd.f32 %v291, %v363
  %v365 = vpop.f32.mrf.mxu0
  %v366 = vpop.f32.mrf.mxu0
  %v367 = vadd.f32 %v291, %v366
  %v368 = vpop.f32.mrf.mxu0
  %369 = vdwg.mxu0
  %370 = vst.msk [vmem:[#allocation4] sm:$0xff] %vm173, %v340
  %371 = vst.msk [vmem:[#allocation4 + $0x8] sm:$0xff] %vm173, %v343
  %372 = vst.msk [vmem:[#allocation4 + $0x10] sm:$0xff] %vm173, %v348
  %373 = vst.msk [vmem:[#allocation4 + $0x18] sm:$0xff] %vm173, %v351
  %374 = vst.msk [vmem:[#allocation4 + $0x20] sm:$0xff] %vm173, %v356
  %375 = vst.msk [vmem:[#allocation4 + $0x28] sm:$0xff] %vm173, %v359
  %376 = vst.msk [vmem:[#allocation4 + $0x30] sm:$0xff] %vm173, %v364
  %377 = vst.msk [vmem:[#allocation4 + $0x38] sm:$0xff] %vm173, %v367
  %v378 = vld [vmem:[%s2] sm:$0xf]
  %v379 = vld [vmem:[%s2 + $0x4] sm:$0xf]
  %v380 = vld [vmem:[%s2 + $0x8] sm:$0xf]
  %v381 = vld [vmem:[%s2 + $0xc] sm:$0xf]
  %v382 = vld [vmem:[%s4] sm:$0x1]
  %v384 = vlaneseq
  %v385 = vshrl.u32 %v384, 7
  %v386 = vsub.s32 0, %v385
  %v387 = vrot.slane %v382, %v386
  %v393 = vunpack.c.l.b16 %v378
  %v394 = vunpack.c.l.b16 %v379
  %v395 = vunpack.c.l.b16 %v380
  %v396 = vunpack.c.l.b16 %v381
  %v397 = vpack.c.b16 %v394, %v393
  %v398 = vpack.c.b16 %v396, %v395
  %401 = vmatprep.subr.bf16.mxu0 0
  %402 = vmatpush1.bf16.msra.mxu0 0
  %403 = vmatprep.subr.bf16.mxu0 0
  %404 = vmatpush1.bf16.msra.mxu0 0
  %405 = vmatprep.subr.bf16.mxu0 0
  %406 = vmatpush1.bf16.msra.mxu0 0
  %407 = vmatprep.subr.bf16.mxu0 0
  %408 = vmatpush1.bf16.msra.mxu0 0
  %409 = vmatprep.subr.bf16.mxu0 0
  %410 = vmatpush1.bf16.msra.mxu0 0
  %411 = vmatprep.subr.bf16.mxu0 0
  %412 = vmatpush1.bf16.msra.mxu0 0
  %413 = vmatprep.subr.bf16.mxu0 0
  %414 = vmatpush1.bf16.msra.mxu0 %v398
  %415 = vmatprep.subr.bf16.mxu0 0
  %416 = vmatpush1.bf16.msra.mxu0 %v397
  %417 = vmatprep.subr.bf16.mxu0 0
  %418 = vmatpush2.bf16.msra.mxu0 0
  %419 = vmatprep.subr.bf16.mxu0 0
  %420 = vmatpush2.bf16.msra.mxu0 0
  %421 = vmatprep.subr.bf16.mxu0 0
  %422 = vmatpush2.bf16.msra.mxu0 0
  %423 = vmatprep.subr.bf16.mxu0 0
  %424 = vmatpush2.bf16.msra.mxu0 0
  %425 = vmatprep.subr.bf16.mxu0 0
  %426 = vmatpush2.bf16.msra.mxu0 0
  %427 = vmatprep.subr.bf16.mxu0 0
  %428 = vmatpush2.bf16.msra.mxu0 0
  %429 = vmatprep.subr.bf16.mxu0 0
  %430 = vmatpush2.bf16.msra.mxu0 0
  %431 = vmatprep.subr.bf16.mxu0 0
  %432 = vmatpush2.bf16.msra.mxu0 0
  %433 = vmatprep.mubr.bf16.mxu0 0
  %434 = vmatmul.mubr.bf16.gmra.mxu0 %v97
  %v435 = vpop.f32.mrf.mxu0
  %v436 = vadd.f32 %v387, %v435
  %v437 = vpop.f32.mrf.mxu0
  %v438 = vpop.f32.mrf.mxu0
  %v439 = vadd.f32 %v387, %v438
  %v440 = vpop.f32.mrf.mxu0
  %441 = vmatprep.mubr.bf16.mxu0 0
  %442 = vmatmul.mubr.bf16.gmra.mxu0 %v100
  %v443 = vpop.f32.mrf.mxu0
  %v444 = vadd.f32 %v387, %v443
  %v445 = vpop.f32.mrf.mxu0
  %v446 = vpop.f32.mrf.mxu0
  %v447 = vadd.f32 %v387, %v446
  %v448 = vpop.f32.mrf.mxu0
  %449 = vmatprep.mubr.bf16.mxu0 0
  %450 = vmatmul.mubr.bf16.gmra.mxu0 %v103
  %v451 = vpop.f32.mrf.mxu0
  %v452 = vadd.f32 %v387, %v451
  %v453 = vpop.f32.mrf.mxu0
  %v454 = vpop.f32.mrf.mxu0
  %v455 = vadd.f32 %v387, %v454
  %v456 = vpop.f32.mrf.mxu0
  %457 = vmatprep.mubr.bf16.mxu0 0
  %458 = vmatmul.mubr.bf16.gmra.mxu0 %v106
  %v459 = vpop.f32.mrf.mxu0
  %v460 = vadd.f32 %v387, %v459
  %v461 = vpop.f32.mrf.mxu0
  %v462 = vpop.f32.mrf.mxu0
  %v463 = vadd.f32 %v387, %v462
  %v464 = vpop.f32.mrf.mxu0
  %465 = vdwg.mxu0
  %466 = vst.msk [vmem:[#allocation5] sm:$0xff] %vm173, %v436
  %467 = vst.msk [vmem:[#allocation5 + $0x8] sm:$0xff] %vm173, %v439
  %468 = vst.msk [vmem:[#allocation5 + $0x10] sm:$0xff] %vm173, %v444
  %469 = vst.msk [vmem:[#allocation5 + $0x18] sm:$0xff] %vm173, %v447
  %470 = vst.msk [vmem:[#allocation5 + $0x20] sm:$0xff] %vm173, %v452
  %471 = vst.msk [vmem:[#allocation5 + $0x28] sm:$0xff] %vm173, %v455
  %472 = vst.msk [vmem:[#allocation5 + $0x30] sm:$0xff] %vm173, %v460
  %473 = vst.msk [vmem:[#allocation5 + $0x38] sm:$0xff] %vm173, %v463
  %s474 = scalar_lea.vmem %s2, 16
  %v475 = vld [vmem:[%s474] sm:$0xf]
  %v476 = vld [vmem:[%s474 + $0x4] sm:$0xf]
  %v477 = vld [vmem:[%s474 + $0x8] sm:$0xf]
  %v478 = vld [vmem:[%s474 + $0xc] sm:$0xf]
  %s479 = scalar_lea.vmem %s4, 1
  %v480 = vld [vmem:[%s479] sm:$0x1]
  %v482 = vlaneseq
  %v483 = vshrl.u32 %v482, 7
  %v484 = vsub.s32 0, %v483
  %v485 = vrot.slane %v480, %v484
  %v491 = vunpack.c.l.b16 %v475
  %v492 = vunpack.c.l.b16 %v476
  %v493 = vunpack.c.l.b16 %v477
  %v494 = vunpack.c.l.b16 %v478
  %v495 = vpack.c.b16 %v492, %v491
  %v496 = vpack.c.b16 %v494, %v493
  %499 = vmatprep.subr.bf16.mxu0 0
  %500 = vmatpush1.bf16.msra.mxu0 0
  %501 = vmatprep.subr.bf16.mxu0 0
  %502 = vmatpush1.bf16.msra.mxu0 0
  %503 = vmatprep.subr.bf16.mxu0 0
  %504 = vmatpush1.bf16.msra.mxu0 0
  %505 = vmatprep.subr.bf16.mxu0 0
  %506 = vmatpush1.bf16.msra.mxu0 0
  %507 = vmatprep.subr.bf16.mxu0 0
  %508 = vmatpush1.bf16.msra.mxu0 0
  %509 = vmatprep.subr.bf16.mxu0 0
  %510 = vmatpush1.bf16.msra.mxu0 0
  %511 = vmatprep.subr.bf16.mxu0 0
  %512 = vmatpush1.bf16.msra.mxu0 %v496
  %513 = vmatprep.subr.bf16.mxu0 0
  %514 = vmatpush1.bf16.msra.mxu0 %v495
  %515 = vmatprep.subr.bf16.mxu0 0
  %516 = vmatpush2.bf16.msra.mxu0 0
  %517 = vmatprep.subr.bf16.mxu0 0
  %518 = vmatpush2.bf16.msra.mxu0 0
  %519 = vmatprep.subr.bf16.mxu0 0
  %520 = vmatpush2.bf16.msra.mxu0 0
  %521 = vmatprep.subr.bf16.mxu0 0
  %522 = vmatpush2.bf16.msra.mxu0 0
  %523 = vmatprep.subr.bf16.mxu0 0
  %524 = vmatpush2.bf16.msra.mxu0 0
  %525 = vmatprep.subr.bf16.mxu0 0
  %526 = vmatpush2.bf16.msra.mxu0 0
  %527 = vmatprep.subr.bf16.mxu0 0
  %528 = vmatpush2.bf16.msra.mxu0 0
  %529 = vmatprep.subr.bf16.mxu0 0
  %530 = vmatpush2.bf16.msra.mxu0 0
  %531 = vmatprep.mubr.bf16.mxu0 0
  %532 = vmatmul.mubr.bf16.gmra.mxu0 %v97
  %v533 = vpop.f32.mrf.mxu0
  %v534 = vadd.f32 %v485, %v533
  %v535 = vpop.f32.mrf.mxu0
  %v536 = vpop.f32.mrf.mxu0
  %v537 = vadd.f32 %v485, %v536
  %v538 = vpop.f32.mrf.mxu0
  %539 = vmatprep.mubr.bf16.mxu0 0
  %540 = vmatmul.mubr.bf16.gmra.mxu0 %v100
  %v541 = vpop.f32.mrf.mxu0
  %v542 = vadd.f32 %v485, %v541
  %v543 = vpop.f32.mrf.mxu0
  %v544 = vpop.f32.mrf.mxu0
  %v545 = vadd.f32 %v485, %v544
  %v546 = vpop.f32.mrf.mxu0
  %547 = vmatprep.mubr.bf16.mxu0 0
  %548 = vmatmul.mubr.bf16.gmra.mxu0 %v103
  %v549 = vpop.f32.mrf.mxu0
  %v550 = vadd.f32 %v485, %v549
  %v551 = vpop.f32.mrf.mxu0
  %v552 = vpop.f32.mrf.mxu0
  %v553 = vadd.f32 %v485, %v552
  %v554 = vpop.f32.mrf.mxu0
  %555 = vmatprep.mubr.bf16.mxu0 0
  %556 = vmatmul.mubr.bf16.gmra.mxu0 %v106
  %v557 = vpop.f32.mrf.mxu0
  %v558 = vadd.f32 %v485, %v557
  %v559 = vpop.f32.mrf.mxu0
  %v560 = vpop.f32.mrf.mxu0
  %v561 = vadd.f32 %v485, %v560
  %v562 = vpop.f32.mrf.mxu0
  %563 = vdwg.mxu0
  %564 = vst.msk [vmem:[#allocation6] sm:$0xff] %vm173, %v534
  %565 = vst.msk [vmem:[#allocation6 + $0x8] sm:$0xff] %vm173, %v537
  %566 = vst.msk [vmem:[#allocation6 + $0x10] sm:$0xff] %vm173, %v542
  %567 = vst.msk [vmem:[#allocation6 + $0x18] sm:$0xff] %vm173, %v545
  %568 = vst.msk [vmem:[#allocation6 + $0x20] sm:$0xff] %vm173, %v550
  %569 = vst.msk [vmem:[#allocation6 + $0x28] sm:$0xff] %vm173, %v553
  %570 = vst.msk [vmem:[#allocation6 + $0x30] sm:$0xff] %vm173, %v558
  %571 = vst.msk [vmem:[#allocation6 + $0x38] sm:$0xff] %vm173, %v561
  %s572 = scalar_lea.vmem %s2, 32
  %v573 = vld [vmem:[%s572] sm:$0xf]
  %v574 = vld [vmem:[%s572 + $0x4] sm:$0xf]
  %v575 = vld [vmem:[%s572 + $0x8] sm:$0xf]
  %v576 = vld [vmem:[%s572 + $0xc] sm:$0xf]
  %s577 = scalar_lea.vmem %s4, 2
  %v578 = vld [vmem:[%s577] sm:$0x1]
  %v580 = vlaneseq
  %v581 = vshrl.u32 %v580, 7
  %v582 = vsub.s32 0, %v581
  %v583 = vrot.slane %v578, %v582
  %v589 = vunpack.c.l.b16 %v573
  %v590 = vunpack.c.l.b16 %v574
  %v591 = vunpack.c.l.b16 %v575
  %v592 = vunpack.c.l.b16 %v576
  %v593 = vpack.c.b16 %v590, %v589
  %v594 = vpack.c.b16 %v592, %v591
  %597 = vmatprep.subr.bf16.mxu0 0
  %598 = vmatpush1.bf16.msra.mxu0 0
  %599 = vmatprep.subr.bf16.mxu0 0
  %600 = vmatpush1.bf16.msra.mxu0 0
  %601 = vmatprep.subr.bf16.mxu0 0
  %602 = vmatpush1.bf16.msra.mxu0 0
  %603 = vmatprep.subr.bf16.mxu0 0
  %604 = vmatpush1.bf16.msra.mxu0 0
  %605 = vmatprep.subr.bf16.mxu0 0
  %606 = vmatpush1.bf16.msra.mxu0 0
  %607 = vmatprep.subr.bf16.mxu0 0
  %608 = vmatpush1.bf16.msra.mxu0 0
  %609 = vmatprep.subr.bf16.mxu0 0
  %610 = vmatpush1.bf16.msra.mxu0 %v594
  %611 = vmatprep.subr.bf16.mxu0 0
  %612 = vmatpush1.bf16.msra.mxu0 %v593
  %613 = vmatprep.subr.bf16.mxu0 0
  %614 = vmatpush2.bf16.msra.mxu0 0
  %615 = vmatprep.subr.bf16.mxu0 0
  %616 = vmatpush2.bf16.msra.mxu0 0
  %617 = vmatprep.subr.bf16.mxu0 0
  %618 = vmatpush2.bf16.msra.mxu0 0
  %619 = vmatprep.subr.bf16.mxu0 0
  %620 = vmatpush2.bf16.msra.mxu0 0
  %621 = vmatprep.subr.bf16.mxu0 0
  %622 = vmatpush2.bf16.msra.mxu0 0
  %623 = vmatprep.subr.bf16.mxu0 0
  %624 = vmatpush2.bf16.msra.mxu0 0
  %625 = vmatprep.subr.bf16.mxu0 0
  %626 = vmatpush2.bf16.msra.mxu0 0
  %627 = vmatprep.subr.bf16.mxu0 0
  %628 = vmatpush2.bf16.msra.mxu0 0
  %629 = vmatprep.mubr.bf16.mxu0 0
  %630 = vmatmul.mubr.bf16.gmra.mxu0 %v97
  %v631 = vpop.f32.mrf.mxu0
  %v632 = vadd.f32 %v583, %v631
  %v633 = vpop.f32.mrf.mxu0
  %v634 = vpop.f32.mrf.mxu0
  %v635 = vadd.f32 %v583, %v634
  %v636 = vpop.f32.mrf.mxu0
  %637 = vmatprep.mubr.bf16.mxu0 0
  %638 = vmatmul.mubr.bf16.gmra.mxu0 %v100
  %v639 = vpop.f32.mrf.mxu0
  %v640 = vadd.f32 %v583, %v639
  %v641 = vpop.f32.mrf.mxu0
  %v642 = vpop.f32.mrf.mxu0
  %v643 = vadd.f32 %v583, %v642
  %v644 = vpop.f32.mrf.mxu0
  %645 = vmatprep.mubr.bf16.mxu0 0
  %646 = vmatmul.mubr.bf16.gmra.mxu0 %v103
  %v647 = vpop.f32.mrf.mxu0
  %v648 = vadd.f32 %v583, %v647
  %v649 = vpop.f32.mrf.mxu0
  %v650 = vpop.f32.mrf.mxu0
  %v651 = vadd.f32 %v583, %v650
  %v652 = vpop.f32.mrf.mxu0
  %653 = vmatprep.mubr.bf16.mxu0 0
  %654 = vmatmul.mubr.bf16.gmra.mxu0 %v106
  %v655 = vpop.f32.mrf.mxu0
  %v656 = vadd.f32 %v583, %v655
  %v657 = vpop.f32.mrf.mxu0
  %v658 = vpop.f32.mrf.mxu0
  %v659 = vadd.f32 %v583, %v658
  %v660 = vpop.f32.mrf.mxu0
  %661 = vdwg.mxu0
  %662 = vst.msk [vmem:[#allocation7] sm:$0xff] %vm173, %v632
  %663 = vst.msk [vmem:[#allocation7 + $0x8] sm:$0xff] %vm173, %v635
  %664 = vst.msk [vmem:[#allocation7 + $0x10] sm:$0xff] %vm173, %v640
  %665 = vst.msk [vmem:[#allocation7 + $0x18] sm:$0xff] %vm173, %v643
  %666 = vst.msk [vmem:[#allocation7 + $0x20] sm:$0xff] %vm173, %v648
  %667 = vst.msk [vmem:[#allocation7 + $0x28] sm:$0xff] %vm173, %v651
  %668 = vst.msk [vmem:[#allocation7 + $0x30] sm:$0xff] %vm173, %v656
  %669 = vst.msk [vmem:[#allocation7 + $0x38] sm:$0xff] %vm173, %v659
  %v670 = vld [vmem:[%s5] sm:$0xff]
  %v671 = vld [vmem:[%s5 + $0x8] sm:$0xff]
  %s672 = scalar_lea.vmem %s5, 16
  %v673 = vld [vmem:[%s672] sm:$0xff]
  %v674 = vld [vmem:[%s672 + $0x8] sm:$0xff]
  %s675 = scalar_lea.vmem %s5, 32
  %v676 = vld [vmem:[%s675] sm:$0xff]
  %v677 = vld [vmem:[%s675 + $0x8] sm:$0xff]
  %v678 = vld [vmem:[%s6] sm:$0xff]
  %v679 = vld [vmem:[%s6 + $0x8] sm:$0xff]
  %s680 = scalar_lea.vmem %s6, 16
  %v681 = vld [vmem:[%s680] sm:$0xff]
  %v682 = vld [vmem:[%s680 + $0x8] sm:$0xff]
  %s683 = scalar_lea.vmem %s6, 32
  %v684 = vld [vmem:[%s683] sm:$0xff]
  %v685 = vld [vmem:[%s683 + $0x8] sm:$0xff]
  %v686 = vld [vmem:[%s7] sm:$0x1]
  %v688 = vlaneseq
  %v689 = vshrl.u32 %v688, 7
  %v690 = vsub.s32 0, %v689
  %v691 = vrot.slane %v686, %v690
  %v693 = vld [vmem:[%s8] sm:$0x1]
  %v695 = vlaneseq
  %v696 = vshrl.u32 %v695, 7
  %v697 = vsub.s32 0, %v696
  %v698 = vrot.slane %v693, %v697
  %v700 = vld [vmem:[#allocation2] sm:$0xff]
  %v701 = vld [vmem:[#allocation3] sm:$0xff]
  %v702 = vld [vmem:[#allocation4] sm:$0xff]
  %v704 = vsel %vm173, 0.0, 0
  %706 = vmatprep.subr.mxu0 0.0
  %707 = vmatpush1.msra.mxu0 0.0
  %708 = vmatprep.subr.mxu0 0.0
  %709 = vmatpush1.msra.mxu0 0.0
  %710 = vmatprep.subr.mxu0 0.0
  %711 = vmatpush1.msra.mxu0 0.0
  %712 = vmatprep.subr.mxu0 0.0
  %713 = vmatpush1.msra.mxu0 0.0
  %714 = vmatprep.subr.mxu0 0.0
  %715 = vmatpush1.msra.mxu0 0.0
  %716 = vmatprep.subr.mxu0 0.0
  %717 = vmatpush1.msra.mxu0 0.0
  %718 = vmatprep.subr.mxu0 0.0
  %719 = vmatpush1.msra.mxu0 0.0
  %720 = vmatprep.subr.mxu0 0.0
  %721 = vmatpush1.msra.mxu0 0.0
  %722 = vmatprep.subr.mxu0 0.0
  %723 = vmatpush1.msra.mxu0 0.0
  %724 = vmatprep.subr.mxu0 0.0
  %725 = vmatpush1.msra.mxu0 0.0
  %726 = vmatprep.subr.mxu0 0.0
  %727 = vmatpush1.msra.mxu0 0.0
  %728 = vmatprep.subr.mxu0 0.0
  %729 = vmatpush1.msra.mxu0 0.0
  %730 = vmatprep.subr.mxu0 0.0
  %731 = vmatpush1.msra.mxu0 0.0
  %732 = vmatprep.subr.mxu0 0.0
  %733 = vmatpush1.msra.mxu0 0.0
  %734 = vmatprep.subr.mxu0 0.0
  %735 = vmatpush1.msra.mxu0 %v671
  %736 = vmatprep.subr.mxu0 0.0
  %737 = vmatpush1.msra.mxu0 %v670
  %738 = vmatprep.subr.mxu0 0.0
  %739 = vmatpush2.msra.mxu0 0.0
  %740 = vmatprep.subr.mxu0 0.0
  %741 = vmatpush2.msra.mxu0 0.0
  %742 = vmatprep.subr.mxu0 0.0
  %743 = vmatpush2.msra.mxu0 0.0
  %744 = vmatprep.subr.mxu0 0.0
  %745 = vmatpush2.msra.mxu0 0.0
  %746 = vmatprep.subr.mxu0 0.0
  %747 = vmatpush2.msra.mxu0 0.0
  %748 = vmatprep.subr.mxu0 0.0
  %749 = vmatpush2.msra.mxu0 0.0
  %750 = vmatprep.subr.mxu0 0.0
  %751 = vmatpush2.msra.mxu0 0.0
  %752 = vmatprep.subr.mxu0 0.0
  %753 = vmatpush2.msra.mxu0 0.0
  %754 = vmatprep.subr.mxu0 0.0
  %755 = vmatpush2.msra.mxu0 0.0
  %756 = vmatprep.subr.mxu0 0.0
  %757 = vmatpush2.msra.mxu0 0.0
  %758 = vmatprep.subr.mxu0 0.0
  %759 = vmatpush2.msra.mxu0 0.0
  %760 = vmatprep.subr.mxu0 0.0
  %761 = vmatpush2.msra.mxu0 0.0
  %762 = vmatprep.subr.mxu0 0.0
  %763 = vmatpush2.msra.mxu0 0.0
  %764 = vmatprep.subr.mxu0 0.0
  %765 = vmatpush2.msra.mxu0 0.0
  %766 = vmatprep.subr.mxu0 0.0
  %767 = vmatpush2.msra.mxu0 0.0
  %768 = vmatprep.subr.mxu0 0.0
  %769 = vmatpush2.msra.mxu0 0.0
  %770 = vmatprep.mubr.f32.mxu0 0.0
  %771 = vmatmul.mubr.f32.gmra.mxu0 %v704
  %v772 = vpop.f32.mrf.mxu0
  %v773 = vadd.f32 0.0, %v772
  %v774 = vpop.f32.mrf.mxu0
  %775 = vdwg.mxu0
  %776 = vmatprep.subr.mxu0 0.0
  %777 = vmatpush1.msra.mxu0 0.0
  %778 = vmatprep.subr.mxu0 0.0
  %779 = vmatpush1.msra.mxu0 0.0
  %780 = vmatprep.subr.mxu0 0.0
  %781 = vmatpush1.msra.mxu0 0.0
  %782 = vmatprep.subr.mxu0 0.0
  %783 = vmatpush1.msra.mxu0 0.0
  %784 = vmatprep.subr.mxu0 0.0
  %785 = vmatpush1.msra.mxu0 0.0
  %786 = vmatprep.subr.mxu0 0.0
  %787 = vmatpush1.msra.mxu0 0.0
  %788 = vmatprep.subr.mxu0 0.0
  %789 = vmatpush1.msra.mxu0 0.0
  %790 = vmatprep.subr.mxu0 0.0
  %791 = vmatpush1.msra.mxu0 0.0
  %792 = vmatprep.subr.mxu0 0.0
  %793 = vmatpush1.msra.mxu0 0.0
  %794 = vmatprep.subr.mxu0 0.0
  %795 = vmatpush1.msra.mxu0 0.0
  %796 = vmatprep.subr.mxu0 0.0
  %797 = vmatpush1.msra.mxu0 0.0
  %798 = vmatprep.subr.mxu0 0.0
  %799 = vmatpush1.msra.mxu0 0.0
  %800 = vmatprep.subr.mxu0 0.0
  %801 = vmatpush1.msra.mxu0 0.0
  %802 = vmatprep.subr.mxu0 0.0
  %803 = vmatpush1.msra.mxu0 0.0
  %804 = vmatprep.subr.mxu0 0.0
  %805 = vmatpush1.msra.mxu0 %v674
  %806 = vmatprep.subr.mxu0 0.0
  %807 = vmatpush1.msra.mxu0 %v673
  %808 = vmatprep.subr.mxu0 0.0
  %809 = vmatpush2.msra.mxu0 0.0
  %810 = vmatprep.subr.mxu0 0.0
  %811 = vmatpush2.msra.mxu0 0.0
  %812 = vmatprep.subr.mxu0 0.0
  %813 = vmatpush2.msra.mxu0 0.0
  %814 = vmatprep.subr.mxu0 0.0
  %815 = vmatpush2.msra.mxu0 0.0
  %816 = vmatprep.subr.mxu0 0.0
  %817 = vmatpush2.msra.mxu0 0.0
  %818 = vmatprep.subr.mxu0 0.0
  %819 = vmatpush2.msra.mxu0 0.0
  %820 = vmatprep.subr.mxu0 0.0
  %821 = vmatpush2.msra.mxu0 0.0
  %822 = vmatprep.subr.mxu0 0.0
  %823 = vmatpush2.msra.mxu0 0.0
  %824 = vmatprep.subr.mxu0 0.0
  %825 = vmatpush2.msra.mxu0 0.0
  %826 = vmatprep.subr.mxu0 0.0
  %827 = vmatpush2.msra.mxu0 0.0
  %828 = vmatprep.subr.mxu0 0.0
  %829 = vmatpush2.msra.mxu0 0.0
  %830 = vmatprep.subr.mxu0 0.0
  %831 = vmatpush2.msra.mxu0 0.0
  %832 = vmatprep.subr.mxu0 0.0
  %833 = vmatpush2.msra.mxu0 0.0
  %834 = vmatprep.subr.mxu0 0.0
  %835 = vmatpush2.msra.mxu0 0.0
  %836 = vmatprep.subr.mxu0 0.0
  %837 = vmatpush2.msra.mxu0 0.0
  %838 = vmatprep.subr.mxu0 0.0
  %839 = vmatpush2.msra.mxu0 0.0
  %840 = vmatprep.mubr.f32.mxu0 0.0
  %841 = vmatmul.mubr.f32.gmra.mxu0 %v704
  %v842 = vpop.f32.mrf.mxu0
  %v843 = vadd.f32 0.0, %v842
  %v844 = vpop.f32.mrf.mxu0
  %845 = vdwg.mxu0
  %v846 = vadd.f32 %v700, %v773
  %v847 = vxor.u32 %v846, 2147483648
  %v848 = vmul.f32 %v847, 1.442695
  %v849 = vpow.pop %v848
  %v850 = vadd.f32 %v849, 1.0
  %v851 = vrcp.pop %v850
  %v852 = vmul.f32 1.0, %v851
  %v853 = vadd.f32 %v701, %v843
  %v854 = vxor.u32 %v853, 2147483648
  %v855 = vmul.f32 %v854, 1.442695
  %v856 = vpow.pop %v855
  %v857 = vadd.f32 %v856, 1.0
  %v858 = vrcp.pop %v857
  %v859 = vmul.f32 1.0, %v858
  %860 = vmatprep.subr.mxu0 0.0
  %861 = vmatpush1.msra.mxu0 0.0
  %862 = vmatprep.subr.mxu0 0.0
  %863 = vmatpush1.msra.mxu0 0.0
  %864 = vmatprep.subr.mxu0 0.0
  %865 = vmatpush1.msra.mxu0 0.0
  %866 = vmatprep.subr.mxu0 0.0
  %867 = vmatpush1.msra.mxu0 0.0
  %868 = vmatprep.subr.mxu0 0.0
  %869 = vmatpush1.msra.mxu0 0.0
  %870 = vmatprep.subr.mxu0 0.0
  %871 = vmatpush1.msra.mxu0 0.0
  %872 = vmatprep.subr.mxu0 0.0
  %873 = vmatpush1.msra.mxu0 0.0
  %874 = vmatprep.subr.mxu0 0.0
  %875 = vmatpush1.msra.mxu0 0.0
  %876 = vmatprep.subr.mxu0 0.0
  %877 = vmatpush1.msra.mxu0 0.0
  %878 = vmatprep.subr.mxu0 0.0
  %879 = vmatpush1.msra.mxu0 0.0
  %880 = vmatprep.subr.mxu0 0.0
  %881 = vmatpush1.msra.mxu0 0.0
  %882 = vmatprep.subr.mxu0 0.0
  %883 = vmatpush1.msra.mxu0 0.0
  %884 = vmatprep.subr.mxu0 0.0
  %885 = vmatpush1.msra.mxu0 0.0
  %886 = vmatprep.subr.mxu0 0.0
  %887 = vmatpush1.msra.mxu0 0.0
  %888 = vmatprep.subr.mxu0 0.0
  %889 = vmatpush1.msra.mxu0 %v677
  %890 = vmatprep.subr.mxu0 0.0
  %891 = vmatpush1.msra.mxu0 %v676
  %892 = vmatprep.subr.mxu0 0.0
  %893 = vmatpush2.msra.mxu0 0.0
  %894 = vmatprep.subr.mxu0 0.0
  %895 = vmatpush2.msra.mxu0 0.0
  %896 = vmatprep.subr.mxu0 0.0
  %897 = vmatpush2.msra.mxu0 0.0
  %898 = vmatprep.subr.mxu0 0.0
  %899 = vmatpush2.msra.mxu0 0.0
  %900 = vmatprep.subr.mxu0 0.0
  %901 = vmatpush2.msra.mxu0 0.0
  %902 = vmatprep.subr.mxu0 0.0
  %903 = vmatpush2.msra.mxu0 0.0
  %904 = vmatprep.subr.mxu0 0.0
  %905 = vmatpush2.msra.mxu0 0.0
  %906 = vmatprep.subr.mxu0 0.0
  %907 = vmatpush2.msra.mxu0 0.0
  %908 = vmatprep.subr.mxu0 0.0
  %909 = vmatpush2.msra.mxu0 0.0
  %910 = vmatprep.subr.mxu0 0.0
  %911 = vmatpush2.msra.mxu0 0.0
  %912 = vmatprep.subr.mxu0 0.0
  %913 = vmatpush2.msra.mxu0 0.0
  %914 = vmatprep.subr.mxu0 0.0
  %915 = vmatpush2.msra.mxu0 0.0
  %916 = vmatprep.subr.mxu0 0.0
  %917 = vmatpush2.msra.mxu0 0.0
  %918 = vmatprep.subr.mxu0 0.0
  %919 = vmatpush2.msra.mxu0 0.0
  %920 = vmatprep.subr.mxu0 0.0
  %921 = vmatpush2.msra.mxu0 0.0
  %922 = vmatprep.subr.mxu0 0.0
  %923 = vmatpush2.msra.mxu0 0.0
  %924 = vmatprep.mubr.f32.mxu0 0.0
  %925 = vmatmul.mubr.f32.gmra.mxu0 %v704
  %v926 = vpop.f32.mrf.mxu0
  %v927 = vadd.f32 %v691, %v926
  %v928 = vpop.f32.mrf.mxu0
  %929 = vdwg.mxu0
  %v930 = vmul.f32 %v852, %v927
  %v931 = vadd.f32 %v702, %v930
  %v932 = vtanh.pop %v931
  %v933 = vsub.f32 1.0, %v859
  %v934 = vmul.f32 %v933, %v932
  %v935 = vmul.f32 %v859, 0.0
  %v936 = vadd.f32 %v934, %v935
  %s937 = scalar_lea.vmem [#allocation5], 56
  %v938 = vld [vmem:[%s937] sm:$0xff]
  %s939 = scalar_lea.vmem [#allocation6], 56
  %v940 = vld [vmem:[%s939] sm:$0xff]
  %s941 = scalar_lea.vmem [#allocation7], 56
  %v942 = vld [vmem:[%s941] sm:$0xff]
  %943 = vmatprep.subr.mxu0 0.0
  %944 = vmatpush1.msra.mxu0 0.0
  %945 = vmatprep.subr.mxu0 0.0
  %946 = vmatpush1.msra.mxu0 0.0
  %947 = vmatprep.subr.mxu0 0.0
  %948 = vmatpush1.msra.mxu0 0.0
  %949 = vmatprep.subr.mxu0 0.0
  %950 = vmatpush1.msra.mxu0 0.0
  %951 = vmatprep.subr.mxu0 0.0
  %952 = vmatpush1.msra.mxu0 0.0
  %953 = vmatprep.subr.mxu0 0.0
  %954 = vmatpush1.msra.mxu0 0.0
  %955 = vmatprep.subr.mxu0 0.0
  %956 = vmatpush1.msra.mxu0 0.0
  %957 = vmatprep.subr.mxu0 0.0
  %958 = vmatpush1.msra.mxu0 0.0
  %959 = vmatprep.subr.mxu0 0.0
  %960 = vmatpush1.msra.mxu0 0.0
  %961 = vmatprep.subr.mxu0 0.0
  %962 = vmatpush1.msra.mxu0 0.0
  %963 = vmatprep.subr.mxu0 0.0
  %964 = vmatpush1.msra.mxu0 0.0
  %965 = vmatprep.subr.mxu0 0.0
  %966 = vmatpush1.msra.mxu0 0.0
  %967 = vmatprep.subr.mxu0 0.0
  %968 = vmatpush1.msra.mxu0 0.0
  %969 = vmatprep.subr.mxu0 0.0
  %970 = vmatpush1.msra.mxu0 0.0
  %971 = vmatprep.subr.mxu0 0.0
  %972 = vmatpush1.msra.mxu0 %v679
  %973 = vmatprep.subr.mxu0 0.0
  %974 = vmatpush1.msra.mxu0 %v678
  %975 = vmatprep.subr.mxu0 0.0
  %976 = vmatpush2.msra.mxu0 0.0
  %977 = vmatprep.subr.mxu0 0.0
  %978 = vmatpush2.msra.mxu0 0.0
  %979 = vmatprep.subr.mxu0 0.0
  %980 = vmatpush2.msra.mxu0 0.0
  %981 = vmatprep.subr.mxu0 0.0
  %982 = vmatpush2.msra.mxu0 0.0
  %983 = vmatprep.subr.mxu0 0.0
  %984 = vmatpush2.msra.mxu0 0.0
  %985 = vmatprep.subr.mxu0 0.0
  %986 = vmatpush2.msra.mxu0 0.0
  %987 = vmatprep.subr.mxu0 0.0
  %988 = vmatpush2.msra.mxu0 0.0
  %989 = vmatprep.subr.mxu0 0.0
  %990 = vmatpush2.msra.mxu0 0.0
  %991 = vmatprep.subr.mxu0 0.0
  %992 = vmatpush2.msra.mxu0 0.0
  %993 = vmatprep.subr.mxu0 0.0
  %994 = vmatpush2.msra.mxu0 0.0
  %995 = vmatprep.subr.mxu0 0.0
  %996 = vmatpush2.msra.mxu0 0.0
  %997 = vmatprep.subr.mxu0 0.0
  %998 = vmatpush2.msra.mxu0 0.0
  %999 = vmatprep.subr.mxu0 0.0
  %1000 = vmatpush2.msra.mxu0 0.0
  %1001 = vmatprep.subr.mxu0 0.0
  %1002 = vmatpush2.msra.mxu0 0.0
  %1003 = vmatprep.subr.mxu0 0.0
  %1004 = vmatpush2.msra.mxu0 0.0
  %1005 = vmatprep.subr.mxu0 0.0
  %1006 = vmatpush2.msra.mxu0 0.0
  %1007 = vmatprep.mubr.f32.mxu0 0.0
  %1008 = vmatmul.mubr.f32.gmra.mxu0 %v704
  %v1009 = vpop.f32.mrf.mxu0
  %v1010 = vadd.f32 0.0, %v1009
  %v1011 = vpop.f32.mrf.mxu0
  %1012 = vdwg.mxu0
  %1013 = vmatprep.subr.mxu0 0.0
  %1014 = vmatpush1.msra.mxu0 0.0
  %1015 = vmatprep.subr.mxu0 0.0
  %1016 = vmatpush1.msra.mxu0 0.0
  %1017 = vmatprep.subr.mxu0 0.0
  %1018 = vmatpush1.msra.mxu0 0.0
  %1019 = vmatprep.subr.mxu0 0.0
  %1020 = vmatpush1.msra.mxu0 0.0
  %1021 = vmatprep.subr.mxu0 0.0
  %1022 = vmatpush1.msra.mxu0 0.0
  %1023 = vmatprep.subr.mxu0 0.0
  %1024 = vmatpush1.msra.mxu0 0.0
  %1025 = vmatprep.subr.mxu0 0.0
  %1026 = vmatpush1.msra.mxu0 0.0
  %1027 = vmatprep.subr.mxu0 0.0
  %1028 = vmatpush1.msra.mxu0 0.0
  %1029 = vmatprep.subr.mxu0 0.0
  %1030 = vmatpush1.msra.mxu0 0.0
  %1031 = vmatprep.subr.mxu0 0.0
  %1032 = vmatpush1.msra.mxu0 0.0
  %1033 = vmatprep.subr.mxu0 0.0
  %1034 = vmatpush1.msra.mxu0 0.0
  %1035 = vmatprep.subr.mxu0 0.0
  %1036 = vmatpush1.msra.mxu0 0.0
  %1037 = vmatprep.subr.mxu0 0.0
  %1038 = vmatpush1.msra.mxu0 0.0
  %1039 = vmatprep.subr.mxu0 0.0
  %1040 = vmatpush1.msra.mxu0 0.0
  %1041 = vmatprep.subr.mxu0 0.0
  %1042 = vmatpush1.msra.mxu0 %v682
  %1043 = vmatprep.subr.mxu0 0.0
  %1044 = vmatpush1.msra.mxu0 %v681
  %1045 = vmatprep.subr.mxu0 0.0
  %1046 = vmatpush2.msra.mxu0 0.0
  %1047 = vmatprep.subr.mxu0 0.0
  %1048 = vmatpush2.msra.mxu0 0.0
  %1049 = vmatprep.subr.mxu0 0.0
  %1050 = vmatpush2.msra.mxu0 0.0
  %1051 = vmatprep.subr.mxu0 0.0
  %1052 = vmatpush2.msra.mxu0 0.0
  %1053 = vmatprep.subr.mxu0 0.0
  %1054 = vmatpush2.msra.mxu0 0.0
  %1055 = vmatprep.subr.mxu0 0.0
  %1056 = vmatpush2.msra.mxu0 0.0
  %1057 = vmatprep.subr.mxu0 0.0
  %1058 = vmatpush2.msra.mxu0 0.0
  %1059 = vmatprep.subr.mxu0 0.0
  %1060 = vmatpush2.msra.mxu0 0.0
  %1061 = vmatprep.subr.mxu0 0.0
  %1062 = vmatpush2.msra.mxu0 0.0
  %1063 = vmatprep.subr.mxu0 0.0
  %1064 = vmatpush2.msra.mxu0 0.0
  %1065 = vmatprep.subr.mxu0 0.0
  %1066 = vmatpush2.msra.mxu0 0.0
  %1067 = vmatprep.subr.mxu0 0.0
  %1068 = vmatpush2.msra.mxu0 0.0
  %1069 = vmatprep.subr.mxu0 0.0
  %1070 = vmatpush2.msra.mxu0 0.0
  %1071 = vmatprep.subr.mxu0 0.0
  %1072 = vmatpush2.msra.mxu0 0.0
  %1073 = vmatprep.subr.mxu0 0.0
  %1074 = vmatpush2.msra.mxu0 0.0
  %1075 = vmatprep.subr.mxu0 0.0
  %1076 = vmatpush2.msra.mxu0 0.0
  %1077 = vmatprep.mubr.f32.mxu0 0.0
  %1078 = vmatmul.mubr.f32.gmra.mxu0 %v704
  %v1079 = vpop.f32.mrf.mxu0
  %v1080 = vadd.f32 0.0, %v1079
  %v1081 = vpop.f32.mrf.mxu0
  %1082 = vdwg.mxu0
  %v1083 = vadd.f32 %v938, %v1010
  %v1084 = vxor.u32 %v1083, 2147483648
  %v1085 = vmul.f32 %v1084, 1.442695
  %v1086 = vpow.pop %v1085
  %v1087 = vadd.f32 %v1086, 1.0
  %v1088 = vrcp.pop %v1087
  %v1089 = vmul.f32 1.0, %v1088
  %v1090 = vadd.f32 %v940, %v1080
  %v1091 = vxor.u32 %v1090, 2147483648
  %v1092 = vmul.f32 %v1091, 1.442695
  %v1093 = vpow.pop %v1092
  %v1094 = vadd.f32 %v1093, 1.0
  %v1095 = vrcp.pop %v1094
  %v1096 = vmul.f32 1.0, %v1095
  %1097 = vmatprep.subr.mxu0 0.0
  %1098 = vmatpush1.msra.mxu0 0.0
  %1099 = vmatprep.subr.mxu0 0.0
  %1100 = vmatpush1.msra.mxu0 0.0
  %1101 = vmatprep.subr.mxu0 0.0
  %1102 = vmatpush1.msra.mxu0 0.0
  %1103 = vmatprep.subr.mxu0 0.0
  %1104 = vmatpush1.msra.mxu0 0.0
  %1105 = vmatprep.subr.mxu0 0.0
  %1106 = vmatpush1.msra.mxu0 0.0
  %1107 = vmatprep.subr.mxu0 0.0
  %1108 = vmatpush1.msra.mxu0 0.0
  %1109 = vmatprep.subr.mxu0 0.0
  %1110 = vmatpush1.msra.mxu0 0.0
  %1111 = vmatprep.subr.mxu0 0.0
  %1112 = vmatpush1.msra.mxu0 0.0
  %1113 = vmatprep.subr.mxu0 0.0
  %1114 = vmatpush1.msra.mxu0 0.0
  %1115 = vmatprep.subr.mxu0 0.0
  %1116 = vmatpush1.msra.mxu0 0.0
  %1117 = vmatprep.subr.mxu0 0.0
  %1118 = vmatpush1.msra.mxu0 0.0
  %1119 = vmatprep.subr.mxu0 0.0
  %1120 = vmatpush1.msra.mxu0 0.0
  %1121 = vmatprep.subr.mxu0 0.0
  %1122 = vmatpush1.msra.mxu0 0.0
  %1123 = vmatprep.subr.mxu0 0.0
  %1124 = vmatpush1.msra.mxu0 0.0
  %1125 = vmatprep.subr.mxu0 0.0
  %1126 = vmatpush1.msra.mxu0 %v685
  %1127 = vmatprep.subr.mxu0 0.0
  %1128 = vmatpush1.msra.mxu0 %v684
  %1129 = vmatprep.subr.mxu0 0.0
  %1130 = vmatpush2.msra.mxu0 0.0
  %1131 = vmatprep.subr.mxu0 0.0
  %1132 = vmatpush2.msra.mxu0 0.0
  %1133 = vmatprep.subr.mxu0 0.0
  %1134 = vmatpush2.msra.mxu0 0.0
  %1135 = vmatprep.subr.mxu0 0.0
  %1136 = vmatpush2.msra.mxu0 0.0
  %1137 = vmatprep.subr.mxu0 0.0
  %1138 = vmatpush2.msra.mxu0 0.0
  %1139 = vmatprep.subr.mxu0 0.0
  %1140 = vmatpush2.msra.mxu0 0.0
  %1141 = vmatprep.subr.mxu0 0.0
  %1142 = vmatpush2.msra.mxu0 0.0
  %1143 = vmatprep.subr.mxu0 0.0
  %1144 = vmatpush2.msra.mxu0 0.0
  %1145 = vmatprep.subr.mxu0 0.0
  %1146 = vmatpush2.msra.mxu0 0.0
  %1147 = vmatprep.subr.mxu0 0.0
  %1148 = vmatpush2.msra.mxu0 0.0
  %1149 = vmatprep.subr.mxu0 0.0
  %1150 = vmatpush2.msra.mxu0 0.0
  %1151 = vmatprep.subr.mxu0 0.0
  %1152 = vmatpush2.msra.mxu0 0.0
  %1153 = vmatprep.subr.mxu0 0.0
  %1154 = vmatpush2.msra.mxu0 0.0
  %1155 = vmatprep.subr.mxu0 0.0
  %1156 = vmatpush2.msra.mxu0 0.0
  %1157 = vmatprep.subr.mxu0 0.0
  %1158 = vmatpush2.msra.mxu0 0.0
  %1159 = vmatprep.subr.mxu0 0.0
  %1160 = vmatpush2.msra.mxu0 0.0
  %1161 = vmatprep.mubr.f32.mxu0 0.0
  %1162 = vmatmul.mubr.f32.gmra.mxu0 %v704
  %v1163 = vpop.f32.mrf.mxu0
  %v1164 = vadd.f32 %v698, %v1163
  %v1165 = vpop.f32.mrf.mxu0
  %1166 = vdwg.mxu0
  %v1167 = vmul.f32 %v1089, %v1164
  %v1168 = vadd.f32 %v942, %v1167
  %v1169 = vtanh.pop %v1168
  %v1170 = vsub.f32 1.0, %v1096
  %v1171 = vmul.f32 %v1170, %v1169
  %v1172 = vmul.f32 %v1096, 0.0
  %v1173 = vadd.f32 %v1171, %v1172
  %1174 = vst.msk [vmem:[#allocation8] sm:$0xff] %vm173, %v936
  %s1175 = scalar_lea.vmem [#allocation9], 56
  %1176 = vst.msk [vmem:[%s1175] sm:$0xff] %vm173, %v1173
  %s1177 = scalar_lea.vmem [#allocation2], 8
  %v1178 = vld [vmem:[%s1177] sm:$0xff]
  %s1179 = scalar_lea.vmem [#allocation3], 8
  %v1180 = vld [vmem:[%s1179] sm:$0xff]
  %s1181 = scalar_lea.vmem [#allocation4], 8
  %v1182 = vld [vmem:[%s1181] sm:$0xff]
  %v1184 = vsel %vm173, %v936, 0
  %1186 = vmatprep.subr.mxu0 0.0
  %1187 = vmatpush1.msra.mxu0 0.0
  %1188 = vmatprep.subr.mxu0 0.0
  %1189 = vmatpush1.msra.mxu0 0.0
  %1190 = vmatprep.subr.mxu0 0.0
  %1191 = vmatpush1.msra.mxu0 0.0
  %1192 = vmatprep.subr.mxu0 0.0
  %1193 = vmatpush1.msra.mxu0 0.0
  %1194 = vmatprep.subr.mxu0 0.0
  %1195 = vmatpush1.msra.mxu0 0.0
  %1196 = vmatprep.subr.mxu0 0.0
  %1197 = vmatpush1.msra.mxu0 0.0
  %1198 = vmatprep.subr.mxu0 0.0
  %1199 = vmatpush1.msra.mxu0 0.0
  %1200 = vmatprep.subr.mxu0 0.0
  %1201 = vmatpush1.msra.mxu0 0.0
  %1202 = vmatprep.subr.mxu0 0.0
  %1203 = vmatpush1.msra.mxu0 0.0
  %1204 = vmatprep.subr.mxu0 0.0
  %1205 = vmatpush1.msra.mxu0 0.0
  %1206 = vmatprep.subr.mxu0 0.0
  %1207 = vmatpush1.msra.mxu0 0.0
  %1208 = vmatprep.subr.mxu0 0.0
  %1209 = vmatpush1.msra.mxu0 0.0
  %1210 = vmatprep.subr.mxu0 0.0
  %1211 = vmatpush1.msra.mxu0 0.0
  %1212 = vmatprep.subr.mxu0 0.0
  %1213 = vmatpush1.msra.mxu0 0.0
  %1214 = vmatprep.subr.mxu0 0.0
  %1215 = vmatpush1.msra.mxu0 %v671
  %1216 = vmatprep.subr.mxu0 0.0
  %1217 = vmatpush1.msra.mxu0 %v670
  %1218 = vmatprep.subr.mxu0 0.0
  %1219 = vmatpush2.msra.mxu0 0.0
  %1220 = vmatprep.subr.mxu0 0.0
  %1221 = vmatpush2.msra.mxu0 0.0
  %1222 = vmatprep.subr.mxu0 0.0
  %1223 = vmatpush2.msra.mxu0 0.0
  %1224 = vmatprep.subr.mxu0 0.0
  %1225 = vmatpush2.msra.mxu0 0.0
  %1226 = vmatprep.subr.mxu0 0.0
  %1227 = vmatpush2.msra.mxu0 0.0
  %1228 = vmatprep.subr.mxu0 0.0
  %1229 = vmatpush2.msra.mxu0 0.0
  %1230 = vmatprep.subr.mxu0 0.0
  %1231 = vmatpush2.msra.mxu0 0.0
  %1232 = vmatprep.subr.mxu0 0.0
  %1233 = vmatpush2.msra.mxu0 0.0
  %1234 = vmatprep.subr.mxu0 0.0
  %1235 = vmatpush2.msra.mxu0 0.0
  %1236 = vmatprep.subr.mxu0 0.0
  %1237 = vmatpush2.msra.mxu0 0.0
  %1238 = vmatprep.subr.mxu0 0.0
  %1239 = vmatpush2.msra.mxu0 0.0
  %1240 = vmatprep.subr.mxu0 0.0
  %1241 = vmatpush2.msra.mxu0 0.0
  %1242 = vmatprep.subr.mxu0 0.0
  %1243 = vmatpush2.msra.mxu0 0.0
  %1244 = vmatprep.subr.mxu0 0.0
  %1245 = vmatpush2.msra.mxu0 0.0
  %1246 = vmatprep.subr.mxu0 0.0
  %1247 = vmatpush2.msra.mxu0 0.0
  %1248 = vmatprep.subr.mxu0 0.0
  %1249 = vmatpush2.msra.mxu0 0.0
  %1250 = vmatprep.mubr.f32.mxu0 0.0
  %1251 = vmatmul.mubr.f32.gmra.mxu0 %v1184
  %v1252 = vpop.f32.mrf.mxu0
  %v1253 = vadd.f32 0.0, %v1252
  %v1254 = vpop.f32.mrf.mxu0
  %1255 = vdwg.mxu0
  %1256 = vmatprep.subr.mxu0 0.0
  %1257 = vmatpush1.msra.mxu0 0.0
  %1258 = vmatprep.subr.mxu0 0.0
  %1259 = vmatpush1.msra.mxu0 0.0
  %1260 = vmatprep.subr.mxu0 0.0
  %1261 = vmatpush1.msra.mxu0 0.0
  %1262 = vmatprep.subr.mxu0 0.0
  %1263 = vmatpush1.msra.mxu0 0.0
  %1264 = vmatprep.subr.mxu0 0.0
  %1265 = vmatpush1.msra.mxu0 0.0
  %1266 = vmatprep.subr.mxu0 0.0
  %1267 = vmatpush1.msra.mxu0 0.0
  %1268 = vmatprep.subr.mxu0 0.0
  %1269 = vmatpush1.msra.mxu0 0.0
  %1270 = vmatprep.subr.mxu0 0.0
  %1271 = vmatpush1.msra.mxu0 0.0
  %1272 = vmatprep.subr.mxu0 0.0
  %1273 = vmatpush1.msra.mxu0 0.0
  %1274 = vmatprep.subr.mxu0 0.0
  %1275 = vmatpush1.msra.mxu0 0.0
  %1276 = vmatprep.subr.mxu0 0.0
  %1277 = vmatpush1.msra.mxu0 0.0
  %1278 = vmatprep.subr.mxu0 0.0
  %1279 = vmatpush1.msra.mxu0 0.0
  %1280 = vmatprep.subr.mxu0 0.0
  %1281 = vmatpush1.msra.mxu0 0.0
  %1282 = vmatprep.subr.mxu0 0.0
  %1283 = vmatpush1.msra.mxu0 0.0
  %1284 = vmatprep.subr.mxu0 0.0
  %1285 = vmatpush1.msra.mxu0 %v674
  %1286 = vmatprep.subr.mxu0 0.0
  %1287 = vmatpush1.msra.mxu0 %v673
  %1288 = vmatprep.subr.mxu0 0.0
  %1289 = vmatpush2.msra.mxu0 0.0
  %1290 = vmatprep.subr.mxu0 0.0
  %1291 = vmatpush2.msra.mxu0 0.0
  %1292 = vmatprep.subr.mxu0 0.0
  %1293 = vmatpush2.msra.mxu0 0.0
  %1294 = vmatprep.subr.mxu0 0.0
  %1295 = vmatpush2.msra.mxu0 0.0
  %1296 = vmatprep.subr.mxu0 0.0
  %1297 = vmatpush2.msra.mxu0 0.0
  %1298 = vmatprep.subr.mxu0 0.0
  %1299 = vmatpush2.msra.mxu0 0.0
  %1300 = vmatprep.subr.mxu0 0.0
  %1301 = vmatpush2.msra.mxu0 0.0
  %1302 = vmatprep.subr.mxu0 0.0
  %1303 = vmatpush2.msra.mxu0 0.0
  %1304 = vmatprep.subr.mxu0 0.0
  %1305 = vmatpush2.msra.mxu0 0.0
  %1306 = vmatprep.subr.mxu0 0.0
  %1307 = vmatpush2.msra.mxu0 0.0
  %1308 = vmatprep.subr.mxu0 0.0
  %1309 = vmatpush2.msra.mxu0 0.0
  %1310 = vmatprep.subr.mxu0 0.0
  %1311 = vmatpush2.msra.mxu0 0.0
  %1312 = vmatprep.subr.mxu0 0.0
  %1313 = vmatpush2.msra.mxu0 0.0
  %1314 = vmatprep.subr.mxu0 0.0
  %1315 = vmatpush2.msra.mxu0 0.0
  %1316 = vmatprep.subr.mxu0 0.0
  %1317 = vmatpush2.msra.mxu0 0.0
  %1318 = vmatprep.subr.mxu0 0.0
  %1319 = vmatpush2.msra.mxu0 0.0
  %1320 = vmatprep.mubr.f32.mxu0 0.0
  %1321 = vmatmul.mubr.f32.gmra.mxu0 %v1184
  %v1322 = vpop.f32.mrf.mxu0
  %v1323 = vadd.f32 0.0, %v1322
  %v1324 = vpop.f32.mrf.mxu0
  %1325 = vdwg.mxu0
  %v1326 = vadd.f32 %v1178, %v1253
  %v1327 = vxor.u32 %v1326, 2147483648
  %v1328 = vmul.f32 %v1327, 1.442695
  %v1329 = vpow.pop %v1328
  %v1330 = vadd.f32 %v1329, 1.0
  %v1331 = vrcp.pop %v1330
  %v1332 = vmul.f32 1.0, %v1331
  %v1333 = vadd.f32 %v1180, %v1323
  %v1334 = vxor.u32 %v1333, 2147483648
  %v1335 = vmul.f32 %v1334, 1.442695
  %v1336 = vpow.pop %v1335
  %v1337 = vadd.f32 %v1336, 1.0
  %v1338 = vrcp.pop %v1337
  %v1339 = vmul.f32 1.0, %v1338
  %1340 = vmatprep.subr.mxu0 0.0
  %1341 = vmatpush1.msra.mxu0 0.0
  %1342 = vmatprep.subr.mxu0 0.0
  %1343 = vmatpush1.msra.mxu0 0.0
  %1344 = vmatprep.subr.mxu0 0.0
  %1345 = vmatpush1.msra.mxu0 0.0
  %1346 = vmatprep.subr.mxu0 0.0
  %1347 = vmatpush1.msra.mxu0 0.0
  %1348 = vmatprep.subr.mxu0 0.0
  %1349 = vmatpush1.msra.mxu0 0.0
  %1350 = vmatprep.subr.mxu0 0.0
  %1351 = vmatpush1.msra.mxu0 0.0
  %1352 = vmatprep.subr.mxu0 0.0
  %1353 = vmatpush1.msra.mxu0 0.0
  %1354 = vmatprep.subr.mxu0 0.0
  %1355 = vmatpush1.msra.mxu0 0.0
  %1356 = vmatprep.subr.mxu0 0.0
  %1357 = vmatpush1.msra.mxu0 0.0
  %1358 = vmatprep.subr.mxu0 0.0
  %1359 = vmatpush1.msra.mxu0 0.0
  %1360 = vmatprep.subr.mxu0 0.0
  %1361 = vmatpush1.msra.mxu0 0.0
  %1362 = vmatprep.subr.mxu0 0.0
  %1363 = vmatpush1.msra.mxu0 0.0
  %1364 = vmatprep.subr.mxu0 0.0
  %1365 = vmatpush1.msra.mxu0 0.0
  %1366 = vmatprep.subr.mxu0 0.0
  %1367 = vmatpush1.msra.mxu0 0.0
  %1368 = vmatprep.subr.mxu0 0.0
  %1369 = vmatpush1.msra.mxu0 %v677
  %1370 = vmatprep.subr.mxu0 0.0
  %1371 = vmatpush1.msra.mxu0 %v676
  %1372 = vmatprep.subr.mxu0 0.0
  %1373 = vmatpush2.msra.mxu0 0.0
  %1374 = vmatprep.subr.mxu0 0.0
  %1375 = vmatpush2.msra.mxu0 0.0
  %1376 = vmatprep.subr.mxu0 0.0
  %1377 = vmatpush2.msra.mxu0 0.0
  %1378 = vmatprep.subr.mxu0 0.0
  %1379 = vmatpush2.msra.mxu0 0.0
  %1380 = vmatprep.subr.mxu0 0.0
  %1381 = vmatpush2.msra.mxu0 0.0
  %1382 = vmatprep.subr.mxu0 0.0
  %1383 = vmatpush2.msra.mxu0 0.0
  %1384 = vmatprep.subr.mxu0 0.0
  %1385 = vmatpush2.msra.mxu0 0.0
  %1386 = vmatprep.subr.mxu0 0.0
  %1387 = vmatpush2.msra.mxu0 0.0
  %1388 = vmatprep.subr.mxu0 0.0
  %1389 = vmatpush2.msra.mxu0 0.0
  %1390 = vmatprep.subr.mxu0 0.0
  %1391 = vmatpush2.msra.mxu0 0.0
  %1392 = vmatprep.subr.mxu0 0.0
  %1393 = vmatpush2.msra.mxu0 0.0
  %1394 = vmatprep.subr.mxu0 0.0
  %1395 = vmatpush2.msra.mxu0 0.0
  %1396 = vmatprep.subr.mxu0 0.0
  %1397 = vmatpush2.msra.mxu0 0.0
  %1398 = vmatprep.subr.mxu0 0.0
  %1399 = vmatpush2.msra.mxu0 0.0
  %1400 = vmatprep.subr.mxu0 0.0
  %1401 = vmatpush2.msra.mxu0 0.0
  %1402 = vmatprep.subr.mxu0 0.0
  %1403 = vmatpush2.msra.mxu0 0.0
  %1404 = vmatprep.mubr.f32.mxu0 0.0
  %1405 = vmatmul.mubr.f32.gmra.mxu0 %v1184
  %v1406 = vpop.f32.mrf.mxu0
  %v1407 = vadd.f32 %v691, %v1406
  %v1408 = vpop.f32.mrf.mxu0
  %1409 = vdwg.mxu0
  %v1410 = vmul.f32 %v1332, %v1407
  %v1411 = vadd.f32 %v1182, %v1410
  %v1412 = vtanh.pop %v1411
  %v1413 = vsub.f32 1.0, %v1339
  %v1414 = vmul.f32 %v1413, %v1412
  %v1415 = vmul.f32 %v1339, %v936
  %v1416 = vadd.f32 %v1414, %v1415
  %s1417 = scalar_lea.vmem [#allocation5], 48
  %v1418 = vld [vmem:[%s1417] sm:$0xff]
  %s1419 = scalar_lea.vmem [#allocation6], 48
  %v1420 = vld [vmem:[%s1419] sm:$0xff]
  %s1421 = scalar_lea.vmem [#allocation7], 48
  %v1422 = vld [vmem:[%s1421] sm:$0xff]
  %v1424 = vsel %vm173, %v1173, 0
  %1426 = vmatprep.subr.mxu0 0.0
  %1427 = vmatpush1.msra.mxu0 0.0
  %1428 = vmatprep.subr.mxu0 0.0
  %1429 = vmatpush1.msra.mxu0 0.0
  %1430 = vmatprep.subr.mxu0 0.0
  %1431 = vmatpush1.msra.mxu0 0.0
  %1432 = vmatprep.subr.mxu0 0.0
  %1433 = vmatpush1.msra.mxu0 0.0
  %1434 = vmatprep.subr.mxu0 0.0
  %1435 = vmatpush1.msra.mxu0 0.0
  %1436 = vmatprep.subr.mxu0 0.0
  %1437 = vmatpush1.msra.mxu0 0.0
  %1438 = vmatprep.subr.mxu0 0.0
  %1439 = vmatpush1.msra.mxu0 0.0
  %1440 = vmatprep.subr.mxu0 0.0
  %1441 = vmatpush1.msra.mxu0 0.0
  %1442 = vmatprep.subr.mxu0 0.0
  %1443 = vmatpush1.msra.mxu0 0.0
  %1444 = vmatprep.subr.mxu0 0.0
  %1445 = vmatpush1.msra.mxu0 0.0
  %1446 = vmatprep.subr.mxu0 0.0
  %1447 = vmatpush1.msra.mxu0 0.0
  %1448 = vmatprep.subr.mxu0 0.0
  %1449 = vmatpush1.msra.mxu0 0.0
  %1450 = vmatprep.subr.mxu0 0.0
  %1451 = vmatpush1.msra.mxu0 0.0
  %1452 = vmatprep.subr.mxu0 0.0
  %1453 = vmatpush1.msra.mxu0 0.0
  %1454 = vmatprep.subr.mxu0 0.0
  %1455 = vmatpush1.msra.mxu0 %v679
  %1456 = vmatprep.subr.mxu0 0.0
  %1457 = vmatpush1.msra.mxu0 %v678
  %1458 = vmatprep.subr.mxu0 0.0
  %1459 = vmatpush2.msra.mxu0 0.0
  %1460 = vmatprep.subr.mxu0 0.0
  %1461 = vmatpush2.msra.mxu0 0.0
  %1462 = vmatprep.subr.mxu0 0.0
  %1463 = vmatpush2.msra.mxu0 0.0
  %1464 = vmatprep.subr.mxu0 0.0
  %1465 = vmatpush2.msra.mxu0 0.0
  %1466 = vmatprep.subr.mxu0 0.0
  %1467 = vmatpush2.msra.mxu0 0.0
  %1468 = vmatprep.subr.mxu0 0.0
  %1469 = vmatpush2.msra.mxu0 0.0
  %1470 = vmatprep.subr.mxu0 0.0
  %1471 = vmatpush2.msra.mxu0 0.0
  %1472 = vmatprep.subr.mxu0 0.0
  %1473 = vmatpush2.msra.mxu0 0.0
  %1474 = vmatprep.subr.mxu0 0.0
  %1475 = vmatpush2.msra.mxu0 0.0
  %1476 = vmatprep.subr.mxu0 0.0
  %1477 = vmatpush2.msra.mxu0 0.0
  %1478 = vmatprep.subr.mxu0 0.0
  %1479 = vmatpush2.msra.mxu0 0.0
  %1480 = vmatprep.subr.mxu0 0.0
  %1481 = vmatpush2.msra.mxu0 0.0
  %1482 = vmatprep.subr.mxu0 0.0
  %1483 = vmatpush2.msra.mxu0 0.0
  %1484 = vmatprep.subr.mxu0 0.0
  %1485 = vmatpush2.msra.mxu0 0.0
  %1486 = vmatprep.subr.mxu0 0.0
  %1487 = vmatpush2.msra.mxu0 0.0
  %1488 = vmatprep.subr.mxu0 0.0
  %1489 = vmatpush2.msra.mxu0 0.0
  %1490 = vmatprep.mubr.f32.mxu0 0.0
  %1491 = vmatmul.mubr.f32.gmra.mxu0 %v1424
  %v1492 = vpop.f32.mrf.mxu0
  %v1493 = vadd.f32 0.0, %v1492
  %v1494 = vpop.f32.mrf.mxu0
  %1495 = vdwg.mxu0
  %1496 = vmatprep.subr.mxu0 0.0
  %1497 = vmatpush1.msra.mxu0 0.0
  %1498 = vmatprep.subr.mxu0 0.0
  %1499 = vmatpush1.msra.mxu0 0.0
  %1500 = vmatprep.subr.mxu0 0.0
  %1501 = vmatpush1.msra.mxu0 0.0
  %1502 = vmatprep.subr.mxu0 0.0
  %1503 = vmatpush1.msra.mxu0 0.0
  %1504 = vmatprep.subr.mxu0 0.0
  %1505 = vmatpush1.msra.mxu0 0.0
  %1506 = vmatprep.subr.mxu0 0.0
  %1507 = vmatpush1.msra.mxu0 0.0
  %1508 = vmatprep.subr.mxu0 0.0
  %1509 = vmatpush1.msra.mxu0 0.0
  %1510 = vmatprep.subr.mxu0 0.0
  %1511 = vmatpush1.msra.mxu0 0.0
  %1512 = vmatprep.subr.mxu0 0.0
  %1513 = vmatpush1.msra.mxu0 0.0
  %1514 = vmatprep.subr.mxu0 0.0
  %1515 = vmatpush1.msra.mxu0 0.0
  %1516 = vmatprep.subr.mxu0 0.0
  %1517 = vmatpush1.msra.mxu0 0.0
  %1518 = vmatprep.subr.mxu0 0.0
  %1519 = vmatpush1.msra.mxu0 0.0
  %1520 = vmatprep.subr.mxu0 0.0
  %1521 = vmatpush1.msra.mxu0 0.0
  %1522 = vmatprep.subr.mxu0 0.0
  %1523 = vmatpush1.msra.mxu0 0.0
  %1524 = vmatprep.subr.mxu0 0.0
  %1525 = vmatpush1.msra.mxu0 %v682
  %1526 = vmatprep.subr.mxu0 0.0
  %1527 = vmatpush1.msra.mxu0 %v681
  %1528 = vmatprep.subr.mxu0 0.0
  %1529 = vmatpush2.msra.mxu0 0.0
  %1530 = vmatprep.subr.mxu0 0.0
  %1531 = vmatpush2.msra.mxu0 0.0
  %1532 = vmatprep.subr.mxu0 0.0
  %1533 = vmatpush2.msra.mxu0 0.0
  %1534 = vmatprep.subr.mxu0 0.0
  %1535 = vmatpush2.msra.mxu0 0.0
  %1536 = vmatprep.subr.mxu0 0.0
  %1537 = vmatpush2.msra.mxu0 0.0
  %1538 = vmatprep.subr.mxu0 0.0
  %1539 = vmatpush2.msra.mxu0 0.0
  %1540 = vmatprep.subr.mxu0 0.0
  %1541 = vmatpush2.msra.mxu0 0.0
  %1542 = vmatprep.subr.mxu0 0.0
  %1543 = vmatpush2.msra.mxu0 0.0
  %1544 = vmatprep.subr.mxu0 0.0
  %1545 = vmatpush2.msra.mxu0 0.0
  %1546 = vmatprep.subr.mxu0 0.0
  %1547 = vmatpush2.msra.mxu0 0.0
  %1548 = vmatprep.subr.mxu0 0.0
  %1549 = vmatpush2.msra.mxu0 0.0
  %1550 = vmatprep.subr.mxu0 0.0
  %1551 = vmatpush2.msra.mxu0 0.0
  %1552 = vmatprep.subr.mxu0 0.0
  %1553 = vmatpush2.msra.mxu0 0.0
  %1554 = vmatprep.subr.mxu0 0.0
  %1555 = vmatpush2.msra.mxu0 0.0
  %1556 = vmatprep.subr.mxu0 0.0
  %1557 = vmatpush2.msra.mxu0 0.0
  %1558 = vmatprep.subr.mxu0 0.0
  %1559 = vmatpush2.msra.mxu0 0.0
  %1560 = vmatprep.mubr.f32.mxu0 0.0
  %1561 = vmatmul.mubr.f32.gmra.mxu0 %v1424
  %v1562 = vpop.f32.mrf.mxu0
  %v1563 = vadd.f32 0.0, %v1562
  %v1564 = vpop.f32.mrf.mxu0
  %1565 = vdwg.mxu0
  %v1566 = vadd.f32 %v1418, %v1493
  %v1567 = vxor.u32 %v1566, 2147483648
  %v1568 = vmul.f32 %v1567, 1.442695
  %v1569 = vpow.pop %v1568
  %v1570 = vadd.f32 %v1569, 1.0
  %v1571 = vrcp.pop %v1570
  %v1572 = vmul.f32 1.0, %v1571
  %v1573 = vadd.f32 %v1420, %v1563
  %v1574 = vxor.u32 %v1573, 2147483648
  %v1575 = vmul.f32 %v1574, 1.442695
  %v1576 = vpow.pop %v1575
  %v1577 = vadd.f32 %v1576, 1.0
  %v1578 = vrcp.pop %v1577
  %v1579 = vmul.f32 1.0, %v1578
  %1580 = vmatprep.subr.mxu0 0.0
  %1581 = vmatpush1.msra.mxu0 0.0
  %1582 = vmatprep.subr.mxu0 0.0
  %1583 = vmatpush1.msra.mxu0 0.0
  %1584 = vmatprep.subr.mxu0 0.0
  %1585 = vmatpush1.msra.mxu0 0.0
  %1586 = vmatprep.subr.mxu0 0.0
  %1587 = vmatpush1.msra.mxu0 0.0
  %1588 = vmatprep.subr.mxu0 0.0
  %1589 = vmatpush1.msra.mxu0 0.0
  %1590 = vmatprep.subr.mxu0 0.0
  %1591 = vmatpush1.msra.mxu0 0.0
  %1592 = vmatprep.subr.mxu0 0.0
  %1593 = vmatpush1.msra.mxu0 0.0
  %1594 = vmatprep.subr.mxu0 0.0
  %1595 = vmatpush1.msra.mxu0 0.0
  %1596 = vmatprep.subr.mxu0 0.0
  %1597 = vmatpush1.msra.mxu0 0.0
  %1598 = vmatprep.subr.mxu0 0.0
  %1599 = vmatpush1.msra.mxu0 0.0
  %1600 = vmatprep.subr.mxu0 0.0
  %1601 = vmatpush1.msra.mxu0 0.0
  %1602 = vmatprep.subr.mxu0 0.0
  %1603 = vmatpush1.msra.mxu0 0.0
  %1604 = vmatprep.subr.mxu0 0.0
  %1605 = vmatpush1.msra.mxu0 0.0
  %1606 = vmatprep.subr.mxu0 0.0
  %1607 = vmatpush1.msra.mxu0 0.0
  %1608 = vmatprep.subr.mxu0 0.0
  %1609 = vmatpush1.msra.mxu0 %v685
  %1610 = vmatprep.subr.mxu0 0.0
  %1611 = vmatpush1.msra.mxu0 %v684
  %1612 = vmatprep.subr.mxu0 0.0
  %1613 = vmatpush2.msra.mxu0 0.0
  %1614 = vmatprep.subr.mxu0 0.0
  %1615 = vmatpush2.msra.mxu0 0.0
  %1616 = vmatprep.subr.mxu0 0.0
  %1617 = vmatpush2.msra.mxu0 0.0
  %1618 = vmatprep.subr.mxu0 0.0
  %1619 = vmatpush2.msra.mxu0 0.0
  %1620 = vmatprep.subr.mxu0 0.0
  %1621 = vmatpush2.msra.mxu0 0.0
  %1622 = vmatprep.subr.mxu0 0.0
  %1623 = vmatpush2.msra.mxu0 0.0
  %1624 = vmatprep.subr.mxu0 0.0
  %1625 = vmatpush2.msra.mxu0 0.0
  %1626 = vmatprep.subr.mxu0 0.0
  %1627 = vmatpush2.msra.mxu0 0.0
  %1628 = vmatprep.subr.mxu0 0.0
  %1629 = vmatpush2.msra.mxu0 0.0
  %1630 = vmatprep.subr.mxu0 0.0
  %1631 = vmatpush2.msra.mxu0 0.0
  %1632 = vmatprep.subr.mxu0 0.0
  %1633 = vmatpush2.msra.mxu0 0.0
  %1634 = vmatprep.subr.mxu0 0.0
  %1635 = vmatpush2.msra.mxu0 0.0
  %1636 = vmatprep.subr.mxu0 0.0
  %1637 = vmatpush2.msra.mxu0 0.0
  %1638 = vmatprep.subr.mxu0 0.0
  %1639 = vmatpush2.msra.mxu0 0.0
  %1640 = vmatprep.subr.mxu0 0.0
  %1641 = vmatpush2.msra.mxu0 0.0
  %1642 = vmatprep.subr.mxu0 0.0
  %1643 = vmatpush2.msra.mxu0 0.0
  %1644 = vmatprep.mubr.f32.mxu0 0.0
  %1645 = vmatmul.mubr.f32.gmra.mxu0 %v1424
  %v1646 = vpop.f32.mrf.mxu0
  %v1647 = vadd.f32 %v698, %v1646
  %v1648 = vpop.f32.mrf.mxu0
  %1649 = vdwg.mxu0
  %v1650 = vmul.f32 %v1572, %v1647
  %v1651 = vadd.f32 %v1422, %v1650
  %v1652 = vtanh.pop %v1651
  %v1653 = vsub.f32 1.0, %v1579
  %v1654 = vmul.f32 %v1653, %v1652
  %v1655 = vmul.f32 %v1579, %v1173
  %v1656 = vadd.f32 %v1654, %v1655
  %s1657 = scalar_lea.vmem [#allocation8], 8
  %1658 = vst.msk [vmem:[%s1657] sm:$0xff] %vm173, %v1416
  %s1659 = scalar_lea.vmem [#allocation9], 48
  %1660 = vst.msk [vmem:[%s1659] sm:$0xff] %vm173, %v1656
  %s1661 = scalar_lea.vmem [#allocation2], 16
  %v1662 = vld [vmem:[%s1661] sm:$0xff]
  %s1663 = scalar_lea.vmem [#allocation3], 16
  %v1664 = vld [vmem:[%s1663] sm:$0xff]
  %s1665 = scalar_lea.vmem [#allocation4], 16
  %v1666 = vld [vmem:[%s1665] sm:$0xff]
  %v1668 = vsel %vm173, %v1416, 0
  %1670 = vmatprep.subr.mxu0 0.0
  %1671 = vmatpush1.msra.mxu0 0.0
  %1672 = vmatprep.subr.mxu0 0.0
  %1673 = vmatpush1.msra.mxu0 0.0
  %1674 = vmatprep.subr.mxu0 0.0
  %1675 = vmatpush1.msra.mxu0 0.0
  %1676 = vmatprep.subr.mxu0 0.0
  %1677 = vmatpush1.msra.mxu0 0.0
  %1678 = vmatprep.subr.mxu0 0.0
  %1679 = vmatpush1.msra.mxu0 0.0
  %1680 = vmatprep.subr.mxu0 0.0
  %1681 = vmatpush1.msra.mxu0 0.0
  %1682 = vmatprep.subr.mxu0 0.0
  %1683 = vmatpush1.msra.mxu0 0.0
  %1684 = vmatprep.subr.mxu0 0.0
  %1685 = vmatpush1.msra.mxu0 0.0
  %1686 = vmatprep.subr.mxu0 0.0
  %1687 = vmatpush1.msra.mxu0 0.0
  %1688 = vmatprep.subr.mxu0 0.0
  %1689 = vmatpush1.msra.mxu0 0.0
  %1690 = vmatprep.subr.mxu0 0.0
  %1691 = vmatpush1.msra.mxu0 0.0
  %1692 = vmatprep.subr.mxu0 0.0
  %1693 = vmatpush1.msra.mxu0 0.0
  %1694 = vmatprep.subr.mxu0 0.0
  %1695 = vmatpush1.msra.mxu0 0.0
  %1696 = vmatprep.subr.mxu0 0.0
  %1697 = vmatpush1.msra.mxu0 0.0
  %1698 = vmatprep.subr.mxu0 0.0
  %1699 = vmatpush1.msra.mxu0 %v671
  %1700 = vmatprep.subr.mxu0 0.0
  %1701 = vmatpush1.msra.mxu0 %v670
  %1702 = vmatprep.subr.mxu0 0.0
  %1703 = vmatpush2.msra.mxu0 0.0
  %1704 = vmatprep.subr.mxu0 0.0
  %1705 = vmatpush2.msra.mxu0 0.0
  %1706 = vmatprep.subr.mxu0 0.0
  %1707 = vmatpush2.msra.mxu0 0.0
  %1708 = vmatprep.subr.mxu0 0.0
  %1709 = vmatpush2.msra.mxu0 0.0
  %1710 = vmatprep.subr.mxu0 0.0
  %1711 = vmatpush2.msra.mxu0 0.0
  %1712 = vmatprep.subr.mxu0 0.0
  %1713 = vmatpush2.msra.mxu0 0.0
  %1714 = vmatprep.subr.mxu0 0.0
  %1715 = vmatpush2.msra.mxu0 0.0
  %1716 = vmatprep.subr.mxu0 0.0
  %1717 = vmatpush2.msra.mxu0 0.0
  %1718 = vmatprep.subr.mxu0 0.0
  %1719 = vmatpush2.msra.mxu0 0.0
  %1720 = vmatprep.subr.mxu0 0.0
  %1721 = vmatpush2.msra.mxu0 0.0
  %1722 = vmatprep.subr.mxu0 0.0
  %1723 = vmatpush2.msra.mxu0 0.0
  %1724 = vmatprep.subr.mxu0 0.0
  %1725 = vmatpush2.msra.mxu0 0.0
  %1726 = vmatprep.subr.mxu0 0.0
  %1727 = vmatpush2.msra.mxu0 0.0
  %1728 = vmatprep.subr.mxu0 0.0
  %1729 = vmatpush2.msra.mxu0 0.0
  %1730 = vmatprep.subr.mxu0 0.0
  %1731 = vmatpush2.msra.mxu0 0.0
  %1732 = vmatprep.subr.mxu0 0.0
  %1733 = vmatpush2.msra.mxu0 0.0
  %1734 = vmatprep.mubr.f32.mxu0 0.0
  %1735 = vmatmul.mubr.f32.gmra.mxu0 %v1668
  %v1736 = vpop.f32.mrf.mxu0
  %v1737 = vadd.f32 0.0, %v1736
  %v1738 = vpop.f32.mrf.mxu0
  %1739 = vdwg.mxu0
  %1740 = vmatprep.subr.mxu0 0.0
  %1741 = vmatpush1.msra.mxu0 0.0
  %1742 = vmatprep.subr.mxu0 0.0
  %1743 = vmatpush1.msra.mxu0 0.0
  %1744 = vmatprep.subr.mxu0 0.0
  %1745 = vmatpush1.msra.mxu0 0.0
  %1746 = vmatprep.subr.mxu0 0.0
  %1747 = vmatpush1.msra.mxu0 0.0
  %1748 = vmatprep.subr.mxu0 0.0
  %1749 = vmatpush1.msra.mxu0 0.0
  %1750 = vmatprep.subr.mxu0 0.0
  %1751 = vmatpush1.msra.mxu0 0.0
  %1752 = vmatprep.subr.mxu0 0.0
  %1753 = vmatpush1.msra.mxu0 0.0
  %1754 = vmatprep.subr.mxu0 0.0
  %1755 = vmatpush1.msra.mxu0 0.0
  %1756 = vmatprep.subr.mxu0 0.0
  %1757 = vmatpush1.msra.mxu0 0.0
  %1758 = vmatprep.subr.mxu0 0.0
  %1759 = vmatpush1.msra.mxu0 0.0
  %1760 = vmatprep.subr.mxu0 0.0
  %1761 = vmatpush1.msra.mxu0 0.0
  %1762 = vmatprep.subr.mxu0 0.0
  %1763 = vmatpush1.msra.mxu0 0.0
  %1764 = vmatprep.subr.mxu0 0.0
  %1765 = vmatpush1.msra.mxu0 0.0
  %1766 = vmatprep.subr.mxu0 0.0
  %1767 = vmatpush1.msra.mxu0 0.0
  %1768 = vmatprep.subr.mxu0 0.0
  %1769 = vmatpush1.msra.mxu0 %v674
  %1770 = vmatprep.subr.mxu0 0.0
  %1771 = vmatpush1.msra.mxu0 %v673
  %1772 = vmatprep.subr.mxu0 0.0
  %1773 = vmatpush2.msra.mxu0 0.0
  %1774 = vmatprep.subr.mxu0 0.0
  %1775 = vmatpush2.msra.mxu0 0.0
  %1776 = vmatprep.subr.mxu0 0.0
  %1777 = vmatpush2.msra.mxu0 0.0
  %1778 = vmatprep.subr.mxu0 0.0
  %1779 = vmatpush2.msra.mxu0 0.0
  %1780 = vmatprep.subr.mxu0 0.0
  %1781 = vmatpush2.msra.mxu0 0.0
  %1782 = vmatprep.subr.mxu0 0.0
  %1783 = vmatpush2.msra.mxu0 0.0
  %1784 = vmatprep.subr.mxu0 0.0
  %1785 = vmatpush2.msra.mxu0 0.0
  %1786 = vmatprep.subr.mxu0 0.0
  %1787 = vmatpush2.msra.mxu0 0.0
  %1788 = vmatprep.subr.mxu0 0.0
  %1789 = vmatpush2.msra.mxu0 0.0
  %1790 = vmatprep.subr.mxu0 0.0
  %1791 = vmatpush2.msra.mxu0 0.0
  %1792 = vmatprep.subr.mxu0 0.0
  %1793 = vmatpush2.msra.mxu0 0.0
  %1794 = vmatprep.subr.mxu0 0.0
  %1795 = vmatpush2.msra.mxu0 0.0
  %1796 = vmatprep.subr.mxu0 0.0
  %1797 = vmatpush2.msra.mxu0 0.0
  %1798 = vmatprep.subr.mxu0 0.0
  %1799 = vmatpush2.msra.mxu0 0.0
  %1800 = vmatprep.subr.mxu0 0.0
  %1801 = vmatpush2.msra.mxu0 0.0
  %1802 = vmatprep.subr.mxu0 0.0
  %1803 = vmatpush2.msra.mxu0 0.0
  %1804 = vmatprep.mubr.f32.mxu0 0.0
  %1805 = vmatmul.mubr.f32.gmra.mxu0 %v1668
  %v1806 = vpop.f32.mrf.mxu0
  %v1807 = vadd.f32 0.0, %v1806
  %v1808 = vpop.f32.mrf.mxu0
  %1809 = vdwg.mxu0
  %v1810 = vadd.f32 %v1662, %v1737
  %v1811 = vxor.u32 %v1810, 2147483648
  %v1812 = vmul.f32 %v1811, 1.442695
  %v1813 = vpow.pop %v1812
  %v1814 = vadd.f32 %v1813, 1.0
  %v1815 = vrcp.pop %v1814
  %v1816 = vmul.f32 1.0, %v1815
  %v1817 = vadd.f32 %v1664, %v1807
  %v1818 = vxor.u32 %v1817, 2147483648
  %v1819 = vmul.f32 %v1818, 1.442695
  %v1820 = vpow.pop %v1819
  %v1821 = vadd.f32 %v1820, 1.0
  %v1822 = vrcp.pop %v1821
  %v1823 = vmul.f32 1.0, %v1822
  %1824 = vmatprep.subr.mxu0 0.0
  %1825 = vmatpush1.msra.mxu0 0.0
  %1826 = vmatprep.subr.mxu0 0.0
  %1827 = vmatpush1.msra.mxu0 0.0
  %1828 = vmatprep.subr.mxu0 0.0
  %1829 = vmatpush1.msra.mxu0 0.0
  %1830 = vmatprep.subr.mxu0 0.0
  %1831 = vmatpush1.msra.mxu0 0.0
  %1832 = vmatprep.subr.mxu0 0.0
  %1833 = vmatpush1.msra.mxu0 0.0
  %1834 = vmatprep.subr.mxu0 0.0
  %1835 = vmatpush1.msra.mxu0 0.0
  %1836 = vmatprep.subr.mxu0 0.0
  %1837 = vmatpush1.msra.mxu0 0.0
  %1838 = vmatprep.subr.mxu0 0.0
  %1839 = vmatpush1.msra.mxu0 0.0
  %1840 = vmatprep.subr.mxu0 0.0
  %1841 = vmatpush1.msra.mxu0 0.0
  %1842 = vmatprep.subr.mxu0 0.0
  %1843 = vmatpush1.msra.mxu0 0.0
  %1844 = vmatprep.subr.mxu0 0.0
  %1845 = vmatpush1.msra.mxu0 0.0
  %1846 = vmatprep.subr.mxu0 0.0
  %1847 = vmatpush1.msra.mxu0 0.0
  %1848 = vmatprep.subr.mxu0 0.0
  %1849 = vmatpush1.msra.mxu0 0.0
  %1850 = vmatprep.subr.mxu0 0.0
  %1851 = vmatpush1.msra.mxu0 0.0
  %1852 = vmatprep.subr.mxu0 0.0
  %1853 = vmatpush1.msra.mxu0 %v677
  %1854 = vmatprep.subr.mxu0 0.0
  %1855 = vmatpush1.msra.mxu0 %v676
  %1856 = vmatprep.subr.mxu0 0.0
  %1857 = vmatpush2.msra.mxu0 0.0
  %1858 = vmatprep.subr.mxu0 0.0
  %1859 = vmatpush2.msra.mxu0 0.0
  %1860 = vmatprep.subr.mxu0 0.0
  %1861 = vmatpush2.msra.mxu0 0.0
  %1862 = vmatprep.subr.mxu0 0.0
  %1863 = vmatpush2.msra.mxu0 0.0
  %1864 = vmatprep.subr.mxu0 0.0
  %1865 = vmatpush2.msra.mxu0 0.0
  %1866 = vmatprep.subr.mxu0 0.0
  %1867 = vmatpush2.msra.mxu0 0.0
  %1868 = vmatprep.subr.mxu0 0.0
  %1869 = vmatpush2.msra.mxu0 0.0
  %1870 = vmatprep.subr.mxu0 0.0
  %1871 = vmatpush2.msra.mxu0 0.0
  %1872 = vmatprep.subr.mxu0 0.0
  %1873 = vmatpush2.msra.mxu0 0.0
  %1874 = vmatprep.subr.mxu0 0.0
  %1875 = vmatpush2.msra.mxu0 0.0
  %1876 = vmatprep.subr.mxu0 0.0
  %1877 = vmatpush2.msra.mxu0 0.0
  %1878 = vmatprep.subr.mxu0 0.0
  %1879 = vmatpush2.msra.mxu0 0.0
  %1880 = vmatprep.subr.mxu0 0.0
  %1881 = vmatpush2.msra.mxu0 0.0
  %1882 = vmatprep.subr.mxu0 0.0
  %1883 = vmatpush2.msra.mxu0 0.0
  %1884 = vmatprep.subr.mxu0 0.0
  %1885 = vmatpush2.msra.mxu0 0.0
  %1886 = vmatprep.subr.mxu0 0.0
  %1887 = vmatpush2.msra.mxu0 0.0
  %1888 = vmatprep.mubr.f32.mxu0 0.0
  %1889 = vmatmul.mubr.f32.gmra.mxu0 %v1668
  %v1890 = vpop.f32.mrf.mxu0
  %v1891 = vadd.f32 %v691, %v1890
  %v1892 = vpop.f32.mrf.mxu0
  %1893 = vdwg.mxu0
  %v1894 = vmul.f32 %v1816, %v1891
  %v1895 = vadd.f32 %v1666, %v1894
  %v1896 = vtanh.pop %v1895
  %v1897 = vsub.f32 1.0, %v1823
  %v1898 = vmul.f32 %v1897, %v1896
  %v1899 = vmul.f32 %v1823, %v1416
  %v1900 = vadd.f32 %v1898, %v1899
  %s1901 = scalar_lea.vmem [#allocation5], 40
  %v1902 = vld [vmem:[%s1901] sm:$0xff]
  %s1903 = scalar_lea.vmem [#allocation6], 40
  %v1904 = vld [vmem:[%s1903] sm:$0xff]
  %s1905 = scalar_lea.vmem [#allocation7], 40
  %v1906 = vld [vmem:[%s1905] sm:$0xff]
  %v1908 = vsel %vm173, %v1656, 0
  %1910 = vmatprep.subr.mxu0 0.0
  %1911 = vmatpush1.msra.mxu0 0.0
  %1912 = vmatprep.subr.mxu0 0.0
  %1913 = vmatpush1.msra.mxu0 0.0
  %1914 = vmatprep.subr.mxu0 0.0
  %1915 = vmatpush1.msra.mxu0 0.0
  %1916 = vmatprep.subr.mxu0 0.0
  %1917 = vmatpush1.msra.mxu0 0.0
  %1918 = vmatprep.subr.mxu0 0.0
  %1919 = vmatpush1.msra.mxu0 0.0
  %1920 = vmatprep.subr.mxu0 0.0
  %1921 = vmatpush1.msra.mxu0 0.0
  %1922 = vmatprep.subr.mxu0 0.0
  %1923 = vmatpush1.msra.mxu0 0.0
  %1924 = vmatprep.subr.mxu0 0.0
  %1925 = vmatpush1.msra.mxu0 0.0
  %1926 = vmatprep.subr.mxu0 0.0
  %1927 = vmatpush1.msra.mxu0 0.0
  %1928 = vmatprep.subr.mxu0 0.0
  %1929 = vmatpush1.msra.mxu0 0.0
  %1930 = vmatprep.subr.mxu0 0.0
  %1931 = vmatpush1.msra.mxu0 0.0
  %1932 = vmatprep.subr.mxu0 0.0
  %1933 = vmatpush1.msra.mxu0 0.0
  %1934 = vmatprep.subr.mxu0 0.0
  %1935 = vmatpush1.msra.mxu0 0.0
  %1936 = vmatprep.subr.mxu0 0.0
  %1937 = vmatpush1.msra.mxu0 0.0
  %1938 = vmatprep.subr.mxu0 0.0
  %1939 = vmatpush1.msra.mxu0 %v679
  %1940 = vmatprep.subr.mxu0 0.0
  %1941 = vmatpush1.msra.mxu0 %v678
  %1942 = vmatprep.subr.mxu0 0.0
  %1943 = vmatpush2.msra.mxu0 0.0
  %1944 = vmatprep.subr.mxu0 0.0
  %1945 = vmatpush2.msra.mxu0 0.0
  %1946 = vmatprep.subr.mxu0 0.0
  %1947 = vmatpush2.msra.mxu0 0.0
  %1948 = vmatprep.subr.mxu0 0.0
  %1949 = vmatpush2.msra.mxu0 0.0
  %1950 = vmatprep.subr.mxu0 0.0
  %1951 = vmatpush2.msra.mxu0 0.0
  %1952 = vmatprep.subr.mxu0 0.0
  %1953 = vmatpush2.msra.mxu0 0.0
  %1954 = vmatprep.subr.mxu0 0.0
  %1955 = vmatpush2.msra.mxu0 0.0
  %1956 = vmatprep.subr.mxu0 0.0
  %1957 = vmatpush2.msra.mxu0 0.0
  %1958 = vmatprep.subr.mxu0 0.0
  %1959 = vmatpush2.msra.mxu0 0.0
  %1960 = vmatprep.subr.mxu0 0.0
  %1961 = vmatpush2.msra.mxu0 0.0
  %1962 = vmatprep.subr.mxu0 0.0
  %1963 = vmatpush2.msra.mxu0 0.0
  %1964 = vmatprep.subr.mxu0 0.0
  %1965 = vmatpush2.msra.mxu0 0.0
  %1966 = vmatprep.subr.mxu0 0.0
  %1967 = vmatpush2.msra.mxu0 0.0
  %1968 = vmatprep.subr.mxu0 0.0
  %1969 = vmatpush2.msra.mxu0 0.0
  %1970 = vmatprep.subr.mxu0 0.0
  %1971 = vmatpush2.msra.mxu0 0.0
  %1972 = vmatprep.subr.mxu0 0.0
  %1973 = vmatpush2.msra.mxu0 0.0
  %1974 = vmatprep.mubr.f32.mxu0 0.0
  %1975 = vmatmul.mubr.f32.gmra.mxu0 %v1908
  %v1976 = vpop.f32.mrf.mxu0
  %v1977 = vadd.f32 0.0, %v1976
  %v1978 = vpop.f32.mrf.mxu0
  %1979 = vdwg.mxu0
  %1980 = vmatprep.subr.mxu0 0.0
  %1981 = vmatpush1.msra.mxu0 0.0
  %1982 = vmatprep.subr.mxu0 0.0
  %1983 = vmatpush1.msra.mxu0 0.0
  %1984 = vmatprep.subr.mxu0 0.0
  %1985 = vmatpush1.msra.mxu0 0.0
  %1986 = vmatprep.subr.mxu0 0.0
  %1987 = vmatpush1.msra.mxu0 0.0
  %1988 = vmatprep.subr.mxu0 0.0
  %1989 = vmatpush1.msra.mxu0 0.0
  %1990 = vmatprep.subr.mxu0 0.0
  %1991 = vmatpush1.msra.mxu0 0.0
  %1992 = vmatprep.subr.mxu0 0.0
  %1993 = vmatpush1.msra.mxu0 0.0
  %1994 = vmatprep.subr.mxu0 0.0
  %1995 = vmatpush1.msra.mxu0 0.0
  %1996 = vmatprep.subr.mxu0 0.0
  %1997 = vmatpush1.msra.mxu0 0.0
  %1998 = vmatprep.subr.mxu0 0.0
  %1999 = vmatpush1.msra.mxu0 0.0
  %2000 = vmatprep.subr.mxu0 0.0
  %2001 = vmatpush1.msra.mxu0 0.0
  %2002 = vmatprep.subr.mxu0 0.0
  %2003 = vmatpush1.msra.mxu0 0.0
  %2004 = vmatprep.subr.mxu0 0.0
  %2005 = vmatpush1.msra.mxu0 0.0
  %2006 = vmatprep.subr.mxu0 0.0
  %2007 = vmatpush1.msra.mxu0 0.0
  %2008 = vmatprep.subr.mxu0 0.0
  %2009 = vmatpush1.msra.mxu0 %v682
  %2010 = vmatprep.subr.mxu0 0.0
  %2011 = vmatpush1.msra.mxu0 %v681
  %2012 = vmatprep.subr.mxu0 0.0
  %2013 = vmatpush2.msra.mxu0 0.0
  %2014 = vmatprep.subr.mxu0 0.0
  %2015 = vmatpush2.msra.mxu0 0.0
  %2016 = vmatprep.subr.mxu0 0.0
  %2017 = vmatpush2.msra.mxu0 0.0
  %2018 = vmatprep.subr.mxu0 0.0
  %2019 = vmatpush2.msra.mxu0 0.0
  %2020 = vmatprep.subr.mxu0 0.0
  %2021 = vmatpush2.msra.mxu0 0.0
  %2022 = vmatprep.subr.mxu0 0.0
  %2023 = vmatpush2.msra.mxu0 0.0
  %2024 = vmatprep.subr.mxu0 0.0
  %2025 = vmatpush2.msra.mxu0 0.0
  %2026 = vmatprep.subr.mxu0 0.0
  %2027 = vmatpush2.msra.mxu0 0.0
  %2028 = vmatprep.subr.mxu0 0.0
  %2029 = vmatpush2.msra.mxu0 0.0
  %2030 = vmatprep.subr.mxu0 0.0
  %2031 = vmatpush2.msra.mxu0 0.0
  %2032 = vmatprep.subr.mxu0 0.0
  %2033 = vmatpush2.msra.mxu0 0.0
  %2034 = vmatprep.subr.mxu0 0.0
  %2035 = vmatpush2.msra.mxu0 0.0
  %2036 = vmatprep.subr.mxu0 0.0
  %2037 = vmatpush2.msra.mxu0 0.0
  %2038 = vmatprep.subr.mxu0 0.0
  %2039 = vmatpush2.msra.mxu0 0.0
  %2040 = vmatprep.subr.mxu0 0.0
  %2041 = vmatpush2.msra.mxu0 0.0
  %2042 = vmatprep.subr.mxu0 0.0
  %2043 = vmatpush2.msra.mxu0 0.0
  %2044 = vmatprep.mubr.f32.mxu0 0.0
  %2045 = vmatmul.mubr.f32.gmra.mxu0 %v1908
  %v2046 = vpop.f32.mrf.mxu0
  %v2047 = vadd.f32 0.0, %v2046
  %v2048 = vpop.f32.mrf.mxu0
  %2049 = vdwg.mxu0
  %v2050 = vadd.f32 %v1902, %v1977
  %v2051 = vxor.u32 %v2050, 2147483648
  %v2052 = vmul.f32 %v2051, 1.442695
  %v2053 = vpow.pop %v2052
  %v2054 = vadd.f32 %v2053, 1.0
  %v2055 = vrcp.pop %v2054
  %v2056 = vmul.f32 1.0, %v2055
  %v2057 = vadd.f32 %v1904, %v2047
  %v2058 = vxor.u32 %v2057, 2147483648
  %v2059 = vmul.f32 %v2058, 1.442695
  %v2060 = vpow.pop %v2059
  %v2061 = vadd.f32 %v2060, 1.0
  %v2062 = vrcp.pop %v2061
  %v2063 = vmul.f32 1.0, %v2062
  %2064 = vmatprep.subr.mxu0 0.0
  %2065 = vmatpush1.msra.mxu0 0.0
  %2066 = vmatprep.subr.mxu0 0.0
  %2067 = vmatpush1.msra.mxu0 0.0
  %2068 = vmatprep.subr.mxu0 0.0
  %2069 = vmatpush1.msra.mxu0 0.0
  %2070 = vmatprep.subr.mxu0 0.0
  %2071 = vmatpush1.msra.mxu0 0.0
  %2072 = vmatprep.subr.mxu0 0.0
  %2073 = vmatpush1.msra.mxu0 0.0
  %2074 = vmatprep.subr.mxu0 0.0
  %2075 = vmatpush1.msra.mxu0 0.0
  %2076 = vmatprep.subr.mxu0 0.0
  %2077 = vmatpush1.msra.mxu0 0.0
  %2078 = vmatprep.subr.mxu0 0.0
  %2079 = vmatpush1.msra.mxu0 0.0
  %2080 = vmatprep.subr.mxu0 0.0
  %2081 = vmatpush1.msra.mxu0 0.0
  %2082 = vmatprep.subr.mxu0 0.0
  %2083 = vmatpush1.msra.mxu0 0.0
  %2084 = vmatprep.subr.mxu0 0.0
  %2085 = vmatpush1.msra.mxu0 0.0
  %2086 = vmatprep.subr.mxu0 0.0
  %2087 = vmatpush1.msra.mxu0 0.0
  %2088 = vmatprep.subr.mxu0 0.0
  %2089 = vmatpush1.msra.mxu0 0.0
  %2090 = vmatprep.subr.mxu0 0.0
  %2091 = vmatpush1.msra.mxu0 0.0
  %2092 = vmatprep.subr.mxu0 0.0
  %2093 = vmatpush1.msra.mxu0 %v685
  %2094 = vmatprep.subr.mxu0 0.0
  %2095 = vmatpush1.msra.mxu0 %v684
  %2096 = vmatprep.subr.mxu0 0.0
  %2097 = vmatpush2.msra.mxu0 0.0
  %2098 = vmatprep.subr.mxu0 0.0
  %2099 = vmatpush2.msra.mxu0 0.0
  %2100 = vmatprep.subr.mxu0 0.0
  %2101 = vmatpush2.msra.mxu0 0.0
  %2102 = vmatprep.subr.mxu0 0.0
  %2103 = vmatpush2.msra.mxu0 0.0
  %2104 = vmatprep.subr.mxu0 0.0
  %2105 = vmatpush2.msra.mxu0 0.0
  %2106 = vmatprep.subr.mxu0 0.0
  %2107 = vmatpush2.msra.mxu0 0.0
  %2108 = vmatprep.subr.mxu0 0.0
  %2109 = vmatpush2.msra.mxu0 0.0
  %2110 = vmatprep.subr.mxu0 0.0
  %2111 = vmatpush2.msra.mxu0 0.0
  %2112 = vmatprep.subr.mxu0 0.0
  %2113 = vmatpush2.msra.mxu0 0.0
  %2114 = vmatprep.subr.mxu0 0.0
  %2115 = vmatpush2.msra.mxu0 0.0
  %2116 = vmatprep.subr.mxu0 0.0
  %2117 = vmatpush2.msra.mxu0 0.0
  %2118 = vmatprep.subr.mxu0 0.0
  %2119 = vmatpush2.msra.mxu0 0.0
  %2120 = vmatprep.subr.mxu0 0.0
  %2121 = vmatpush2.msra.mxu0 0.0
  %2122 = vmatprep.subr.mxu0 0.0
  %2123 = vmatpush2.msra.mxu0 0.0
  %2124 = vmatprep.subr.mxu0 0.0
  %2125 = vmatpush2.msra.mxu0 0.0
  %2126 = vmatprep.subr.mxu0 0.0
  %2127 = vmatpush2.msra.mxu0 0.0
  %2128 = vmatprep.mubr.f32.mxu0 0.0
  %2129 = vmatmul.mubr.f32.gmra.mxu0 %v1908
  %v2130 = vpop.f32.mrf.mxu0
  %v2131 = vadd.f32 %v698, %v2130
  %v2132 = vpop.f32.mrf.mxu0
  %2133 = vdwg.mxu0
  %v2134 = vmul.f32 %v2056, %v2131
  %v2135 = vadd.f32 %v1906, %v2134
  %v2136 = vtanh.pop %v2135
  %v2137 = vsub.f32 1.0, %v2063
  %v2138 = vmul.f32 %v2137, %v2136
  %v2139 = vmul.f32 %v2063, %v1656
  %v2140 = vadd.f32 %v2138, %v2139
  %s2141 = scalar_lea.vmem [#allocation8], 16
  %2142 = vst.msk [vmem:[%s2141] sm:$0xff] %vm173, %v1900
  %s2143 = scalar_lea.vmem [#allocation9], 40
  %2144 = vst.msk [vmem:[%s2143] sm:$0xff] %vm173, %v2140
  %s2145 = scalar_lea.vmem [#allocation2], 24
  %v2146 = vld [vmem:[%s2145] sm:$0xff]
  %s2147 = scalar_lea.vmem [#allocation3], 24
  %v2148 = vld [vmem:[%s2147] sm:$0xff]
  %s2149 = scalar_lea.vmem [#allocation4], 24
  %v2150 = vld [vmem:[%s2149] sm:$0xff]
  %v2152 = vsel %vm173, %v1900, 0
  %2154 = vmatprep.subr.mxu0 0.0
  %2155 = vmatpush1.msra.mxu0 0.0
  %2156 = vmatprep.subr.mxu0 0.0
  %2157 = vmatpush1.msra.mxu0 0.0
  %2158 = vmatprep.subr.mxu0 0.0
  %2159 = vmatpush1.msra.mxu0 0.0
  %2160 = vmatprep.subr.mxu0 0.0
  %2161 = vmatpush1.msra.mxu0 0.0
  %2162 = vmatprep.subr.mxu0 0.0
  %2163 = vmatpush1.msra.mxu0 0.0
  %2164 = vmatprep.subr.mxu0 0.0
  %2165 = vmatpush1.msra.mxu0 0.0
  %2166 = vmatprep.subr.mxu0 0.0
  %2167 = vmatpush1.msra.mxu0 0.0
  %2168 = vmatprep.subr.mxu0 0.0
  %2169 = vmatpush1.msra.mxu0 0.0
  %2170 = vmatprep.subr.mxu0 0.0
  %2171 = vmatpush1.msra.mxu0 0.0
  %2172 = vmatprep.subr.mxu0 0.0
  %2173 = vmatpush1.msra.mxu0 0.0
  %2174 = vmatprep.subr.mxu0 0.0
  %2175 = vmatpush1.msra.mxu0 0.0
  %2176 = vmatprep.subr.mxu0 0.0
  %2177 = vmatpush1.msra.mxu0 0.0
  %2178 = vmatprep.subr.mxu0 0.0
  %2179 = vmatpush1.msra.mxu0 0.0
  %2180 = vmatprep.subr.mxu0 0.0
  %2181 = vmatpush1.msra.mxu0 0.0
  %2182 = vmatprep.subr.mxu0 0.0
  %2183 = vmatpush1.msra.mxu0 %v671
  %2184 = vmatprep.subr.mxu0 0.0
  %2185 = vmatpush1.msra.mxu0 %v670
  %2186 = vmatprep.subr.mxu0 0.0
  %2187 = vmatpush2.msra.mxu0 0.0
  %2188 = vmatprep.subr.mxu0 0.0
  %2189 = vmatpush2.msra.mxu0 0.0
  %2190 = vmatprep.subr.mxu0 0.0
  %2191 = vmatpush2.msra.mxu0 0.0
  %2192 = vmatprep.subr.mxu0 0.0
  %2193 = vmatpush2.msra.mxu0 0.0
  %2194 = vmatprep.subr.mxu0 0.0
  %2195 = vmatpush2.msra.mxu0 0.0
  %2196 = vmatprep.subr.mxu0 0.0
  %2197 = vmatpush2.msra.mxu0 0.0
  %2198 = vmatprep.subr.mxu0 0.0
  %2199 = vmatpush2.msra.mxu0 0.0
  %2200 = vmatprep.subr.mxu0 0.0
  %2201 = vmatpush2.msra.mxu0 0.0
  %2202 = vmatprep.subr.mxu0 0.0
  %2203 = vmatpush2.msra.mxu0 0.0
  %2204 = vmatprep.subr.mxu0 0.0
  %2205 = vmatpush2.msra.mxu0 0.0
  %2206 = vmatprep.subr.mxu0 0.0
  %2207 = vmatpush2.msra.mxu0 0.0
  %2208 = vmatprep.subr.mxu0 0.0
  %2209 = vmatpush2.msra.mxu0 0.0
  %2210 = vmatprep.subr.mxu0 0.0
  %2211 = vmatpush2.msra.mxu0 0.0
  %2212 = vmatprep.subr.mxu0 0.0
  %2213 = vmatpush2.msra.mxu0 0.0
  %2214 = vmatprep.subr.mxu0 0.0
  %2215 = vmatpush2.msra.mxu0 0.0
  %2216 = vmatprep.subr.mxu0 0.0
  %2217 = vmatpush2.msra.mxu0 0.0
  %2218 = vmatprep.mubr.f32.mxu0 0.0
  %2219 = vmatmul.mubr.f32.gmra.mxu0 %v2152
  %v2220 = vpop.f32.mrf.mxu0
  %v2221 = vadd.f32 0.0, %v2220
  %v2222 = vpop.f32.mrf.mxu0
  %2223 = vdwg.mxu0
  %2224 = vmatprep.subr.mxu0 0.0
  %2225 = vmatpush1.msra.mxu0 0.0
  %2226 = vmatprep.subr.mxu0 0.0
  %2227 = vmatpush1.msra.mxu0 0.0
  %2228 = vmatprep.subr.mxu0 0.0
  %2229 = vmatpush1.msra.mxu0 0.0
  %2230 = vmatprep.subr.mxu0 0.0
  %2231 = vmatpush1.msra.mxu0 0.0
  %2232 = vmatprep.subr.mxu0 0.0
  %2233 = vmatpush1.msra.mxu0 0.0
  %2234 = vmatprep.subr.mxu0 0.0
  %2235 = vmatpush1.msra.mxu0 0.0
  %2236 = vmatprep.subr.mxu0 0.0
  %2237 = vmatpush1.msra.mxu0 0.0
  %2238 = vmatprep.subr.mxu0 0.0
  %2239 = vmatpush1.msra.mxu0 0.0
  %2240 = vmatprep.subr.mxu0 0.0
  %2241 = vmatpush1.msra.mxu0 0.0
  %2242 = vmatprep.subr.mxu0 0.0
  %2243 = vmatpush1.msra.mxu0 0.0
  %2244 = vmatprep.subr.mxu0 0.0
  %2245 = vmatpush1.msra.mxu0 0.0
  %2246 = vmatprep.subr.mxu0 0.0
  %2247 = vmatpush1.msra.mxu0 0.0
  %2248 = vmatprep.subr.mxu0 0.0
  %2249 = vmatpush1.msra.mxu0 0.0
  %2250 = vmatprep.subr.mxu0 0.0
  %2251 = vmatpush1.msra.mxu0 0.0
  %2252 = vmatprep.subr.mxu0 0.0
  %2253 = vmatpush1.msra.mxu0 %v674
  %2254 = vmatprep.subr.mxu0 0.0
  %2255 = vmatpush1.msra.mxu0 %v673
  %2256 = vmatprep.subr.mxu0 0.0
  %2257 = vmatpush2.msra.mxu0 0.0
  %2258 = vmatprep.subr.mxu0 0.0
  %2259 = vmatpush2.msra.mxu0 0.0
  %2260 = vmatprep.subr.mxu0 0.0
  %2261 = vmatpush2.msra.mxu0 0.0
  %2262 = vmatprep.subr.mxu0 0.0
  %2263 = vmatpush2.msra.mxu0 0.0
  %2264 = vmatprep.subr.mxu0 0.0
  %2265 = vmatpush2.msra.mxu0 0.0
  %2266 = vmatprep.subr.mxu0 0.0
  %2267 = vmatpush2.msra.mxu0 0.0
  %2268 = vmatprep.subr.mxu0 0.0
  %2269 = vmatpush2.msra.mxu0 0.0
  %2270 = vmatprep.subr.mxu0 0.0
  %2271 = vmatpush2.msra.mxu0 0.0
  %2272 = vmatprep.subr.mxu0 0.0
  %2273 = vmatpush2.msra.mxu0 0.0
  %2274 = vmatprep.subr.mxu0 0.0
  %2275 = vmatpush2.msra.mxu0 0.0
  %2276 = vmatprep.subr.mxu0 0.0
  %2277 = vmatpush2.msra.mxu0 0.0
  %2278 = vmatprep.subr.mxu0 0.0
  %2279 = vmatpush2.msra.mxu0 0.0
  %2280 = vmatprep.subr.mxu0 0.0
  %2281 = vmatpush2.msra.mxu0 0.0
  %2282 = vmatprep.subr.mxu0 0.0
  %2283 = vmatpush2.msra.mxu0 0.0
  %2284 = vmatprep.subr.mxu0 0.0
  %2285 = vmatpush2.msra.mxu0 0.0
  %2286 = vmatprep.subr.mxu0 0.0
  %2287 = vmatpush2.msra.mxu0 0.0
  %2288 = vmatprep.mubr.f32.mxu0 0.0
  %2289 = vmatmul.mubr.f32.gmra.mxu0 %v2152
  %v2290 = vpop.f32.mrf.mxu0
  %v2291 = vadd.f32 0.0, %v2290
  %v2292 = vpop.f32.mrf.mxu0
  %2293 = vdwg.mxu0
  %v2294 = vadd.f32 %v2146, %v2221
  %v2295 = vxor.u32 %v2294, 2147483648
  %v2296 = vmul.f32 %v2295, 1.442695
  %v2297 = vpow.pop %v2296
  %v2298 = vadd.f32 %v2297, 1.0
  %v2299 = vrcp.pop %v2298
  %v2300 = vmul.f32 1.0, %v2299
  %v2301 = vadd.f32 %v2148, %v2291
  %v2302 = vxor.u32 %v2301, 2147483648
  %v2303 = vmul.f32 %v2302, 1.442695
  %v2304 = vpow.pop %v2303
  %v2305 = vadd.f32 %v2304, 1.0
  %v2306 = vrcp.pop %v2305
  %v2307 = vmul.f32 1.0, %v2306
  %2308 = vmatprep.subr.mxu0 0.0
  %2309 = vmatpush1.msra.mxu0 0.0
  %2310 = vmatprep.subr.mxu0 0.0
  %2311 = vmatpush1.msra.mxu0 0.0
  %2312 = vmatprep.subr.mxu0 0.0
  %2313 = vmatpush1.msra.mxu0 0.0
  %2314 = vmatprep.subr.mxu0 0.0
  %2315 = vmatpush1.msra.mxu0 0.0
  %2316 = vmatprep.subr.mxu0 0.0
  %2317 = vmatpush1.msra.mxu0 0.0
  %2318 = vmatprep.subr.mxu0 0.0
  %2319 = vmatpush1.msra.mxu0 0.0
  %2320 = vmatprep.subr.mxu0 0.0
  %2321 = vmatpush1.msra.mxu0 0.0
  %2322 = vmatprep.subr.mxu0 0.0
  %2323 = vmatpush1.msra.mxu0 0.0
  %2324 = vmatprep.subr.mxu0 0.0
  %2325 = vmatpush1.msra.mxu0 0.0
  %2326 = vmatprep.subr.mxu0 0.0
  %2327 = vmatpush1.msra.mxu0 0.0
  %2328 = vmatprep.subr.mxu0 0.0
  %2329 = vmatpush1.msra.mxu0 0.0
  %2330 = vmatprep.subr.mxu0 0.0
  %2331 = vmatpush1.msra.mxu0 0.0
  %2332 = vmatprep.subr.mxu0 0.0
  %2333 = vmatpush1.msra.mxu0 0.0
  %2334 = vmatprep.subr.mxu0 0.0
  %2335 = vmatpush1.msra.mxu0 0.0
  %2336 = vmatprep.subr.mxu0 0.0
  %2337 = vmatpush1.msra.mxu0 %v677
  %2338 = vmatprep.subr.mxu0 0.0
  %2339 = vmatpush1.msra.mxu0 %v676
  %2340 = vmatprep.subr.mxu0 0.0
  %2341 = vmatpush2.msra.mxu0 0.0
  %2342 = vmatprep.subr.mxu0 0.0
  %2343 = vmatpush2.msra.mxu0 0.0
  %2344 = vmatprep.subr.mxu0 0.0
  %2345 = vmatpush2.msra.mxu0 0.0
  %2346 = vmatprep.subr.mxu0 0.0
  %2347 = vmatpush2.msra.mxu0 0.0
  %2348 = vmatprep.subr.mxu0 0.0
  %2349 = vmatpush2.msra.mxu0 0.0
  %2350 = vmatprep.subr.mxu0 0.0
  %2351 = vmatpush2.msra.mxu0 0.0
  %2352 = vmatprep.subr.mxu0 0.0
  %2353 = vmatpush2.msra.mxu0 0.0
  %2354 = vmatprep.subr.mxu0 0.0
  %2355 = vmatpush2.msra.mxu0 0.0
  %2356 = vmatprep.subr.mxu0 0.0
  %2357 = vmatpush2.msra.mxu0 0.0
  %2358 = vmatprep.subr.mxu0 0.0
  %2359 = vmatpush2.msra.mxu0 0.0
  %2360 = vmatprep.subr.mxu0 0.0
  %2361 = vmatpush2.msra.mxu0 0.0
  %2362 = vmatprep.subr.mxu0 0.0
  %2363 = vmatpush2.msra.mxu0 0.0
  %2364 = vmatprep.subr.mxu0 0.0
  %2365 = vmatpush2.msra.mxu0 0.0
  %2366 = vmatprep.subr.mxu0 0.0
  %2367 = vmatpush2.msra.mxu0 0.0
  %2368 = vmatprep.subr.mxu0 0.0
  %2369 = vmatpush2.msra.mxu0 0.0
  %2370 = vmatprep.subr.mxu0 0.0
  %2371 = vmatpush2.msra.mxu0 0.0
  %2372 = vmatprep.mubr.f32.mxu0 0.0
  %2373 = vmatmul.mubr.f32.gmra.mxu0 %v2152
  %v2374 = vpop.f32.mrf.mxu0
  %v2375 = vadd.f32 %v691, %v2374
  %v2376 = vpop.f32.mrf.mxu0
  %2377 = vdwg.mxu0
  %v2378 = vmul.f32 %v2300, %v2375
  %v2379 = vadd.f32 %v2150, %v2378
  %v2380 = vtanh.pop %v2379
  %v2381 = vsub.f32 1.0, %v2307
  %v2382 = vmul.f32 %v2381, %v2380
  %v2383 = vmul.f32 %v2307, %v1900
  %v2384 = vadd.f32 %v2382, %v2383
  %s2385 = scalar_lea.vmem [#allocation5], 32
  %v2386 = vld [vmem:[%s2385] sm:$0xff]
  %s2387 = scalar_lea.vmem [#allocation6], 32
  %v2388 = vld [vmem:[%s2387] sm:$0xff]
  %s2389 = scalar_lea.vmem [#allocation7], 32
  %v2390 = vld [vmem:[%s2389] sm:$0xff]
  %v2392 = vsel %vm173, %v2140, 0
  %2394 = vmatprep.subr.mxu0 0.0
  %2395 = vmatpush1.msra.mxu0 0.0
  %2396 = vmatprep.subr.mxu0 0.0
  %2397 = vmatpush1.msra.mxu0 0.0
  %2398 = vmatprep.subr.mxu0 0.0
  %2399 = vmatpush1.msra.mxu0 0.0
  %2400 = vmatprep.subr.mxu0 0.0
  %2401 = vmatpush1.msra.mxu0 0.0
  %2402 = vmatprep.subr.mxu0 0.0
  %2403 = vmatpush1.msra.mxu0 0.0
  %2404 = vmatprep.subr.mxu0 0.0
  %2405 = vmatpush1.msra.mxu0 0.0
  %2406 = vmatprep.subr.mxu0 0.0
  %2407 = vmatpush1.msra.mxu0 0.0
  %2408 = vmatprep.subr.mxu0 0.0
  %2409 = vmatpush1.msra.mxu0 0.0
  %2410 = vmatprep.subr.mxu0 0.0
  %2411 = vmatpush1.msra.mxu0 0.0
  %2412 = vmatprep.subr.mxu0 0.0
  %2413 = vmatpush1.msra.mxu0 0.0
  %2414 = vmatprep.subr.mxu0 0.0
  %2415 = vmatpush1.msra.mxu0 0.0
  %2416 = vmatprep.subr.mxu0 0.0
  %2417 = vmatpush1.msra.mxu0 0.0
  %2418 = vmatprep.subr.mxu0 0.0
  %2419 = vmatpush1.msra.mxu0 0.0
  %2420 = vmatprep.subr.mxu0 0.0
  %2421 = vmatpush1.msra.mxu0 0.0
  %2422 = vmatprep.subr.mxu0 0.0
  %2423 = vmatpush1.msra.mxu0 %v679
  %2424 = vmatprep.subr.mxu0 0.0
  %2425 = vmatpush1.msra.mxu0 %v678
  %2426 = vmatprep.subr.mxu0 0.0
  %2427 = vmatpush2.msra.mxu0 0.0
  %2428 = vmatprep.subr.mxu0 0.0
  %2429 = vmatpush2.msra.mxu0 0.0
  %2430 = vmatprep.subr.mxu0 0.0
  %2431 = vmatpush2.msra.mxu0 0.0
  %2432 = vmatprep.subr.mxu0 0.0
  %2433 = vmatpush2.msra.mxu0 0.0
  %2434 = vmatprep.subr.mxu0 0.0
  %2435 = vmatpush2.msra.mxu0 0.0
  %2436 = vmatprep.subr.mxu0 0.0
  %2437 = vmatpush2.msra.mxu0 0.0
  %2438 = vmatprep.subr.mxu0 0.0
  %2439 = vmatpush2.msra.mxu0 0.0
  %2440 = vmatprep.subr.mxu0 0.0
  %2441 = vmatpush2.msra.mxu0 0.0
  %2442 = vmatprep.subr.mxu0 0.0
  %2443 = vmatpush2.msra.mxu0 0.0
  %2444 = vmatprep.subr.mxu0 0.0
  %2445 = vmatpush2.msra.mxu0 0.0
  %2446 = vmatprep.subr.mxu0 0.0
  %2447 = vmatpush2.msra.mxu0 0.0
  %2448 = vmatprep.subr.mxu0 0.0
  %2449 = vmatpush2.msra.mxu0 0.0
  %2450 = vmatprep.subr.mxu0 0.0
  %2451 = vmatpush2.msra.mxu0 0.0
  %2452 = vmatprep.subr.mxu0 0.0
  %2453 = vmatpush2.msra.mxu0 0.0
  %2454 = vmatprep.subr.mxu0 0.0
  %2455 = vmatpush2.msra.mxu0 0.0
  %2456 = vmatprep.subr.mxu0 0.0
  %2457 = vmatpush2.msra.mxu0 0.0
  %2458 = vmatprep.mubr.f32.mxu0 0.0
  %2459 = vmatmul.mubr.f32.gmra.mxu0 %v2392
  %v2460 = vpop.f32.mrf.mxu0
  %v2461 = vadd.f32 0.0, %v2460
  %v2462 = vpop.f32.mrf.mxu0
  %2463 = vdwg.mxu0
  %2464 = vmatprep.subr.mxu0 0.0
  %2465 = vmatpush1.msra.mxu0 0.0
  %2466 = vmatprep.subr.mxu0 0.0
  %2467 = vmatpush1.msra.mxu0 0.0
  %2468 = vmatprep.subr.mxu0 0.0
  %2469 = vmatpush1.msra.mxu0 0.0
  %2470 = vmatprep.subr.mxu0 0.0
  %2471 = vmatpush1.msra.mxu0 0.0
  %2472 = vmatprep.subr.mxu0 0.0
  %2473 = vmatpush1.msra.mxu0 0.0
  %2474 = vmatprep.subr.mxu0 0.0
  %2475 = vmatpush1.msra.mxu0 0.0
  %2476 = vmatprep.subr.mxu0 0.0
  %2477 = vmatpush1.msra.mxu0 0.0
  %2478 = vmatprep.subr.mxu0 0.0
  %2479 = vmatpush1.msra.mxu0 0.0
  %2480 = vmatprep.subr.mxu0 0.0
  %2481 = vmatpush1.msra.mxu0 0.0
  %2482 = vmatprep.subr.mxu0 0.0
  %2483 = vmatpush1.msra.mxu0 0.0
  %2484 = vmatprep.subr.mxu0 0.0
  %2485 = vmatpush1.msra.mxu0 0.0
  %2486 = vmatprep.subr.mxu0 0.0
  %2487 = vmatpush1.msra.mxu0 0.0
  %2488 = vmatprep.subr.mxu0 0.0
  %2489 = vmatpush1.msra.mxu0 0.0
  %2490 = vmatprep.subr.mxu0 0.0
  %2491 = vmatpush1.msra.mxu0 0.0
  %2492 = vmatprep.subr.mxu0 0.0
  %2493 = vmatpush1.msra.mxu0 %v682
  %2494 = vmatprep.subr.mxu0 0.0
  %2495 = vmatpush1.msra.mxu0 %v681
  %2496 = vmatprep.subr.mxu0 0.0
  %2497 = vmatpush2.msra.mxu0 0.0
  %2498 = vmatprep.subr.mxu0 0.0
  %2499 = vmatpush2.msra.mxu0 0.0
  %2500 = vmatprep.subr.mxu0 0.0
  %2501 = vmatpush2.msra.mxu0 0.0
  %2502 = vmatprep.subr.mxu0 0.0
  %2503 = vmatpush2.msra.mxu0 0.0
  %2504 = vmatprep.subr.mxu0 0.0
  %2505 = vmatpush2.msra.mxu0 0.0
  %2506 = vmatprep.subr.mxu0 0.0
  %2507 = vmatpush2.msra.mxu0 0.0
  %2508 = vmatprep.subr.mxu0 0.0
  %2509 = vmatpush2.msra.mxu0 0.0
  %2510 = vmatprep.subr.mxu0 0.0
  %2511 = vmatpush2.msra.mxu0 0.0
  %2512 = vmatprep.subr.mxu0 0.0
  %2513 = vmatpush2.msra.mxu0 0.0
  %2514 = vmatprep.subr.mxu0 0.0
  %2515 = vmatpush2.msra.mxu0 0.0
  %2516 = vmatprep.subr.mxu0 0.0
  %2517 = vmatpush2.msra.mxu0 0.0
  %2518 = vmatprep.subr.mxu0 0.0
  %2519 = vmatpush2.msra.mxu0 0.0
  %2520 = vmatprep.subr.mxu0 0.0
  %2521 = vmatpush2.msra.mxu0 0.0
  %2522 = vmatprep.subr.mxu0 0.0
  %2523 = vmatpush2.msra.mxu0 0.0
  %2524 = vmatprep.subr.mxu0 0.0
  %2525 = vmatpush2.msra.mxu0 0.0
  %2526 = vmatprep.subr.mxu0 0.0
  %2527 = vmatpush2.msra.mxu0 0.0
  %2528 = vmatprep.mubr.f32.mxu0 0.0
  %2529 = vmatmul.mubr.f32.gmra.mxu0 %v2392
  %v2530 = vpop.f32.mrf.mxu0
  %v2531 = vadd.f32 0.0, %v2530
  %v2532 = vpop.f32.mrf.mxu0
  %2533 = vdwg.mxu0
  %v2534 = vadd.f32 %v2386, %v2461
  %v2535 = vxor.u32 %v2534, 2147483648
  %v2536 = vmul.f32 %v2535, 1.442695
  %v2537 = vpow.pop %v2536
  %v2538 = vadd.f32 %v2537, 1.0
  %v2539 = vrcp.pop %v2538
  %v2540 = vmul.f32 1.0, %v2539
  %v2541 = vadd.f32 %v2388, %v2531
  %v2542 = vxor.u32 %v2541, 2147483648
  %v2543 = vmul.f32 %v2542, 1.442695
  %v2544 = vpow.pop %v2543
  %v2545 = vadd.f32 %v2544, 1.0
  %v2546 = vrcp.pop %v2545
  %v2547 = vmul.f32 1.0, %v2546
  %2548 = vmatprep.subr.mxu0 0.0
  %2549 = vmatpush1.msra.mxu0 0.0
  %2550 = vmatprep.subr.mxu0 0.0
  %2551 = vmatpush1.msra.mxu0 0.0
  %2552 = vmatprep.subr.mxu0 0.0
  %2553 = vmatpush1.msra.mxu0 0.0
  %2554 = vmatprep.subr.mxu0 0.0
  %2555 = vmatpush1.msra.mxu0 0.0
  %2556 = vmatprep.subr.mxu0 0.0
  %2557 = vmatpush1.msra.mxu0 0.0
  %2558 = vmatprep.subr.mxu0 0.0
  %2559 = vmatpush1.msra.mxu0 0.0
  %2560 = vmatprep.subr.mxu0 0.0
  %2561 = vmatpush1.msra.mxu0 0.0
  %2562 = vmatprep.subr.mxu0 0.0
  %2563 = vmatpush1.msra.mxu0 0.0
  %2564 = vmatprep.subr.mxu0 0.0
  %2565 = vmatpush1.msra.mxu0 0.0
  %2566 = vmatprep.subr.mxu0 0.0
  %2567 = vmatpush1.msra.mxu0 0.0
  %2568 = vmatprep.subr.mxu0 0.0
  %2569 = vmatpush1.msra.mxu0 0.0
  %2570 = vmatprep.subr.mxu0 0.0
  %2571 = vmatpush1.msra.mxu0 0.0
  %2572 = vmatprep.subr.mxu0 0.0
  %2573 = vmatpush1.msra.mxu0 0.0
  %2574 = vmatprep.subr.mxu0 0.0
  %2575 = vmatpush1.msra.mxu0 0.0
  %2576 = vmatprep.subr.mxu0 0.0
  %2577 = vmatpush1.msra.mxu0 %v685
  %2578 = vmatprep.subr.mxu0 0.0
  %2579 = vmatpush1.msra.mxu0 %v684
  %2580 = vmatprep.subr.mxu0 0.0
  %2581 = vmatpush2.msra.mxu0 0.0
  %2582 = vmatprep.subr.mxu0 0.0
  %2583 = vmatpush2.msra.mxu0 0.0
  %2584 = vmatprep.subr.mxu0 0.0
  %2585 = vmatpush2.msra.mxu0 0.0
  %2586 = vmatprep.subr.mxu0 0.0
  %2587 = vmatpush2.msra.mxu0 0.0
  %2588 = vmatprep.subr.mxu0 0.0
  %2589 = vmatpush2.msra.mxu0 0.0
  %2590 = vmatprep.subr.mxu0 0.0
  %2591 = vmatpush2.msra.mxu0 0.0
  %2592 = vmatprep.subr.mxu0 0.0
  %2593 = vmatpush2.msra.mxu0 0.0
  %2594 = vmatprep.subr.mxu0 0.0
  %2595 = vmatpush2.msra.mxu0 0.0
  %2596 = vmatprep.subr.mxu0 0.0
  %2597 = vmatpush2.msra.mxu0 0.0
  %2598 = vmatprep.subr.mxu0 0.0
  %2599 = vmatpush2.msra.mxu0 0.0
  %2600 = vmatprep.subr.mxu0 0.0
  %2601 = vmatpush2.msra.mxu0 0.0
  %2602 = vmatprep.subr.mxu0 0.0
  %2603 = vmatpush2.msra.mxu0 0.0
  %2604 = vmatprep.subr.mxu0 0.0
  %2605 = vmatpush2.msra.mxu0 0.0
  %2606 = vmatprep.subr.mxu0 0.0
  %2607 = vmatpush2.msra.mxu0 0.0
  %2608 = vmatprep.subr.mxu0 0.0
  %2609 = vmatpush2.msra.mxu0 0.0
  %2610 = vmatprep.subr.mxu0 0.0
  %2611 = vmatpush2.msra.mxu0 0.0
  %2612 = vmatprep.mubr.f32.mxu0 0.0
  %2613 = vmatmul.mubr.f32.gmra.mxu0 %v2392
  %v2614 = vpop.f32.mrf.mxu0
  %v2615 = vadd.f32 %v698, %v2614
  %v2616 = vpop.f32.mrf.mxu0
  %2617 = vdwg.mxu0
  %v2618 = vmul.f32 %v2540, %v2615
  %v2619 = vadd.f32 %v2390, %v2618
  %v2620 = vtanh.pop %v2619
  %v2621 = vsub.f32 1.0, %v2547
  %v2622 = vmul.f32 %v2621, %v2620
  %v2623 = vmul.f32 %v2547, %v2140
  %v2624 = vadd.f32 %v2622, %v2623
  %s2625 = scalar_lea.vmem [#allocation8], 24
  %2626 = vst.msk [vmem:[%s2625] sm:$0xff] %vm173, %v2384
  %s2627 = scalar_lea.vmem [#allocation9], 32
  %2628 = vst.msk [vmem:[%s2627] sm:$0xff] %vm173, %v2624
  %s2629 = scalar_lea.vmem [#allocation2], 32
  %v2630 = vld [vmem:[%s2629] sm:$0xff]
  %s2631 = scalar_lea.vmem [#allocation3], 32
  %v2632 = vld [vmem:[%s2631] sm:$0xff]
  %s2633 = scalar_lea.vmem [#allocation4], 32
  %v2634 = vld [vmem:[%s2633] sm:$0xff]
  %v2636 = vsel %vm173, %v2384, 0
  %2638 = vmatprep.subr.mxu0 0.0
  %2639 = vmatpush1.msra.mxu0 0.0
  %2640 = vmatprep.subr.mxu0 0.0
  %2641 = vmatpush1.msra.mxu0 0.0
  %2642 = vmatprep.subr.mxu0 0.0
  %2643 = vmatpush1.msra.mxu0 0.0
  %2644 = vmatprep.subr.mxu0 0.0
  %2645 = vmatpush1.msra.mxu0 0.0
  %2646 = vmatprep.subr.mxu0 0.0
  %2647 = vmatpush1.msra.mxu0 0.0
  %2648 = vmatprep.subr.mxu0 0.0
  %2649 = vmatpush1.msra.mxu0 0.0
  %2650 = vmatprep.subr.mxu0 0.0
  %2651 = vmatpush1.msra.mxu0 0.0
  %2652 = vmatprep.subr.mxu0 0.0
  %2653 = vmatpush1.msra.mxu0 0.0
  %2654 = vmatprep.subr.mxu0 0.0
  %2655 = vmatpush1.msra.mxu0 0.0
  %2656 = vmatprep.subr.mxu0 0.0
  %2657 = vmatpush1.msra.mxu0 0.0
  %2658 = vmatprep.subr.mxu0 0.0
  %2659 = vmatpush1.msra.mxu0 0.0
  %2660 = vmatprep.subr.mxu0 0.0
  %2661 = vmatpush1.msra.mxu0 0.0
  %2662 = vmatprep.subr.mxu0 0.0
  %2663 = vmatpush1.msra.mxu0 0.0
  %2664 = vmatprep.subr.mxu0 0.0
  %2665 = vmatpush1.msra.mxu0 0.0
  %2666 = vmatprep.subr.mxu0 0.0
  %2667 = vmatpush1.msra.mxu0 %v671
  %2668 = vmatprep.subr.mxu0 0.0
  %2669 = vmatpush1.msra.mxu0 %v670
  %2670 = vmatprep.subr.mxu0 0.0
  %2671 = vmatpush2.msra.mxu0 0.0
  %2672 = vmatprep.subr.mxu0 0.0
  %2673 = vmatpush2.msra.mxu0 0.0
  %2674 = vmatprep.subr.mxu0 0.0
  %2675 = vmatpush2.msra.mxu0 0.0
  %2676 = vmatprep.subr.mxu0 0.0
  %2677 = vmatpush2.msra.mxu0 0.0
  %2678 = vmatprep.subr.mxu0 0.0
  %2679 = vmatpush2.msra.mxu0 0.0
  %2680 = vmatprep.subr.mxu0 0.0
  %2681 = vmatpush2.msra.mxu0 0.0
  %2682 = vmatprep.subr.mxu0 0.0
  %2683 = vmatpush2.msra.mxu0 0.0
  %2684 = vmatprep.subr.mxu0 0.0
  %2685 = vmatpush2.msra.mxu0 0.0
  %2686 = vmatprep.subr.mxu0 0.0
  %2687 = vmatpush2.msra.mxu0 0.0
  %2688 = vmatprep.subr.mxu0 0.0
  %2689 = vmatpush2.msra.mxu0 0.0
  %2690 = vmatprep.subr.mxu0 0.0
  %2691 = vmatpush2.msra.mxu0 0.0
  %2692 = vmatprep.subr.mxu0 0.0
  %2693 = vmatpush2.msra.mxu0 0.0
  %2694 = vmatprep.subr.mxu0 0.0
  %2695 = vmatpush2.msra.mxu0 0.0
  %2696 = vmatprep.subr.mxu0 0.0
  %2697 = vmatpush2.msra.mxu0 0.0
  %2698 = vmatprep.subr.mxu0 0.0
  %2699 = vmatpush2.msra.mxu0 0.0
  %2700 = vmatprep.subr.mxu0 0.0
  %2701 = vmatpush2.msra.mxu0 0.0
  %2702 = vmatprep.mubr.f32.mxu0 0.0
  %2703 = vmatmul.mubr.f32.gmra.mxu0 %v2636
  %v2704 = vpop.f32.mrf.mxu0
  %v2705 = vadd.f32 0.0, %v2704
  %v2706 = vpop.f32.mrf.mxu0
  %2707 = vdwg.mxu0
  %2708 = vmatprep.subr.mxu0 0.0
  %2709 = vmatpush1.msra.mxu0 0.0
  %2710 = vmatprep.subr.mxu0 0.0
  %2711 = vmatpush1.msra.mxu0 0.0
  %2712 = vmatprep.subr.mxu0 0.0
  %2713 = vmatpush1.msra.mxu0 0.0
  %2714 = vmatprep.subr.mxu0 0.0
  %2715 = vmatpush1.msra.mxu0 0.0
  %2716 = vmatprep.subr.mxu0 0.0
  %2717 = vmatpush1.msra.mxu0 0.0
  %2718 = vmatprep.subr.mxu0 0.0
  %2719 = vmatpush1.msra.mxu0 0.0
  %2720 = vmatprep.subr.mxu0 0.0
  %2721 = vmatpush1.msra.mxu0 0.0
  %2722 = vmatprep.subr.mxu0 0.0
  %2723 = vmatpush1.msra.mxu0 0.0
  %2724 = vmatprep.subr.mxu0 0.0
  %2725 = vmatpush1.msra.mxu0 0.0
  %2726 = vmatprep.subr.mxu0 0.0
  %2727 = vmatpush1.msra.mxu0 0.0
  %2728 = vmatprep.subr.mxu0 0.0
  %2729 = vmatpush1.msra.mxu0 0.0
  %2730 = vmatprep.subr.mxu0 0.0
  %2731 = vmatpush1.msra.mxu0 0.0
  %2732 = vmatprep.subr.mxu0 0.0
  %2733 = vmatpush1.msra.mxu0 0.0
  %2734 = vmatprep.subr.mxu0 0.0
  %2735 = vmatpush1.msra.mxu0 0.0
  %2736 = vmatprep.subr.mxu0 0.0
  %2737 = vmatpush1.msra.mxu0 %v674
  %2738 = vmatprep.subr.mxu0 0.0
  %2739 = vmatpush1.msra.mxu0 %v673
  %2740 = vmatprep.subr.mxu0 0.0
  %2741 = vmatpush2.msra.mxu0 0.0
  %2742 = vmatprep.subr.mxu0 0.0
  %2743 = vmatpush2.msra.mxu0 0.0
  %2744 = vmatprep.subr.mxu0 0.0
  %2745 = vmatpush2.msra.mxu0 0.0
  %2746 = vmatprep.subr.mxu0 0.0
  %2747 = vmatpush2.msra.mxu0 0.0
  %2748 = vmatprep.subr.mxu0 0.0
  %2749 = vmatpush2.msra.mxu0 0.0
  %2750 = vmatprep.subr.mxu0 0.0
  %2751 = vmatpush2.msra.mxu0 0.0
  %2752 = vmatprep.subr.mxu0 0.0
  %2753 = vmatpush2.msra.mxu0 0.0
  %2754 = vmatprep.subr.mxu0 0.0
  %2755 = vmatpush2.msra.mxu0 0.0
  %2756 = vmatprep.subr.mxu0 0.0
  %2757 = vmatpush2.msra.mxu0 0.0
  %2758 = vmatprep.subr.mxu0 0.0
  %2759 = vmatpush2.msra.mxu0 0.0
  %2760 = vmatprep.subr.mxu0 0.0
  %2761 = vmatpush2.msra.mxu0 0.0
  %2762 = vmatprep.subr.mxu0 0.0
  %2763 = vmatpush2.msra.mxu0 0.0
  %2764 = vmatprep.subr.mxu0 0.0
  %2765 = vmatpush2.msra.mxu0 0.0
  %2766 = vmatprep.subr.mxu0 0.0
  %2767 = vmatpush2.msra.mxu0 0.0
  %2768 = vmatprep.subr.mxu0 0.0
  %2769 = vmatpush2.msra.mxu0 0.0
  %2770 = vmatprep.subr.mxu0 0.0
  %2771 = vmatpush2.msra.mxu0 0.0
  %2772 = vmatprep.mubr.f32.mxu0 0.0
  %2773 = vmatmul.mubr.f32.gmra.mxu0 %v2636
  %v2774 = vpop.f32.mrf.mxu0
  %v2775 = vadd.f32 0.0, %v2774
  %v2776 = vpop.f32.mrf.mxu0
  %2777 = vdwg.mxu0
  %v2778 = vadd.f32 %v2630, %v2705
  %v2779 = vxor.u32 %v2778, 2147483648
  %v2780 = vmul.f32 %v2779, 1.442695
  %v2781 = vpow.pop %v2780
  %v2782 = vadd.f32 %v2781, 1.0
  %v2783 = vrcp.pop %v2782
  %v2784 = vmul.f32 1.0, %v2783
  %v2785 = vadd.f32 %v2632, %v2775
  %v2786 = vxor.u32 %v2785, 2147483648
  %v2787 = vmul.f32 %v2786, 1.442695
  %v2788 = vpow.pop %v2787
  %v2789 = vadd.f32 %v2788, 1.0
  %v2790 = vrcp.pop %v2789
  %v2791 = vmul.f32 1.0, %v2790
  %2792 = vmatprep.subr.mxu0 0.0
  %2793 = vmatpush1.msra.mxu0 0.0
  %2794 = vmatprep.subr.mxu0 0.0
  %2795 = vmatpush1.msra.mxu0 0.0
  %2796 = vmatprep.subr.mxu0 0.0
  %2797 = vmatpush1.msra.mxu0 0.0
  %2798 = vmatprep.subr.mxu0 0.0
  %2799 = vmatpush1.msra.mxu0 0.0
  %2800 = vmatprep.subr.mxu0 0.0
  %2801 = vmatpush1.msra.mxu0 0.0
  %2802 = vmatprep.subr.mxu0 0.0
  %2803 = vmatpush1.msra.mxu0 0.0
  %2804 = vmatprep.subr.mxu0 0.0
  %2805 = vmatpush1.msra.mxu0 0.0
  %2806 = vmatprep.subr.mxu0 0.0
  %2807 = vmatpush1.msra.mxu0 0.0
  %2808 = vmatprep.subr.mxu0 0.0
  %2809 = vmatpush1.msra.mxu0 0.0
  %2810 = vmatprep.subr.mxu0 0.0
  %2811 = vmatpush1.msra.mxu0 0.0
  %2812 = vmatprep.subr.mxu0 0.0
  %2813 = vmatpush1.msra.mxu0 0.0
  %2814 = vmatprep.subr.mxu0 0.0
  %2815 = vmatpush1.msra.mxu0 0.0
  %2816 = vmatprep.subr.mxu0 0.0
  %2817 = vmatpush1.msra.mxu0 0.0
  %2818 = vmatprep.subr.mxu0 0.0
  %2819 = vmatpush1.msra.mxu0 0.0
  %2820 = vmatprep.subr.mxu0 0.0
  %2821 = vmatpush1.msra.mxu0 %v677
  %2822 = vmatprep.subr.mxu0 0.0
  %2823 = vmatpush1.msra.mxu0 %v676
  %2824 = vmatprep.subr.mxu0 0.0
  %2825 = vmatpush2.msra.mxu0 0.0
  %2826 = vmatprep.subr.mxu0 0.0
  %2827 = vmatpush2.msra.mxu0 0.0
  %2828 = vmatprep.subr.mxu0 0.0
  %2829 = vmatpush2.msra.mxu0 0.0
  %2830 = vmatprep.subr.mxu0 0.0
  %2831 = vmatpush2.msra.mxu0 0.0
  %2832 = vmatprep.subr.mxu0 0.0
  %2833 = vmatpush2.msra.mxu0 0.0
  %2834 = vmatprep.subr.mxu0 0.0
  %2835 = vmatpush2.msra.mxu0 0.0
  %2836 = vmatprep.subr.mxu0 0.0
  %2837 = vmatpush2.msra.mxu0 0.0
  %2838 = vmatprep.subr.mxu0 0.0
  %2839 = vmatpush2.msra.mxu0 0.0
  %2840 = vmatprep.subr.mxu0 0.0
  %2841 = vmatpush2.msra.mxu0 0.0
  %2842 = vmatprep.subr.mxu0 0.0
  %2843 = vmatpush2.msra.mxu0 0.0
  %2844 = vmatprep.subr.mxu0 0.0
  %2845 = vmatpush2.msra.mxu0 0.0
  %2846 = vmatprep.subr.mxu0 0.0
  %2847 = vmatpush2.msra.mxu0 0.0
  %2848 = vmatprep.subr.mxu0 0.0
  %2849 = vmatpush2.msra.mxu0 0.0
  %2850 = vmatprep.subr.mxu0 0.0
  %2851 = vmatpush2.msra.mxu0 0.0
  %2852 = vmatprep.subr.mxu0 0.0
  %2853 = vmatpush2.msra.mxu0 0.0
  %2854 = vmatprep.subr.mxu0 0.0
  %2855 = vmatpush2.msra.mxu0 0.0
  %2856 = vmatprep.mubr.f32.mxu0 0.0
  %2857 = vmatmul.mubr.f32.gmra.mxu0 %v2636
  %v2858 = vpop.f32.mrf.mxu0
  %v2859 = vadd.f32 %v691, %v2858
  %v2860 = vpop.f32.mrf.mxu0
  %2861 = vdwg.mxu0
  %v2862 = vmul.f32 %v2784, %v2859
  %v2863 = vadd.f32 %v2634, %v2862
  %v2864 = vtanh.pop %v2863
  %v2865 = vsub.f32 1.0, %v2791
  %v2866 = vmul.f32 %v2865, %v2864
  %v2867 = vmul.f32 %v2791, %v2384
  %v2868 = vadd.f32 %v2866, %v2867
  %s2869 = scalar_lea.vmem [#allocation5], 24
  %v2870 = vld [vmem:[%s2869] sm:$0xff]
  %s2871 = scalar_lea.vmem [#allocation6], 24
  %v2872 = vld [vmem:[%s2871] sm:$0xff]
  %s2873 = scalar_lea.vmem [#allocation7], 24
  %v2874 = vld [vmem:[%s2873] sm:$0xff]
  %v2876 = vsel %vm173, %v2624, 0
  %2878 = vmatprep.subr.mxu0 0.0
  %2879 = vmatpush1.msra.mxu0 0.0
  %2880 = vmatprep.subr.mxu0 0.0
  %2881 = vmatpush1.msra.mxu0 0.0
  %2882 = vmatprep.subr.mxu0 0.0
  %2883 = vmatpush1.msra.mxu0 0.0
  %2884 = vmatprep.subr.mxu0 0.0
  %2885 = vmatpush1.msra.mxu0 0.0
  %2886 = vmatprep.subr.mxu0 0.0
  %2887 = vmatpush1.msra.mxu0 0.0
  %2888 = vmatprep.subr.mxu0 0.0
  %2889 = vmatpush1.msra.mxu0 0.0
  %2890 = vmatprep.subr.mxu0 0.0
  %2891 = vmatpush1.msra.mxu0 0.0
  %2892 = vmatprep.subr.mxu0 0.0
  %2893 = vmatpush1.msra.mxu0 0.0
  %2894 = vmatprep.subr.mxu0 0.0
  %2895 = vmatpush1.msra.mxu0 0.0
  %2896 = vmatprep.subr.mxu0 0.0
  %2897 = vmatpush1.msra.mxu0 0.0
  %2898 = vmatprep.subr.mxu0 0.0
  %2899 = vmatpush1.msra.mxu0 0.0
  %2900 = vmatprep.subr.mxu0 0.0
  %2901 = vmatpush1.msra.mxu0 0.0
  %2902 = vmatprep.subr.mxu0 0.0
  %2903 = vmatpush1.msra.mxu0 0.0
  %2904 = vmatprep.subr.mxu0 0.0
  %2905 = vmatpush1.msra.mxu0 0.0
  %2906 = vmatprep.subr.mxu0 0.0
  %2907 = vmatpush1.msra.mxu0 %v679
  %2908 = vmatprep.subr.mxu0 0.0
  %2909 = vmatpush1.msra.mxu0 %v678
  %2910 = vmatprep.subr.mxu0 0.0
  %2911 = vmatpush2.msra.mxu0 0.0
  %2912 = vmatprep.subr.mxu0 0.0
  %2913 = vmatpush2.msra.mxu0 0.0
  %2914 = vmatprep.subr.mxu0 0.0
  %2915 = vmatpush2.msra.mxu0 0.0
  %2916 = vmatprep.subr.mxu0 0.0
  %2917 = vmatpush2.msra.mxu0 0.0
  %2918 = vmatprep.subr.mxu0 0.0
  %2919 = vmatpush2.msra.mxu0 0.0
  %2920 = vmatprep.subr.mxu0 0.0
  %2921 = vmatpush2.msra.mxu0 0.0
  %2922 = vmatprep.subr.mxu0 0.0
  %2923 = vmatpush2.msra.mxu0 0.0
  %2924 = vmatprep.subr.mxu0 0.0
  %2925 = vmatpush2.msra.mxu0 0.0
  %2926 = vmatprep.subr.mxu0 0.0
  %2927 = vmatpush2.msra.mxu0 0.0
  %2928 = vmatprep.subr.mxu0 0.0
  %2929 = vmatpush2.msra.mxu0 0.0
  %2930 = vmatprep.subr.mxu0 0.0
  %2931 = vmatpush2.msra.mxu0 0.0
  %2932 = vmatprep.subr.mxu0 0.0
  %2933 = vmatpush2.msra.mxu0 0.0
  %2934 = vmatprep.subr.mxu0 0.0
  %2935 = vmatpush2.msra.mxu0 0.0
  %2936 = vmatprep.subr.mxu0 0.0
  %2937 = vmatpush2.msra.mxu0 0.0
  %2938 = vmatprep.subr.mxu0 0.0
  %2939 = vmatpush2.msra.mxu0 0.0
  %2940 = vmatprep.subr.mxu0 0.0
  %2941 = vmatpush2.msra.mxu0 0.0
  %2942 = vmatprep.mubr.f32.mxu0 0.0
  %2943 = vmatmul.mubr.f32.gmra.mxu0 %v2876
  %v2944 = vpop.f32.mrf.mxu0
  %v2945 = vadd.f32 0.0, %v2944
  %v2946 = vpop.f32.mrf.mxu0
  %2947 = vdwg.mxu0
  %2948 = vmatprep.subr.mxu0 0.0
  %2949 = vmatpush1.msra.mxu0 0.0
  %2950 = vmatprep.subr.mxu0 0.0
  %2951 = vmatpush1.msra.mxu0 0.0
  %2952 = vmatprep.subr.mxu0 0.0
  %2953 = vmatpush1.msra.mxu0 0.0
  %2954 = vmatprep.subr.mxu0 0.0
  %2955 = vmatpush1.msra.mxu0 0.0
  %2956 = vmatprep.subr.mxu0 0.0
  %2957 = vmatpush1.msra.mxu0 0.0
  %2958 = vmatprep.subr.mxu0 0.0
  %2959 = vmatpush1.msra.mxu0 0.0
  %2960 = vmatprep.subr.mxu0 0.0
  %2961 = vmatpush1.msra.mxu0 0.0
  %2962 = vmatprep.subr.mxu0 0.0
  %2963 = vmatpush1.msra.mxu0 0.0
  %2964 = vmatprep.subr.mxu0 0.0
  %2965 = vmatpush1.msra.mxu0 0.0
  %2966 = vmatprep.subr.mxu0 0.0
  %2967 = vmatpush1.msra.mxu0 0.0
  %2968 = vmatprep.subr.mxu0 0.0
  %2969 = vmatpush1.msra.mxu0 0.0
  %2970 = vmatprep.subr.mxu0 0.0
  %2971 = vmatpush1.msra.mxu0 0.0
  %2972 = vmatprep.subr.mxu0 0.0
  %2973 = vmatpush1.msra.mxu0 0.0
  %2974 = vmatprep.subr.mxu0 0.0
  %2975 = vmatpush1.msra.mxu0 0.0
  %2976 = vmatprep.subr.mxu0 0.0
  %2977 = vmatpush1.msra.mxu0 %v682
  %2978 = vmatprep.subr.mxu0 0.0
  %2979 = vmatpush1.msra.mxu0 %v681
  %2980 = vmatprep.subr.mxu0 0.0
  %2981 = vmatpush2.msra.mxu0 0.0
  %2982 = vmatprep.subr.mxu0 0.0
  %2983 = vmatpush2.msra.mxu0 0.0
  %2984 = vmatprep.subr.mxu0 0.0
  %2985 = vmatpush2.msra.mxu0 0.0
  %2986 = vmatprep.subr.mxu0 0.0
  %2987 = vmatpush2.msra.mxu0 0.0
  %2988 = vmatprep.subr.mxu0 0.0
  %2989 = vmatpush2.msra.mxu0 0.0
  %2990 = vmatprep.subr.mxu0 0.0
  %2991 = vmatpush2.msra.mxu0 0.0
  %2992 = vmatprep.subr.mxu0 0.0
  %2993 = vmatpush2.msra.mxu0 0.0
  %2994 = vmatprep.subr.mxu0 0.0
  %2995 = vmatpush2.msra.mxu0 0.0
  %2996 = vmatprep.subr.mxu0 0.0
  %2997 = vmatpush2.msra.mxu0 0.0
  %2998 = vmatprep.subr.mxu0 0.0
  %2999 = vmatpush2.msra.mxu0 0.0
  %3000 = vmatprep.subr.mxu0 0.0
  %3001 = vmatpush2.msra.mxu0 0.0
  %3002 = vmatprep.subr.mxu0 0.0
  %3003 = vmatpush2.msra.mxu0 0.0
  %3004 = vmatprep.subr.mxu0 0.0
  %3005 = vmatpush2.msra.mxu0 0.0
  %3006 = vmatprep.subr.mxu0 0.0
  %3007 = vmatpush2.msra.mxu0 0.0
  %3008 = vmatprep.subr.mxu0 0.0
  %3009 = vmatpush2.msra.mxu0 0.0
  %3010 = vmatprep.subr.mxu0 0.0
  %3011 = vmatpush2.msra.mxu0 0.0
  %3012 = vmatprep.mubr.f32.mxu0 0.0
  %3013 = vmatmul.mubr.f32.gmra.mxu0 %v2876
  %v3014 = vpop.f32.mrf.mxu0
  %v3015 = vadd.f32 0.0, %v3014
  %v3016 = vpop.f32.mrf.mxu0
  %3017 = vdwg.mxu0
  %v3018 = vadd.f32 %v2870, %v2945
  %v3019 = vxor.u32 %v3018, 2147483648
  %v3020 = vmul.f32 %v3019, 1.442695
  %v3021 = vpow.pop %v3020
  %v3022 = vadd.f32 %v3021, 1.0
  %v3023 = vrcp.pop %v3022
  %v3024 = vmul.f32 1.0, %v3023
  %v3025 = vadd.f32 %v2872, %v3015
  %v3026 = vxor.u32 %v3025, 2147483648
  %v3027 = vmul.f32 %v3026, 1.442695
  %v3028 = vpow.pop %v3027
  %v3029 = vadd.f32 %v3028, 1.0
  %v3030 = vrcp.pop %v3029
  %v3031 = vmul.f32 1.0, %v3030
  %3032 = vmatprep.subr.mxu0 0.0
  %3033 = vmatpush1.msra.mxu0 0.0
  %3034 = vmatprep.subr.mxu0 0.0
  %3035 = vmatpush1.msra.mxu0 0.0
  %3036 = vmatprep.subr.mxu0 0.0
  %3037 = vmatpush1.msra.mxu0 0.0
  %3038 = vmatprep.subr.mxu0 0.0
  %3039 = vmatpush1.msra.mxu0 0.0
  %3040 = vmatprep.subr.mxu0 0.0
  %3041 = vmatpush1.msra.mxu0 0.0
  %3042 = vmatprep.subr.mxu0 0.0
  %3043 = vmatpush1.msra.mxu0 0.0
  %3044 = vmatprep.subr.mxu0 0.0
  %3045 = vmatpush1.msra.mxu0 0.0
  %3046 = vmatprep.subr.mxu0 0.0
  %3047 = vmatpush1.msra.mxu0 0.0
  %3048 = vmatprep.subr.mxu0 0.0
  %3049 = vmatpush1.msra.mxu0 0.0
  %3050 = vmatprep.subr.mxu0 0.0
  %3051 = vmatpush1.msra.mxu0 0.0
  %3052 = vmatprep.subr.mxu0 0.0
  %3053 = vmatpush1.msra.mxu0 0.0
  %3054 = vmatprep.subr.mxu0 0.0
  %3055 = vmatpush1.msra.mxu0 0.0
  %3056 = vmatprep.subr.mxu0 0.0
  %3057 = vmatpush1.msra.mxu0 0.0
  %3058 = vmatprep.subr.mxu0 0.0
  %3059 = vmatpush1.msra.mxu0 0.0
  %3060 = vmatprep.subr.mxu0 0.0
  %3061 = vmatpush1.msra.mxu0 %v685
  %3062 = vmatprep.subr.mxu0 0.0
  %3063 = vmatpush1.msra.mxu0 %v684
  %3064 = vmatprep.subr.mxu0 0.0
  %3065 = vmatpush2.msra.mxu0 0.0
  %3066 = vmatprep.subr.mxu0 0.0
  %3067 = vmatpush2.msra.mxu0 0.0
  %3068 = vmatprep.subr.mxu0 0.0
  %3069 = vmatpush2.msra.mxu0 0.0
  %3070 = vmatprep.subr.mxu0 0.0
  %3071 = vmatpush2.msra.mxu0 0.0
  %3072 = vmatprep.subr.mxu0 0.0
  %3073 = vmatpush2.msra.mxu0 0.0
  %3074 = vmatprep.subr.mxu0 0.0
  %3075 = vmatpush2.msra.mxu0 0.0
  %3076 = vmatprep.subr.mxu0 0.0
  %3077 = vmatpush2.msra.mxu0 0.0
  %3078 = vmatprep.subr.mxu0 0.0
  %3079 = vmatpush2.msra.mxu0 0.0
  %3080 = vmatprep.subr.mxu0 0.0
  %3081 = vmatpush2.msra.mxu0 0.0
  %3082 = vmatprep.subr.mxu0 0.0
  %3083 = vmatpush2.msra.mxu0 0.0
  %3084 = vmatprep.subr.mxu0 0.0
  %3085 = vmatpush2.msra.mxu0 0.0
  %3086 = vmatprep.subr.mxu0 0.0
  %3087 = vmatpush2.msra.mxu0 0.0
  %3088 = vmatprep.subr.mxu0 0.0
  %3089 = vmatpush2.msra.mxu0 0.0
  %3090 = vmatprep.subr.mxu0 0.0
  %3091 = vmatpush2.msra.mxu0 0.0
  %3092 = vmatprep.subr.mxu0 0.0
  %3093 = vmatpush2.msra.mxu0 0.0
  %3094 = vmatprep.subr.mxu0 0.0
  %3095 = vmatpush2.msra.mxu0 0.0
  %3096 = vmatprep.mubr.f32.mxu0 0.0
  %3097 = vmatmul.mubr.f32.gmra.mxu0 %v2876
  %v3098 = vpop.f32.mrf.mxu0
  %v3099 = vadd.f32 %v698, %v3098
  %v3100 = vpop.f32.mrf.mxu0
  %3101 = vdwg.mxu0
  %v3102 = vmul.f32 %v3024, %v3099
  %v3103 = vadd.f32 %v2874, %v3102
  %v3104 = vtanh.pop %v3103
  %v3105 = vsub.f32 1.0, %v3031
  %v3106 = vmul.f32 %v3105, %v3104
  %v3107 = vmul.f32 %v3031, %v2624
  %v3108 = vadd.f32 %v3106, %v3107
  %s3109 = scalar_lea.vmem [#allocation8], 32
  %3110 = vst.msk [vmem:[%s3109] sm:$0xff] %vm173, %v2868
  %s3111 = scalar_lea.vmem [#allocation9], 24
  %3112 = vst.msk [vmem:[%s3111] sm:$0xff] %vm173, %v3108
  %s3113 = scalar_lea.vmem [#allocation2], 40
  %v3114 = vld [vmem:[%s3113] sm:$0xff]
  %s3115 = scalar_lea.vmem [#allocation3], 40
  %v3116 = vld [vmem:[%s3115] sm:$0xff]
  %s3117 = scalar_lea.vmem [#allocation4], 40
  %v3118 = vld [vmem:[%s3117] sm:$0xff]
  %v3120 = vsel %vm173, %v2868, 0
  %3122 = vmatprep.subr.mxu0 0.0
  %3123 = vmatpush1.msra.mxu0 0.0
  %3124 = vmatprep.subr.mxu0 0.0
  %3125 = vmatpush1.msra.mxu0 0.0
  %3126 = vmatprep.subr.mxu0 0.0
  %3127 = vmatpush1.msra.mxu0 0.0
  %3128 = vmatprep.subr.mxu0 0.0
  %3129 = vmatpush1.msra.mxu0 0.0
  %3130 = vmatprep.subr.mxu0 0.0
  %3131 = vmatpush1.msra.mxu0 0.0
  %3132 = vmatprep.subr.mxu0 0.0
  %3133 = vmatpush1.msra.mxu0 0.0
  %3134 = vmatprep.subr.mxu0 0.0
  %3135 = vmatpush1.msra.mxu0 0.0
  %3136 = vmatprep.subr.mxu0 0.0
  %3137 = vmatpush1.msra.mxu0 0.0
  %3138 = vmatprep.subr.mxu0 0.0
  %3139 = vmatpush1.msra.mxu0 0.0
  %3140 = vmatprep.subr.mxu0 0.0
  %3141 = vmatpush1.msra.mxu0 0.0
  %3142 = vmatprep.subr.mxu0 0.0
  %3143 = vmatpush1.msra.mxu0 0.0
  %3144 = vmatprep.subr.mxu0 0.0
  %3145 = vmatpush1.msra.mxu0 0.0
  %3146 = vmatprep.subr.mxu0 0.0
  %3147 = vmatpush1.msra.mxu0 0.0
  %3148 = vmatprep.subr.mxu0 0.0
  %3149 = vmatpush1.msra.mxu0 0.0
  %3150 = vmatprep.subr.mxu0 0.0
  %3151 = vmatpush1.msra.mxu0 %v671
  %3152 = vmatprep.subr.mxu0 0.0
  %3153 = vmatpush1.msra.mxu0 %v670
  %3154 = vmatprep.subr.mxu0 0.0
  %3155 = vmatpush2.msra.mxu0 0.0
  %3156 = vmatprep.subr.mxu0 0.0
  %3157 = vmatpush2.msra.mxu0 0.0
  %3158 = vmatprep.subr.mxu0 0.0
  %3159 = vmatpush2.msra.mxu0 0.0
  %3160 = vmatprep.subr.mxu0 0.0
  %3161 = vmatpush2.msra.mxu0 0.0
  %3162 = vmatprep.subr.mxu0 0.0
  %3163 = vmatpush2.msra.mxu0 0.0
  %3164 = vmatprep.subr.mxu0 0.0
  %3165 = vmatpush2.msra.mxu0 0.0
  %3166 = vmatprep.subr.mxu0 0.0
  %3167 = vmatpush2.msra.mxu0 0.0
  %3168 = vmatprep.subr.mxu0 0.0
  %3169 = vmatpush2.msra.mxu0 0.0
  %3170 = vmatprep.subr.mxu0 0.0
  %3171 = vmatpush2.msra.mxu0 0.0
  %3172 = vmatprep.subr.mxu0 0.0
  %3173 = vmatpush2.msra.mxu0 0.0
  %3174 = vmatprep.subr.mxu0 0.0
  %3175 = vmatpush2.msra.mxu0 0.0
  %3176 = vmatprep.subr.mxu0 0.0
  %3177 = vmatpush2.msra.mxu0 0.0
  %3178 = vmatprep.subr.mxu0 0.0
  %3179 = vmatpush2.msra.mxu0 0.0
  %3180 = vmatprep.subr.mxu0 0.0
  %3181 = vmatpush2.msra.mxu0 0.0
  %3182 = vmatprep.subr.mxu0 0.0
  %3183 = vmatpush2.msra.mxu0 0.0
  %3184 = vmatprep.subr.mxu0 0.0
  %3185 = vmatpush2.msra.mxu0 0.0
  %3186 = vmatprep.mubr.f32.mxu0 0.0
  %3187 = vmatmul.mubr.f32.gmra.mxu0 %v3120
  %v3188 = vpop.f32.mrf.mxu0
  %v3189 = vadd.f32 0.0, %v3188
  %v3190 = vpop.f32.mrf.mxu0
  %3191 = vdwg.mxu0
  %3192 = vmatprep.subr.mxu0 0.0
  %3193 = vmatpush1.msra.mxu0 0.0
  %3194 = vmatprep.subr.mxu0 0.0
  %3195 = vmatpush1.msra.mxu0 0.0
  %3196 = vmatprep.subr.mxu0 0.0
  %3197 = vmatpush1.msra.mxu0 0.0
  %3198 = vmatprep.subr.mxu0 0.0
  %3199 = vmatpush1.msra.mxu0 0.0
  %3200 = vmatprep.subr.mxu0 0.0
  %3201 = vmatpush1.msra.mxu0 0.0
  %3202 = vmatprep.subr.mxu0 0.0
  %3203 = vmatpush1.msra.mxu0 0.0
  %3204 = vmatprep.subr.mxu0 0.0
  %3205 = vmatpush1.msra.mxu0 0.0
  %3206 = vmatprep.subr.mxu0 0.0
  %3207 = vmatpush1.msra.mxu0 0.0
  %3208 = vmatprep.subr.mxu0 0.0
  %3209 = vmatpush1.msra.mxu0 0.0
  %3210 = vmatprep.subr.mxu0 0.0
  %3211 = vmatpush1.msra.mxu0 0.0
  %3212 = vmatprep.subr.mxu0 0.0
  %3213 = vmatpush1.msra.mxu0 0.0
  %3214 = vmatprep.subr.mxu0 0.0
  %3215 = vmatpush1.msra.mxu0 0.0
  %3216 = vmatprep.subr.mxu0 0.0
  %3217 = vmatpush1.msra.mxu0 0.0
  %3218 = vmatprep.subr.mxu0 0.0
  %3219 = vmatpush1.msra.mxu0 0.0
  %3220 = vmatprep.subr.mxu0 0.0
  %3221 = vmatpush1.msra.mxu0 %v674
  %3222 = vmatprep.subr.mxu0 0.0
  %3223 = vmatpush1.msra.mxu0 %v673
  %3224 = vmatprep.subr.mxu0 0.0
  %3225 = vmatpush2.msra.mxu0 0.0
  %3226 = vmatprep.subr.mxu0 0.0
  %3227 = vmatpush2.msra.mxu0 0.0
  %3228 = vmatprep.subr.mxu0 0.0
  %3229 = vmatpush2.msra.mxu0 0.0
  %3230 = vmatprep.subr.mxu0 0.0
  %3231 = vmatpush2.msra.mxu0 0.0
  %3232 = vmatprep.subr.mxu0 0.0
  %3233 = vmatpush2.msra.mxu0 0.0
  %3234 = vmatprep.subr.mxu0 0.0
  %3235 = vmatpush2.msra.mxu0 0.0
  %3236 = vmatprep.subr.mxu0 0.0
  %3237 = vmatpush2.msra.mxu0 0.0
  %3238 = vmatprep.subr.mxu0 0.0
  %3239 = vmatpush2.msra.mxu0 0.0
  %3240 = vmatprep.subr.mxu0 0.0
  %3241 = vmatpush2.msra.mxu0 0.0
  %3242 = vmatprep.subr.mxu0 0.0
  %3243 = vmatpush2.msra.mxu0 0.0
  %3244 = vmatprep.subr.mxu0 0.0
  %3245 = vmatpush2.msra.mxu0 0.0
  %3246 = vmatprep.subr.mxu0 0.0
  %3247 = vmatpush2.msra.mxu0 0.0
  %3248 = vmatprep.subr.mxu0 0.0
  %3249 = vmatpush2.msra.mxu0 0.0
  %3250 = vmatprep.subr.mxu0 0.0
  %3251 = vmatpush2.msra.mxu0 0.0
  %3252 = vmatprep.subr.mxu0 0.0
  %3253 = vmatpush2.msra.mxu0 0.0
  %3254 = vmatprep.subr.mxu0 0.0
  %3255 = vmatpush2.msra.mxu0 0.0
  %3256 = vmatprep.mubr.f32.mxu0 0.0
  %3257 = vmatmul.mubr.f32.gmra.mxu0 %v3120
  %v3258 = vpop.f32.mrf.mxu0
  %v3259 = vadd.f32 0.0, %v3258
  %v3260 = vpop.f32.mrf.mxu0
  %3261 = vdwg.mxu0
  %v3262 = vadd.f32 %v3114, %v3189
  %v3263 = vxor.u32 %v3262, 2147483648
  %v3264 = vmul.f32 %v3263, 1.442695
  %v3265 = vpow.pop %v3264
  %v3266 = vadd.f32 %v3265, 1.0
  %v3267 = vrcp.pop %v3266
  %v3268 = vmul.f32 1.0, %v3267
  %v3269 = vadd.f32 %v3116, %v3259
  %v3270 = vxor.u32 %v3269, 2147483648
  %v3271 = vmul.f32 %v3270, 1.442695
  %v3272 = vpow.pop %v3271
  %v3273 = vadd.f32 %v3272, 1.0
  %v3274 = vrcp.pop %v3273
  %v3275 = vmul.f32 1.0, %v3274
  %3276 = vmatprep.subr.mxu0 0.0
  %3277 = vmatpush1.msra.mxu0 0.0
  %3278 = vmatprep.subr.mxu0 0.0
  %3279 = vmatpush1.msra.mxu0 0.0
  %3280 = vmatprep.subr.mxu0 0.0
  %3281 = vmatpush1.msra.mxu0 0.0
  %3282 = vmatprep.subr.mxu0 0.0
  %3283 = vmatpush1.msra.mxu0 0.0
  %3284 = vmatprep.subr.mxu0 0.0
  %3285 = vmatpush1.msra.mxu0 0.0
  %3286 = vmatprep.subr.mxu0 0.0
  %3287 = vmatpush1.msra.mxu0 0.0
  %3288 = vmatprep.subr.mxu0 0.0
  %3289 = vmatpush1.msra.mxu0 0.0
  %3290 = vmatprep.subr.mxu0 0.0
  %3291 = vmatpush1.msra.mxu0 0.0
  %3292 = vmatprep.subr.mxu0 0.0
  %3293 = vmatpush1.msra.mxu0 0.0
  %3294 = vmatprep.subr.mxu0 0.0
  %3295 = vmatpush1.msra.mxu0 0.0
  %3296 = vmatprep.subr.mxu0 0.0
  %3297 = vmatpush1.msra.mxu0 0.0
  %3298 = vmatprep.subr.mxu0 0.0
  %3299 = vmatpush1.msra.mxu0 0.0
  %3300 = vmatprep.subr.mxu0 0.0
  %3301 = vmatpush1.msra.mxu0 0.0
  %3302 = vmatprep.subr.mxu0 0.0
  %3303 = vmatpush1.msra.mxu0 0.0
  %3304 = vmatprep.subr.mxu0 0.0
  %3305 = vmatpush1.msra.mxu0 %v677
  %3306 = vmatprep.subr.mxu0 0.0
  %3307 = vmatpush1.msra.mxu0 %v676
  %3308 = vmatprep.subr.mxu0 0.0
  %3309 = vmatpush2.msra.mxu0 0.0
  %3310 = vmatprep.subr.mxu0 0.0
  %3311 = vmatpush2.msra.mxu0 0.0
  %3312 = vmatprep.subr.mxu0 0.0
  %3313 = vmatpush2.msra.mxu0 0.0
  %3314 = vmatprep.subr.mxu0 0.0
  %3315 = vmatpush2.msra.mxu0 0.0
  %3316 = vmatprep.subr.mxu0 0.0
  %3317 = vmatpush2.msra.mxu0 0.0
  %3318 = vmatprep.subr.mxu0 0.0
  %3319 = vmatpush2.msra.mxu0 0.0
  %3320 = vmatprep.subr.mxu0 0.0
  %3321 = vmatpush2.msra.mxu0 0.0
  %3322 = vmatprep.subr.mxu0 0.0
  %3323 = vmatpush2.msra.mxu0 0.0
  %3324 = vmatprep.subr.mxu0 0.0
  %3325 = vmatpush2.msra.mxu0 0.0
  %3326 = vmatprep.subr.mxu0 0.0
  %3327 = vmatpush2.msra.mxu0 0.0
  %3328 = vmatprep.subr.mxu0 0.0
  %3329 = vmatpush2.msra.mxu0 0.0
  %3330 = vmatprep.subr.mxu0 0.0
  %3331 = vmatpush2.msra.mxu0 0.0
  %3332 = vmatprep.subr.mxu0 0.0
  %3333 = vmatpush2.msra.mxu0 0.0
  %3334 = vmatprep.subr.mxu0 0.0
  %3335 = vmatpush2.msra.mxu0 0.0
  %3336 = vmatprep.subr.mxu0 0.0
  %3337 = vmatpush2.msra.mxu0 0.0
  %3338 = vmatprep.subr.mxu0 0.0
  %3339 = vmatpush2.msra.mxu0 0.0
  %3340 = vmatprep.mubr.f32.mxu0 0.0
  %3341 = vmatmul.mubr.f32.gmra.mxu0 %v3120
  %v3342 = vpop.f32.mrf.mxu0
  %v3343 = vadd.f32 %v691, %v3342
  %v3344 = vpop.f32.mrf.mxu0
  %3345 = vdwg.mxu0
  %v3346 = vmul.f32 %v3268, %v3343
  %v3347 = vadd.f32 %v3118, %v3346
  %v3348 = vtanh.pop %v3347
  %v3349 = vsub.f32 1.0, %v3275
  %v3350 = vmul.f32 %v3349, %v3348
  %v3351 = vmul.f32 %v3275, %v2868
  %v3352 = vadd.f32 %v3350, %v3351
  %s3353 = scalar_lea.vmem [#allocation5], 16
  %v3354 = vld [vmem:[%s3353] sm:$0xff]
  %s3355 = scalar_lea.vmem [#allocation6], 16
  %v3356 = vld [vmem:[%s3355] sm:$0xff]
  %s3357 = scalar_lea.vmem [#allocation7], 16
  %v3358 = vld [vmem:[%s3357] sm:$0xff]
  %v3360 = vsel %vm173, %v3108, 0
  %3362 = vmatprep.subr.mxu0 0.0
  %3363 = vmatpush1.msra.mxu0 0.0
  %3364 = vmatprep.subr.mxu0 0.0
  %3365 = vmatpush1.msra.mxu0 0.0
  %3366 = vmatprep.subr.mxu0 0.0
  %3367 = vmatpush1.msra.mxu0 0.0
  %3368 = vmatprep.subr.mxu0 0.0
  %3369 = vmatpush1.msra.mxu0 0.0
  %3370 = vmatprep.subr.mxu0 0.0
  %3371 = vmatpush1.msra.mxu0 0.0
  %3372 = vmatprep.subr.mxu0 0.0
  %3373 = vmatpush1.msra.mxu0 0.0
  %3374 = vmatprep.subr.mxu0 0.0
  %3375 = vmatpush1.msra.mxu0 0.0
  %3376 = vmatprep.subr.mxu0 0.0
  %3377 = vmatpush1.msra.mxu0 0.0
  %3378 = vmatprep.subr.mxu0 0.0
  %3379 = vmatpush1.msra.mxu0 0.0
  %3380 = vmatprep.subr.mxu0 0.0
  %3381 = vmatpush1.msra.mxu0 0.0
  %3382 = vmatprep.subr.mxu0 0.0
  %3383 = vmatpush1.msra.mxu0 0.0
  %3384 = vmatprep.subr.mxu0 0.0
  %3385 = vmatpush1.msra.mxu0 0.0
  %3386 = vmatprep.subr.mxu0 0.0
  %3387 = vmatpush1.msra.mxu0 0.0
  %3388 = vmatprep.subr.mxu0 0.0
  %3389 = vmatpush1.msra.mxu0 0.0
  %3390 = vmatprep.subr.mxu0 0.0
  %3391 = vmatpush1.msra.mxu0 %v679
  %3392 = vmatprep.subr.mxu0 0.0
  %3393 = vmatpush1.msra.mxu0 %v678
  %3394 = vmatprep.subr.mxu0 0.0
  %3395 = vmatpush2.msra.mxu0 0.0
  %3396 = vmatprep.subr.mxu0 0.0
  %3397 = vmatpush2.msra.mxu0 0.0
  %3398 = vmatprep.subr.mxu0 0.0
  %3399 = vmatpush2.msra.mxu0 0.0
  %3400 = vmatprep.subr.mxu0 0.0
  %3401 = vmatpush2.msra.mxu0 0.0
  %3402 = vmatprep.subr.mxu0 0.0
  %3403 = vmatpush2.msra.mxu0 0.0
  %3404 = vmatprep.subr.mxu0 0.0
  %3405 = vmatpush2.msra.mxu0 0.0
  %3406 = vmatprep.subr.mxu0 0.0
  %3407 = vmatpush2.msra.mxu0 0.0
  %3408 = vmatprep.subr.mxu0 0.0
  %3409 = vmatpush2.msra.mxu0 0.0
  %3410 = vmatprep.subr.mxu0 0.0
  %3411 = vmatpush2.msra.mxu0 0.0
  %3412 = vmatprep.subr.mxu0 0.0
  %3413 = vmatpush2.msra.mxu0 0.0
  %3414 = vmatprep.subr.mxu0 0.0
  %3415 = vmatpush2.msra.mxu0 0.0
  %3416 = vmatprep.subr.mxu0 0.0
  %3417 = vmatpush2.msra.mxu0 0.0
  %3418 = vmatprep.subr.mxu0 0.0
  %3419 = vmatpush2.msra.mxu0 0.0
  %3420 = vmatprep.subr.mxu0 0.0
  %3421 = vmatpush2.msra.mxu0 0.0
  %3422 = vmatprep.subr.mxu0 0.0
  %3423 = vmatpush2.msra.mxu0 0.0
  %3424 = vmatprep.subr.mxu0 0.0
  %3425 = vmatpush2.msra.mxu0 0.0
  %3426 = vmatprep.mubr.f32.mxu0 0.0
  %3427 = vmatmul.mubr.f32.gmra.mxu0 %v3360
  %v3428 = vpop.f32.mrf.mxu0
  %v3429 = vadd.f32 0.0, %v3428
  %v3430 = vpop.f32.mrf.mxu0
  %3431 = vdwg.mxu0
  %3432 = vmatprep.subr.mxu0 0.0
  %3433 = vmatpush1.msra.mxu0 0.0
  %3434 = vmatprep.subr.mxu0 0.0
  %3435 = vmatpush1.msra.mxu0 0.0
  %3436 = vmatprep.subr.mxu0 0.0
  %3437 = vmatpush1.msra.mxu0 0.0
  %3438 = vmatprep.subr.mxu0 0.0
  %3439 = vmatpush1.msra.mxu0 0.0
  %3440 = vmatprep.subr.mxu0 0.0
  %3441 = vmatpush1.msra.mxu0 0.0
  %3442 = vmatprep.subr.mxu0 0.0
  %3443 = vmatpush1.msra.mxu0 0.0
  %3444 = vmatprep.subr.mxu0 0.0
  %3445 = vmatpush1.msra.mxu0 0.0
  %3446 = vmatprep.subr.mxu0 0.0
  %3447 = vmatpush1.msra.mxu0 0.0
  %3448 = vmatprep.subr.mxu0 0.0
  %3449 = vmatpush1.msra.mxu0 0.0
  %3450 = vmatprep.subr.mxu0 0.0
  %3451 = vmatpush1.msra.mxu0 0.0
  %3452 = vmatprep.subr.mxu0 0.0
  %3453 = vmatpush1.msra.mxu0 0.0
  %3454 = vmatprep.subr.mxu0 0.0
  %3455 = vmatpush1.msra.mxu0 0.0
  %3456 = vmatprep.subr.mxu0 0.0
  %3457 = vmatpush1.msra.mxu0 0.0
  %3458 = vmatprep.subr.mxu0 0.0
  %3459 = vmatpush1.msra.mxu0 0.0
  %3460 = vmatprep.subr.mxu0 0.0
  %3461 = vmatpush1.msra.mxu0 %v682
  %3462 = vmatprep.subr.mxu0 0.0
  %3463 = vmatpush1.msra.mxu0 %v681
  %3464 = vmatprep.subr.mxu0 0.0
  %3465 = vmatpush2.msra.mxu0 0.0
  %3466 = vmatprep.subr.mxu0 0.0
  %3467 = vmatpush2.msra.mxu0 0.0
  %3468 = vmatprep.subr.mxu0 0.0
  %3469 = vmatpush2.msra.mxu0 0.0
  %3470 = vmatprep.subr.mxu0 0.0
  %3471 = vmatpush2.msra.mxu0 0.0
  %3472 = vmatprep.subr.mxu0 0.0
  %3473 = vmatpush2.msra.mxu0 0.0
  %3474 = vmatprep.subr.mxu0 0.0
  %3475 = vmatpush2.msra.mxu0 0.0
  %3476 = vmatprep.subr.mxu0 0.0
  %3477 = vmatpush2.msra.mxu0 0.0
  %3478 = vmatprep.subr.mxu0 0.0
  %3479 = vmatpush2.msra.mxu0 0.0
  %3480 = vmatprep.subr.mxu0 0.0
  %3481 = vmatpush2.msra.mxu0 0.0
  %3482 = vmatprep.subr.mxu0 0.0
  %3483 = vmatpush2.msra.mxu0 0.0
  %3484 = vmatprep.subr.mxu0 0.0
  %3485 = vmatpush2.msra.mxu0 0.0
  %3486 = vmatprep.subr.mxu0 0.0
  %3487 = vmatpush2.msra.mxu0 0.0
  %3488 = vmatprep.subr.mxu0 0.0
  %3489 = vmatpush2.msra.mxu0 0.0
  %3490 = vmatprep.subr.mxu0 0.0
  %3491 = vmatpush2.msra.mxu0 0.0
  %3492 = vmatprep.subr.mxu0 0.0
  %3493 = vmatpush2.msra.mxu0 0.0
  %3494 = vmatprep.subr.mxu0 0.0
  %3495 = vmatpush2.msra.mxu0 0.0
  %3496 = vmatprep.mubr.f32.mxu0 0.0
  %3497 = vmatmul.mubr.f32.gmra.mxu0 %v3360
  %v3498 = vpop.f32.mrf.mxu0
  %v3499 = vadd.f32 0.0, %v3498
  %v3500 = vpop.f32.mrf.mxu0
  %3501 = vdwg.mxu0
  %v3502 = vadd.f32 %v3354, %v3429
  %v3503 = vxor.u32 %v3502, 2147483648
  %v3504 = vmul.f32 %v3503, 1.442695
  %v3505 = vpow.pop %v3504
  %v3506 = vadd.f32 %v3505, 1.0
  %v3507 = vrcp.pop %v3506
  %v3508 = vmul.f32 1.0, %v3507
  %v3509 = vadd.f32 %v3356, %v3499
  %v3510 = vxor.u32 %v3509, 2147483648
  %v3511 = vmul.f32 %v3510, 1.442695
  %v3512 = vpow.pop %v3511
  %v3513 = vadd.f32 %v3512, 1.0
  %v3514 = vrcp.pop %v3513
  %v3515 = vmul.f32 1.0, %v3514
  %3516 = vmatprep.subr.mxu0 0.0
  %3517 = vmatpush1.msra.mxu0 0.0
  %3518 = vmatprep.subr.mxu0 0.0
  %3519 = vmatpush1.msra.mxu0 0.0
  %3520 = vmatprep.subr.mxu0 0.0
  %3521 = vmatpush1.msra.mxu0 0.0
  %3522 = vmatprep.subr.mxu0 0.0
  %3523 = vmatpush1.msra.mxu0 0.0
  %3524 = vmatprep.subr.mxu0 0.0
  %3525 = vmatpush1.msra.mxu0 0.0
  %3526 = vmatprep.subr.mxu0 0.0
  %3527 = vmatpush1.msra.mxu0 0.0
  %3528 = vmatprep.subr.mxu0 0.0
  %3529 = vmatpush1.msra.mxu0 0.0
  %3530 = vmatprep.subr.mxu0 0.0
  %3531 = vmatpush1.msra.mxu0 0.0
  %3532 = vmatprep.subr.mxu0 0.0
  %3533 = vmatpush1.msra.mxu0 0.0
  %3534 = vmatprep.subr.mxu0 0.0
  %3535 = vmatpush1.msra.mxu0 0.0
  %3536 = vmatprep.subr.mxu0 0.0
  %3537 = vmatpush1.msra.mxu0 0.0
  %3538 = vmatprep.subr.mxu0 0.0
  %3539 = vmatpush1.msra.mxu0 0.0
  %3540 = vmatprep.subr.mxu0 0.0
  %3541 = vmatpush1.msra.mxu0 0.0
  %3542 = vmatprep.subr.mxu0 0.0
  %3543 = vmatpush1.msra.mxu0 0.0
  %3544 = vmatprep.subr.mxu0 0.0
  %3545 = vmatpush1.msra.mxu0 %v685
  %3546 = vmatprep.subr.mxu0 0.0
  %3547 = vmatpush1.msra.mxu0 %v684
  %3548 = vmatprep.subr.mxu0 0.0
  %3549 = vmatpush2.msra.mxu0 0.0
  %3550 = vmatprep.subr.mxu0 0.0
  %3551 = vmatpush2.msra.mxu0 0.0
  %3552 = vmatprep.subr.mxu0 0.0
  %3553 = vmatpush2.msra.mxu0 0.0
  %3554 = vmatprep.subr.mxu0 0.0
  %3555 = vmatpush2.msra.mxu0 0.0
  %3556 = vmatprep.subr.mxu0 0.0
  %3557 = vmatpush2.msra.mxu0 0.0
  %3558 = vmatprep.subr.mxu0 0.0
  %3559 = vmatpush2.msra.mxu0 0.0
  %3560 = vmatprep.subr.mxu0 0.0
  %3561 = vmatpush2.msra.mxu0 0.0
  %3562 = vmatprep.subr.mxu0 0.0
  %3563 = vmatpush2.msra.mxu0 0.0
  %3564 = vmatprep.subr.mxu0 0.0
  %3565 = vmatpush2.msra.mxu0 0.0
  %3566 = vmatprep.subr.mxu0 0.0
  %3567 = vmatpush2.msra.mxu0 0.0
  %3568 = vmatprep.subr.mxu0 0.0
  %3569 = vmatpush2.msra.mxu0 0.0
  %3570 = vmatprep.subr.mxu0 0.0
  %3571 = vmatpush2.msra.mxu0 0.0
  %3572 = vmatprep.subr.mxu0 0.0
  %3573 = vmatpush2.msra.mxu0 0.0
  %3574 = vmatprep.subr.mxu0 0.0
  %3575 = vmatpush2.msra.mxu0 0.0
  %3576 = vmatprep.subr.mxu0 0.0
  %3577 = vmatpush2.msra.mxu0 0.0
  %3578 = vmatprep.subr.mxu0 0.0
  %3579 = vmatpush2.msra.mxu0 0.0
  %3580 = vmatprep.mubr.f32.mxu0 0.0
  %3581 = vmatmul.mubr.f32.gmra.mxu0 %v3360
  %v3582 = vpop.f32.mrf.mxu0
  %v3583 = vadd.f32 %v698, %v3582
  %v3584 = vpop.f32.mrf.mxu0
  %3585 = vdwg.mxu0
  %v3586 = vmul.f32 %v3508, %v3583
  %v3587 = vadd.f32 %v3358, %v3586
  %v3588 = vtanh.pop %v3587
  %v3589 = vsub.f32 1.0, %v3515
  %v3590 = vmul.f32 %v3589, %v3588
  %v3591 = vmul.f32 %v3515, %v3108
  %v3592 = vadd.f32 %v3590, %v3591
  %s3593 = scalar_lea.vmem [#allocation8], 40
  %3594 = vst.msk [vmem:[%s3593] sm:$0xff] %vm173, %v3352
  %s3595 = scalar_lea.vmem [#allocation9], 16
  %3596 = vst.msk [vmem:[%s3595] sm:$0xff] %vm173, %v3592
  %s3597 = scalar_lea.vmem [#allocation2], 48
  %v3598 = vld [vmem:[%s3597] sm:$0xff]
  %s3599 = scalar_lea.vmem [#allocation3], 48
  %v3600 = vld [vmem:[%s3599] sm:$0xff]
  %s3601 = scalar_lea.vmem [#allocation4], 48
  %v3602 = vld [vmem:[%s3601] sm:$0xff]
  %v3604 = vsel %vm173, %v3352, 0
  %3606 = vmatprep.subr.mxu0 0.0
  %3607 = vmatpush1.msra.mxu0 0.0
  %3608 = vmatprep.subr.mxu0 0.0
  %3609 = vmatpush1.msra.mxu0 0.0
  %3610 = vmatprep.subr.mxu0 0.0
  %3611 = vmatpush1.msra.mxu0 0.0
  %3612 = vmatprep.subr.mxu0 0.0
  %3613 = vmatpush1.msra.mxu0 0.0
  %3614 = vmatprep.subr.mxu0 0.0
  %3615 = vmatpush1.msra.mxu0 0.0
  %3616 = vmatprep.subr.mxu0 0.0
  %3617 = vmatpush1.msra.mxu0 0.0
  %3618 = vmatprep.subr.mxu0 0.0
  %3619 = vmatpush1.msra.mxu0 0.0
  %3620 = vmatprep.subr.mxu0 0.0
  %3621 = vmatpush1.msra.mxu0 0.0
  %3622 = vmatprep.subr.mxu0 0.0
  %3623 = vmatpush1.msra.mxu0 0.0
  %3624 = vmatprep.subr.mxu0 0.0
  %3625 = vmatpush1.msra.mxu0 0.0
  %3626 = vmatprep.subr.mxu0 0.0
  %3627 = vmatpush1.msra.mxu0 0.0
  %3628 = vmatprep.subr.mxu0 0.0
  %3629 = vmatpush1.msra.mxu0 0.0
  %3630 = vmatprep.subr.mxu0 0.0
  %3631 = vmatpush1.msra.mxu0 0.0
  %3632 = vmatprep.subr.mxu0 0.0
  %3633 = vmatpush1.msra.mxu0 0.0
  %3634 = vmatprep.subr.mxu0 0.0
  %3635 = vmatpush1.msra.mxu0 %v671
  %3636 = vmatprep.subr.mxu0 0.0
  %3637 = vmatpush1.msra.mxu0 %v670
  %3638 = vmatprep.subr.mxu0 0.0
  %3639 = vmatpush2.msra.mxu0 0.0
  %3640 = vmatprep.subr.mxu0 0.0
  %3641 = vmatpush2.msra.mxu0 0.0
  %3642 = vmatprep.subr.mxu0 0.0
  %3643 = vmatpush2.msra.mxu0 0.0
  %3644 = vmatprep.subr.mxu0 0.0
  %3645 = vmatpush2.msra.mxu0 0.0
  %3646 = vmatprep.subr.mxu0 0.0
  %3647 = vmatpush2.msra.mxu0 0.0
  %3648 = vmatprep.subr.mxu0 0.0
  %3649 = vmatpush2.msra.mxu0 0.0
  %3650 = vmatprep.subr.mxu0 0.0
  %3651 = vmatpush2.msra.mxu0 0.0
  %3652 = vmatprep.subr.mxu0 0.0
  %3653 = vmatpush2.msra.mxu0 0.0
  %3654 = vmatprep.subr.mxu0 0.0
  %3655 = vmatpush2.msra.mxu0 0.0
  %3656 = vmatprep.subr.mxu0 0.0
  %3657 = vmatpush2.msra.mxu0 0.0
  %3658 = vmatprep.subr.mxu0 0.0
  %3659 = vmatpush2.msra.mxu0 0.0
  %3660 = vmatprep.subr.mxu0 0.0
  %3661 = vmatpush2.msra.mxu0 0.0
  %3662 = vmatprep.subr.mxu0 0.0
  %3663 = vmatpush2.msra.mxu0 0.0
  %3664 = vmatprep.subr.mxu0 0.0
  %3665 = vmatpush2.msra.mxu0 0.0
  %3666 = vmatprep.subr.mxu0 0.0
  %3667 = vmatpush2.msra.mxu0 0.0
  %3668 = vmatprep.subr.mxu0 0.0
  %3669 = vmatpush2.msra.mxu0 0.0
  %3670 = vmatprep.mubr.f32.mxu0 0.0
  %3671 = vmatmul.mubr.f32.gmra.mxu0 %v3604
  %v3672 = vpop.f32.mrf.mxu0
  %v3673 = vadd.f32 0.0, %v3672
  %v3674 = vpop.f32.mrf.mxu0
  %3675 = vdwg.mxu0
  %3676 = vmatprep.subr.mxu0 0.0
  %3677 = vmatpush1.msra.mxu0 0.0
  %3678 = vmatprep.subr.mxu0 0.0
  %3679 = vmatpush1.msra.mxu0 0.0
  %3680 = vmatprep.subr.mxu0 0.0
  %3681 = vmatpush1.msra.mxu0 0.0
  %3682 = vmatprep.subr.mxu0 0.0
  %3683 = vmatpush1.msra.mxu0 0.0
  %3684 = vmatprep.subr.mxu0 0.0
  %3685 = vmatpush1.msra.mxu0 0.0
  %3686 = vmatprep.subr.mxu0 0.0
  %3687 = vmatpush1.msra.mxu0 0.0
  %3688 = vmatprep.subr.mxu0 0.0
  %3689 = vmatpush1.msra.mxu0 0.0
  %3690 = vmatprep.subr.mxu0 0.0
  %3691 = vmatpush1.msra.mxu0 0.0
  %3692 = vmatprep.subr.mxu0 0.0
  %3693 = vmatpush1.msra.mxu0 0.0
  %3694 = vmatprep.subr.mxu0 0.0
  %3695 = vmatpush1.msra.mxu0 0.0
  %3696 = vmatprep.subr.mxu0 0.0
  %3697 = vmatpush1.msra.mxu0 0.0
  %3698 = vmatprep.subr.mxu0 0.0
  %3699 = vmatpush1.msra.mxu0 0.0
  %3700 = vmatprep.subr.mxu0 0.0
  %3701 = vmatpush1.msra.mxu0 0.0
  %3702 = vmatprep.subr.mxu0 0.0
  %3703 = vmatpush1.msra.mxu0 0.0
  %3704 = vmatprep.subr.mxu0 0.0
  %3705 = vmatpush1.msra.mxu0 %v674
  %3706 = vmatprep.subr.mxu0 0.0
  %3707 = vmatpush1.msra.mxu0 %v673
  %3708 = vmatprep.subr.mxu0 0.0
  %3709 = vmatpush2.msra.mxu0 0.0
  %3710 = vmatprep.subr.mxu0 0.0
  %3711 = vmatpush2.msra.mxu0 0.0
  %3712 = vmatprep.subr.mxu0 0.0
  %3713 = vmatpush2.msra.mxu0 0.0
  %3714 = vmatprep.subr.mxu0 0.0
  %3715 = vmatpush2.msra.mxu0 0.0
  %3716 = vmatprep.subr.mxu0 0.0
  %3717 = vmatpush2.msra.mxu0 0.0
  %3718 = vmatprep.subr.mxu0 0.0
  %3719 = vmatpush2.msra.mxu0 0.0
  %3720 = vmatprep.subr.mxu0 0.0
  %3721 = vmatpush2.msra.mxu0 0.0
  %3722 = vmatprep.subr.mxu0 0.0
  %3723 = vmatpush2.msra.mxu0 0.0
  %3724 = vmatprep.subr.mxu0 0.0
  %3725 = vmatpush2.msra.mxu0 0.0
  %3726 = vmatprep.subr.mxu0 0.0
  %3727 = vmatpush2.msra.mxu0 0.0
  %3728 = vmatprep.subr.mxu0 0.0
  %3729 = vmatpush2.msra.mxu0 0.0
  %3730 = vmatprep.subr.mxu0 0.0
  %3731 = vmatpush2.msra.mxu0 0.0
  %3732 = vmatprep.subr.mxu0 0.0
  %3733 = vmatpush2.msra.mxu0 0.0
  %3734 = vmatprep.subr.mxu0 0.0
  %3735 = vmatpush2.msra.mxu0 0.0
  %3736 = vmatprep.subr.mxu0 0.0
  %3737 = vmatpush2.msra.mxu0 0.0
  %3738 = vmatprep.subr.mxu0 0.0
  %3739 = vmatpush2.msra.mxu0 0.0
  %3740 = vmatprep.mubr.f32.mxu0 0.0
  %3741 = vmatmul.mubr.f32.gmra.mxu0 %v3604
  %v3742 = vpop.f32.mrf.mxu0
  %v3743 = vadd.f32 0.0, %v3742
  %v3744 = vpop.f32.mrf.mxu0
  %3745 = vdwg.mxu0
  %v3746 = vadd.f32 %v3598, %v3673
  %v3747 = vxor.u32 %v3746, 2147483648
  %v3748 = vmul.f32 %v3747, 1.442695
  %v3749 = vpow.pop %v3748
  %v3750 = vadd.f32 %v3749, 1.0
  %v3751 = vrcp.pop %v3750
  %v3752 = vmul.f32 1.0, %v3751
  %v3753 = vadd.f32 %v3600, %v3743
  %v3754 = vxor.u32 %v3753, 2147483648
  %v3755 = vmul.f32 %v3754, 1.442695
  %v3756 = vpow.pop %v3755
  %v3757 = vadd.f32 %v3756, 1.0
  %v3758 = vrcp.pop %v3757
  %v3759 = vmul.f32 1.0, %v3758
  %3760 = vmatprep.subr.mxu0 0.0
  %3761 = vmatpush1.msra.mxu0 0.0
  %3762 = vmatprep.subr.mxu0 0.0
  %3763 = vmatpush1.msra.mxu0 0.0
  %3764 = vmatprep.subr.mxu0 0.0
  %3765 = vmatpush1.msra.mxu0 0.0
  %3766 = vmatprep.subr.mxu0 0.0
  %3767 = vmatpush1.msra.mxu0 0.0
  %3768 = vmatprep.subr.mxu0 0.0
  %3769 = vmatpush1.msra.mxu0 0.0
  %3770 = vmatprep.subr.mxu0 0.0
  %3771 = vmatpush1.msra.mxu0 0.0
  %3772 = vmatprep.subr.mxu0 0.0
  %3773 = vmatpush1.msra.mxu0 0.0
  %3774 = vmatprep.subr.mxu0 0.0
  %3775 = vmatpush1.msra.mxu0 0.0
  %3776 = vmatprep.subr.mxu0 0.0
  %3777 = vmatpush1.msra.mxu0 0.0
  %3778 = vmatprep.subr.mxu0 0.0
  %3779 = vmatpush1.msra.mxu0 0.0
  %3780 = vmatprep.subr.mxu0 0.0
  %3781 = vmatpush1.msra.mxu0 0.0
  %3782 = vmatprep.subr.mxu0 0.0
  %3783 = vmatpush1.msra.mxu0 0.0
  %3784 = vmatprep.subr.mxu0 0.0
  %3785 = vmatpush1.msra.mxu0 0.0
  %3786 = vmatprep.subr.mxu0 0.0
  %3787 = vmatpush1.msra.mxu0 0.0
  %3788 = vmatprep.subr.mxu0 0.0
  %3789 = vmatpush1.msra.mxu0 %v677
  %3790 = vmatprep.subr.mxu0 0.0
  %3791 = vmatpush1.msra.mxu0 %v676
  %3792 = vmatprep.subr.mxu0 0.0
  %3793 = vmatpush2.msra.mxu0 0.0
  %3794 = vmatprep.subr.mxu0 0.0
  %3795 = vmatpush2.msra.mxu0 0.0
  %3796 = vmatprep.subr.mxu0 0.0
  %3797 = vmatpush2.msra.mxu0 0.0
  %3798 = vmatprep.subr.mxu0 0.0
  %3799 = vmatpush2.msra.mxu0 0.0
  %3800 = vmatprep.subr.mxu0 0.0
  %3801 = vmatpush2.msra.mxu0 0.0
  %3802 = vmatprep.subr.mxu0 0.0
  %3803 = vmatpush2.msra.mxu0 0.0
  %3804 = vmatprep.subr.mxu0 0.0
  %3805 = vmatpush2.msra.mxu0 0.0
  %3806 = vmatprep.subr.mxu0 0.0
  %3807 = vmatpush2.msra.mxu0 0.0
  %3808 = vmatprep.subr.mxu0 0.0
  %3809 = vmatpush2.msra.mxu0 0.0
  %3810 = vmatprep.subr.mxu0 0.0
  %3811 = vmatpush2.msra.mxu0 0.0
  %3812 = vmatprep.subr.mxu0 0.0
  %3813 = vmatpush2.msra.mxu0 0.0
  %3814 = vmatprep.subr.mxu0 0.0
  %3815 = vmatpush2.msra.mxu0 0.0
  %3816 = vmatprep.subr.mxu0 0.0
  %3817 = vmatpush2.msra.mxu0 0.0
  %3818 = vmatprep.subr.mxu0 0.0
  %3819 = vmatpush2.msra.mxu0 0.0
  %3820 = vmatprep.subr.mxu0 0.0
  %3821 = vmatpush2.msra.mxu0 0.0
  %3822 = vmatprep.subr.mxu0 0.0
  %3823 = vmatpush2.msra.mxu0 0.0
  %3824 = vmatprep.mubr.f32.mxu0 0.0
  %3825 = vmatmul.mubr.f32.gmra.mxu0 %v3604
  %v3826 = vpop.f32.mrf.mxu0
  %v3827 = vadd.f32 %v691, %v3826
  %v3828 = vpop.f32.mrf.mxu0
  %3829 = vdwg.mxu0
  %v3830 = vmul.f32 %v3752, %v3827
  %v3831 = vadd.f32 %v3602, %v3830
  %v3832 = vtanh.pop %v3831
  %v3833 = vsub.f32 1.0, %v3759
  %v3834 = vmul.f32 %v3833, %v3832
  %v3835 = vmul.f32 %v3759, %v3352
  %v3836 = vadd.f32 %v3834, %v3835
  %s3837 = scalar_lea.vmem [#allocation5], 8
  %v3838 = vld [vmem:[%s3837] sm:$0xff]
  %s3839 = scalar_lea.vmem [#allocation6], 8
  %v3840 = vld [vmem:[%s3839] sm:$0xff]
  %s3841 = scalar_lea.vmem [#allocation7], 8
  %v3842 = vld [vmem:[%s3841] sm:$0xff]
  %v3844 = vsel %vm173, %v3592, 0
  %3846 = vmatprep.subr.mxu0 0.0
  %3847 = vmatpush1.msra.mxu0 0.0
  %3848 = vmatprep.subr.mxu0 0.0
  %3849 = vmatpush1.msra.mxu0 0.0
  %3850 = vmatprep.subr.mxu0 0.0
  %3851 = vmatpush1.msra.mxu0 0.0
  %3852 = vmatprep.subr.mxu0 0.0
  %3853 = vmatpush1.msra.mxu0 0.0
  %3854 = vmatprep.subr.mxu0 0.0
  %3855 = vmatpush1.msra.mxu0 0.0
  %3856 = vmatprep.subr.mxu0 0.0
  %3857 = vmatpush1.msra.mxu0 0.0
  %3858 = vmatprep.subr.mxu0 0.0
  %3859 = vmatpush1.msra.mxu0 0.0
  %3860 = vmatprep.subr.mxu0 0.0
  %3861 = vmatpush1.msra.mxu0 0.0
  %3862 = vmatprep.subr.mxu0 0.0
  %3863 = vmatpush1.msra.mxu0 0.0
  %3864 = vmatprep.subr.mxu0 0.0
  %3865 = vmatpush1.msra.mxu0 0.0
  %3866 = vmatprep.subr.mxu0 0.0
  %3867 = vmatpush1.msra.mxu0 0.0
  %3868 = vmatprep.subr.mxu0 0.0
  %3869 = vmatpush1.msra.mxu0 0.0
  %3870 = vmatprep.subr.mxu0 0.0
  %3871 = vmatpush1.msra.mxu0 0.0
  %3872 = vmatprep.subr.mxu0 0.0
  %3873 = vmatpush1.msra.mxu0 0.0
  %3874 = vmatprep.subr.mxu0 0.0
  %3875 = vmatpush1.msra.mxu0 %v679
  %3876 = vmatprep.subr.mxu0 0.0
  %3877 = vmatpush1.msra.mxu0 %v678
  %3878 = vmatprep.subr.mxu0 0.0
  %3879 = vmatpush2.msra.mxu0 0.0
  %3880 = vmatprep.subr.mxu0 0.0
  %3881 = vmatpush2.msra.mxu0 0.0
  %3882 = vmatprep.subr.mxu0 0.0
  %3883 = vmatpush2.msra.mxu0 0.0
  %3884 = vmatprep.subr.mxu0 0.0
  %3885 = vmatpush2.msra.mxu0 0.0
  %3886 = vmatprep.subr.mxu0 0.0
  %3887 = vmatpush2.msra.mxu0 0.0
  %3888 = vmatprep.subr.mxu0 0.0
  %3889 = vmatpush2.msra.mxu0 0.0
  %3890 = vmatprep.subr.mxu0 0.0
  %3891 = vmatpush2.msra.mxu0 0.0
  %3892 = vmatprep.subr.mxu0 0.0
  %3893 = vmatpush2.msra.mxu0 0.0
  %3894 = vmatprep.subr.mxu0 0.0
  %3895 = vmatpush2.msra.mxu0 0.0
  %3896 = vmatprep.subr.mxu0 0.0
  %3897 = vmatpush2.msra.mxu0 0.0
  %3898 = vmatprep.subr.mxu0 0.0
  %3899 = vmatpush2.msra.mxu0 0.0
  %3900 = vmatprep.subr.mxu0 0.0
  %3901 = vmatpush2.msra.mxu0 0.0
  %3902 = vmatprep.subr.mxu0 0.0
  %3903 = vmatpush2.msra.mxu0 0.0
  %3904 = vmatprep.subr.mxu0 0.0
  %3905 = vmatpush2.msra.mxu0 0.0
  %3906 = vmatprep.subr.mxu0 0.0
  %3907 = vmatpush2.msra.mxu0 0.0
  %3908 = vmatprep.subr.mxu0 0.0
  %3909 = vmatpush2.msra.mxu0 0.0
  %3910 = vmatprep.mubr.f32.mxu0 0.0
  %3911 = vmatmul.mubr.f32.gmra.mxu0 %v3844
  %v3912 = vpop.f32.mrf.mxu0
  %v3913 = vadd.f32 0.0, %v3912
  %v3914 = vpop.f32.mrf.mxu0
  %3915 = vdwg.mxu0
  %3916 = vmatprep.subr.mxu0 0.0
  %3917 = vmatpush1.msra.mxu0 0.0
  %3918 = vmatprep.subr.mxu0 0.0
  %3919 = vmatpush1.msra.mxu0 0.0
  %3920 = vmatprep.subr.mxu0 0.0
  %3921 = vmatpush1.msra.mxu0 0.0
  %3922 = vmatprep.subr.mxu0 0.0
  %3923 = vmatpush1.msra.mxu0 0.0
  %3924 = vmatprep.subr.mxu0 0.0
  %3925 = vmatpush1.msra.mxu0 0.0
  %3926 = vmatprep.subr.mxu0 0.0
  %3927 = vmatpush1.msra.mxu0 0.0
  %3928 = vmatprep.subr.mxu0 0.0
  %3929 = vmatpush1.msra.mxu0 0.0
  %3930 = vmatprep.subr.mxu0 0.0
  %3931 = vmatpush1.msra.mxu0 0.0
  %3932 = vmatprep.subr.mxu0 0.0
  %3933 = vmatpush1.msra.mxu0 0.0
  %3934 = vmatprep.subr.mxu0 0.0
  %3935 = vmatpush1.msra.mxu0 0.0
  %3936 = vmatprep.subr.mxu0 0.0
  %3937 = vmatpush1.msra.mxu0 0.0
  %3938 = vmatprep.subr.mxu0 0.0
  %3939 = vmatpush1.msra.mxu0 0.0
  %3940 = vmatprep.subr.mxu0 0.0
  %3941 = vmatpush1.msra.mxu0 0.0
  %3942 = vmatprep.subr.mxu0 0.0
  %3943 = vmatpush1.msra.mxu0 0.0
  %3944 = vmatprep.subr.mxu0 0.0
  %3945 = vmatpush1.msra.mxu0 %v682
  %3946 = vmatprep.subr.mxu0 0.0
  %3947 = vmatpush1.msra.mxu0 %v681
  %3948 = vmatprep.subr.mxu0 0.0
  %3949 = vmatpush2.msra.mxu0 0.0
  %3950 = vmatprep.subr.mxu0 0.0
  %3951 = vmatpush2.msra.mxu0 0.0
  %3952 = vmatprep.subr.mxu0 0.0
  %3953 = vmatpush2.msra.mxu0 0.0
  %3954 = vmatprep.subr.mxu0 0.0
  %3955 = vmatpush2.msra.mxu0 0.0
  %3956 = vmatprep.subr.mxu0 0.0
  %3957 = vmatpush2.msra.mxu0 0.0
  %3958 = vmatprep.subr.mxu0 0.0
  %3959 = vmatpush2.msra.mxu0 0.0
  %3960 = vmatprep.subr.mxu0 0.0
  %3961 = vmatpush2.msra.mxu0 0.0
  %3962 = vmatprep.subr.mxu0 0.0
  %3963 = vmatpush2.msra.mxu0 0.0
  %3964 = vmatprep.subr.mxu0 0.0
  %3965 = vmatpush2.msra.mxu0 0.0
  %3966 = vmatprep.subr.mxu0 0.0
  %3967 = vmatpush2.msra.mxu0 0.0
  %3968 = vmatprep.subr.mxu0 0.0
  %3969 = vmatpush2.msra.mxu0 0.0
  %3970 = vmatprep.subr.mxu0 0.0
  %3971 = vmatpush2.msra.mxu0 0.0
  %3972 = vmatprep.subr.mxu0 0.0
  %3973 = vmatpush2.msra.mxu0 0.0
  %3974 = vmatprep.subr.mxu0 0.0
  %3975 = vmatpush2.msra.mxu0 0.0
  %3976 = vmatprep.subr.mxu0 0.0
  %3977 = vmatpush2.msra.mxu0 0.0
  %3978 = vmatprep.subr.mxu0 0.0
  %3979 = vmatpush2.msra.mxu0 0.0
  %3980 = vmatprep.mubr.f32.mxu0 0.0
  %3981 = vmatmul.mubr.f32.gmra.mxu0 %v3844
  %v3982 = vpop.f32.mrf.mxu0
  %v3983 = vadd.f32 0.0, %v3982
  %v3984 = vpop.f32.mrf.mxu0
  %3985 = vdwg.mxu0
  %v3986 = vadd.f32 %v3838, %v3913
  %v3987 = vxor.u32 %v3986, 2147483648
  %v3988 = vmul.f32 %v3987, 1.442695
  %v3989 = vpow.pop %v3988
  %v3990 = vadd.f32 %v3989, 1.0
  %v3991 = vrcp.pop %v3990
  %v3992 = vmul.f32 1.0, %v3991
  %v3993 = vadd.f32 %v3840, %v3983
  %v3994 = vxor.u32 %v3993, 2147483648
  %v3995 = vmul.f32 %v3994, 1.442695
  %v3996 = vpow.pop %v3995
  %v3997 = vadd.f32 %v3996, 1.0
  %v3998 = vrcp.pop %v3997
  %v3999 = vmul.f32 1.0, %v3998
  %4000 = vmatprep.subr.mxu0 0.0
  %4001 = vmatpush1.msra.mxu0 0.0
  %4002 = vmatprep.subr.mxu0 0.0
  %4003 = vmatpush1.msra.mxu0 0.0
  %4004 = vmatprep.subr.mxu0 0.0
  %4005 = vmatpush1.msra.mxu0 0.0
  %4006 = vmatprep.subr.mxu0 0.0
  %4007 = vmatpush1.msra.mxu0 0.0
  %4008 = vmatprep.subr.mxu0 0.0
  %4009 = vmatpush1.msra.mxu0 0.0
  %4010 = vmatprep.subr.mxu0 0.0
  %4011 = vmatpush1.msra.mxu0 0.0
  %4012 = vmatprep.subr.mxu0 0.0
  %4013 = vmatpush1.msra.mxu0 0.0
  %4014 = vmatprep.subr.mxu0 0.0
  %4015 = vmatpush1.msra.mxu0 0.0
  %4016 = vmatprep.subr.mxu0 0.0
  %4017 = vmatpush1.msra.mxu0 0.0
  %4018 = vmatprep.subr.mxu0 0.0
  %4019 = vmatpush1.msra.mxu0 0.0
  %4020 = vmatprep.subr.mxu0 0.0
  %4021 = vmatpush1.msra.mxu0 0.0
  %4022 = vmatprep.subr.mxu0 0.0
  %4023 = vmatpush1.msra.mxu0 0.0
  %4024 = vmatprep.subr.mxu0 0.0
  %4025 = vmatpush1.msra.mxu0 0.0
  %4026 = vmatprep.subr.mxu0 0.0
  %4027 = vmatpush1.msra.mxu0 0.0
  %4028 = vmatprep.subr.mxu0 0.0
  %4029 = vmatpush1.msra.mxu0 %v685
  %4030 = vmatprep.subr.mxu0 0.0
  %4031 = vmatpush1.msra.mxu0 %v684
  %4032 = vmatprep.subr.mxu0 0.0
  %4033 = vmatpush2.msra.mxu0 0.0
  %4034 = vmatprep.subr.mxu0 0.0
  %4035 = vmatpush2.msra.mxu0 0.0
  %4036 = vmatprep.subr.mxu0 0.0
  %4037 = vmatpush2.msra.mxu0 0.0
  %4038 = vmatprep.subr.mxu0 0.0
  %4039 = vmatpush2.msra.mxu0 0.0
  %4040 = vmatprep.subr.mxu0 0.0
  %4041 = vmatpush2.msra.mxu0 0.0
  %4042 = vmatprep.subr.mxu0 0.0
  %4043 = vmatpush2.msra.mxu0 0.0
  %4044 = vmatprep.subr.mxu0 0.0
  %4045 = vmatpush2.msra.mxu0 0.0
  %4046 = vmatprep.subr.mxu0 0.0
  %4047 = vmatpush2.msra.mxu0 0.0
  %4048 = vmatprep.subr.mxu0 0.0
  %4049 = vmatpush2.msra.mxu0 0.0
  %4050 = vmatprep.subr.mxu0 0.0
  %4051 = vmatpush2.msra.mxu0 0.0
  %4052 = vmatprep.subr.mxu0 0.0
  %4053 = vmatpush2.msra.mxu0 0.0
  %4054 = vmatprep.subr.mxu0 0.0
  %4055 = vmatpush2.msra.mxu0 0.0
  %4056 = vmatprep.subr.mxu0 0.0
  %4057 = vmatpush2.msra.mxu0 0.0
  %4058 = vmatprep.subr.mxu0 0.0
  %4059 = vmatpush2.msra.mxu0 0.0
  %4060 = vmatprep.subr.mxu0 0.0
  %4061 = vmatpush2.msra.mxu0 0.0
  %4062 = vmatprep.subr.mxu0 0.0
  %4063 = vmatpush2.msra.mxu0 0.0
  %4064 = vmatprep.mubr.f32.mxu0 0.0
  %4065 = vmatmul.mubr.f32.gmra.mxu0 %v3844
  %v4066 = vpop.f32.mrf.mxu0
  %v4067 = vadd.f32 %v698, %v4066
  %v4068 = vpop.f32.mrf.mxu0
  %4069 = vdwg.mxu0
  %v4070 = vmul.f32 %v3992, %v4067
  %v4071 = vadd.f32 %v3842, %v4070
  %v4072 = vtanh.pop %v4071
  %v4073 = vsub.f32 1.0, %v3999
  %v4074 = vmul.f32 %v4073, %v4072
  %v4075 = vmul.f32 %v3999, %v3592
  %v4076 = vadd.f32 %v4074, %v4075
  %s4077 = scalar_lea.vmem [#allocation8], 48
  %4078 = vst.msk [vmem:[%s4077] sm:$0xff] %vm173, %v3836
  %s4079 = scalar_lea.vmem [#allocation9], 8
  %4080 = vst.msk [vmem:[%s4079] sm:$0xff] %vm173, %v4076
  %s4081 = scalar_lea.vmem [#allocation2], 56
  %v4082 = vld [vmem:[%s4081] sm:$0xff]
  %s4083 = scalar_lea.vmem [#allocation3], 56
  %v4084 = vld [vmem:[%s4083] sm:$0xff]
  %s4085 = scalar_lea.vmem [#allocation4], 56
  %v4086 = vld [vmem:[%s4085] sm:$0xff]
  %v4088 = vsel %vm173, %v3836, 0
  %4090 = vmatprep.subr.mxu0 0.0
  %4091 = vmatpush1.msra.mxu0 0.0
  %4092 = vmatprep.subr.mxu0 0.0
  %4093 = vmatpush1.msra.mxu0 0.0
  %4094 = vmatprep.subr.mxu0 0.0
  %4095 = vmatpush1.msra.mxu0 0.0
  %4096 = vmatprep.subr.mxu0 0.0
  %4097 = vmatpush1.msra.mxu0 0.0
  %4098 = vmatprep.subr.mxu0 0.0
  %4099 = vmatpush1.msra.mxu0 0.0
  %4100 = vmatprep.subr.mxu0 0.0
  %4101 = vmatpush1.msra.mxu0 0.0
  %4102 = vmatprep.subr.mxu0 0.0
  %4103 = vmatpush1.msra.mxu0 0.0
  %4104 = vmatprep.subr.mxu0 0.0
  %4105 = vmatpush1.msra.mxu0 0.0
  %4106 = vmatprep.subr.mxu0 0.0
  %4107 = vmatpush1.msra.mxu0 0.0
  %4108 = vmatprep.subr.mxu0 0.0
  %4109 = vmatpush1.msra.mxu0 0.0
  %4110 = vmatprep.subr.mxu0 0.0
  %4111 = vmatpush1.msra.mxu0 0.0
  %4112 = vmatprep.subr.mxu0 0.0
  %4113 = vmatpush1.msra.mxu0 0.0
  %4114 = vmatprep.subr.mxu0 0.0
  %4115 = vmatpush1.msra.mxu0 0.0
  %4116 = vmatprep.subr.mxu0 0.0
  %4117 = vmatpush1.msra.mxu0 0.0
  %4118 = vmatprep.subr.mxu0 0.0
  %4119 = vmatpush1.msra.mxu0 %v671
  %4120 = vmatprep.subr.mxu0 0.0
  %4121 = vmatpush1.msra.mxu0 %v670
  %4122 = vmatprep.subr.mxu0 0.0
  %4123 = vmatpush2.msra.mxu0 0.0
  %4124 = vmatprep.subr.mxu0 0.0
  %4125 = vmatpush2.msra.mxu0 0.0
  %4126 = vmatprep.subr.mxu0 0.0
  %4127 = vmatpush2.msra.mxu0 0.0
  %4128 = vmatprep.subr.mxu0 0.0
  %4129 = vmatpush2.msra.mxu0 0.0
  %4130 = vmatprep.subr.mxu0 0.0
  %4131 = vmatpush2.msra.mxu0 0.0
  %4132 = vmatprep.subr.mxu0 0.0
  %4133 = vmatpush2.msra.mxu0 0.0
  %4134 = vmatprep.subr.mxu0 0.0
  %4135 = vmatpush2.msra.mxu0 0.0
  %4136 = vmatprep.subr.mxu0 0.0
  %4137 = vmatpush2.msra.mxu0 0.0
  %4138 = vmatprep.subr.mxu0 0.0
  %4139 = vmatpush2.msra.mxu0 0.0
  %4140 = vmatprep.subr.mxu0 0.0
  %4141 = vmatpush2.msra.mxu0 0.0
  %4142 = vmatprep.subr.mxu0 0.0
  %4143 = vmatpush2.msra.mxu0 0.0
  %4144 = vmatprep.subr.mxu0 0.0
  %4145 = vmatpush2.msra.mxu0 0.0
  %4146 = vmatprep.subr.mxu0 0.0
  %4147 = vmatpush2.msra.mxu0 0.0
  %4148 = vmatprep.subr.mxu0 0.0
  %4149 = vmatpush2.msra.mxu0 0.0
  %4150 = vmatprep.subr.mxu0 0.0
  %4151 = vmatpush2.msra.mxu0 0.0
  %4152 = vmatprep.subr.mxu0 0.0
  %4153 = vmatpush2.msra.mxu0 0.0
  %4154 = vmatprep.mubr.f32.mxu0 0.0
  %4155 = vmatmul.mubr.f32.gmra.mxu0 %v4088
  %v4156 = vpop.f32.mrf.mxu0
  %v4157 = vadd.f32 0.0, %v4156
  %v4158 = vpop.f32.mrf.mxu0
  %4159 = vdwg.mxu0
  %4160 = vmatprep.subr.mxu0 0.0
  %4161 = vmatpush1.msra.mxu0 0.0
  %4162 = vmatprep.subr.mxu0 0.0
  %4163 = vmatpush1.msra.mxu0 0.0
  %4164 = vmatprep.subr.mxu0 0.0
  %4165 = vmatpush1.msra.mxu0 0.0
  %4166 = vmatprep.subr.mxu0 0.0
  %4167 = vmatpush1.msra.mxu0 0.0
  %4168 = vmatprep.subr.mxu0 0.0
  %4169 = vmatpush1.msra.mxu0 0.0
  %4170 = vmatprep.subr.mxu0 0.0
  %4171 = vmatpush1.msra.mxu0 0.0
  %4172 = vmatprep.subr.mxu0 0.0
  %4173 = vmatpush1.msra.mxu0 0.0
  %4174 = vmatprep.subr.mxu0 0.0
  %4175 = vmatpush1.msra.mxu0 0.0
  %4176 = vmatprep.subr.mxu0 0.0
  %4177 = vmatpush1.msra.mxu0 0.0
  %4178 = vmatprep.subr.mxu0 0.0
  %4179 = vmatpush1.msra.mxu0 0.0
  %4180 = vmatprep.subr.mxu0 0.0
  %4181 = vmatpush1.msra.mxu0 0.0
  %4182 = vmatprep.subr.mxu0 0.0
  %4183 = vmatpush1.msra.mxu0 0.0
  %4184 = vmatprep.subr.mxu0 0.0
  %4185 = vmatpush1.msra.mxu0 0.0
  %4186 = vmatprep.subr.mxu0 0.0
  %4187 = vmatpush1.msra.mxu0 0.0
  %4188 = vmatprep.subr.mxu0 0.0
  %4189 = vmatpush1.msra.mxu0 %v674
  %4190 = vmatprep.subr.mxu0 0.0
  %4191 = vmatpush1.msra.mxu0 %v673
  %4192 = vmatprep.subr.mxu0 0.0
  %4193 = vmatpush2.msra.mxu0 0.0
  %4194 = vmatprep.subr.mxu0 0.0
  %4195 = vmatpush2.msra.mxu0 0.0
  %4196 = vmatprep.subr.mxu0 0.0
  %4197 = vmatpush2.msra.mxu0 0.0
  %4198 = vmatprep.subr.mxu0 0.0
  %4199 = vmatpush2.msra.mxu0 0.0
  %4200 = vmatprep.subr.mxu0 0.0
  %4201 = vmatpush2.msra.mxu0 0.0
  %4202 = vmatprep.subr.mxu0 0.0
  %4203 = vmatpush2.msra.mxu0 0.0
  %4204 = vmatprep.subr.mxu0 0.0
  %4205 = vmatpush2.msra.mxu0 0.0
  %4206 = vmatprep.subr.mxu0 0.0
  %4207 = vmatpush2.msra.mxu0 0.0
  %4208 = vmatprep.subr.mxu0 0.0
  %4209 = vmatpush2.msra.mxu0 0.0
  %4210 = vmatprep.subr.mxu0 0.0
  %4211 = vmatpush2.msra.mxu0 0.0
  %4212 = vmatprep.subr.mxu0 0.0
  %4213 = vmatpush2.msra.mxu0 0.0
  %4214 = vmatprep.subr.mxu0 0.0
  %4215 = vmatpush2.msra.mxu0 0.0
  %4216 = vmatprep.subr.mxu0 0.0
  %4217 = vmatpush2.msra.mxu0 0.0
  %4218 = vmatprep.subr.mxu0 0.0
  %4219 = vmatpush2.msra.mxu0 0.0
  %4220 = vmatprep.subr.mxu0 0.0
  %4221 = vmatpush2.msra.mxu0 0.0
  %4222 = vmatprep.subr.mxu0 0.0
  %4223 = vmatpush2.msra.mxu0 0.0
  %4224 = vmatprep.mubr.f32.mxu0 0.0
  %4225 = vmatmul.mubr.f32.gmra.mxu0 %v4088
  %v4226 = vpop.f32.mrf.mxu0
  %v4227 = vadd.f32 0.0, %v4226
  %v4228 = vpop.f32.mrf.mxu0
  %4229 = vdwg.mxu0
  %v4230 = vadd.f32 %v4082, %v4157
  %v4231 = vxor.u32 %v4230, 2147483648
  %v4232 = vmul.f32 %v4231, 1.442695
  %v4233 = vpow.pop %v4232
  %v4234 = vadd.f32 %v4233, 1.0
  %v4235 = vrcp.pop %v4234
  %v4236 = vmul.f32 1.0, %v4235
  %v4237 = vadd.f32 %v4084, %v4227
  %v4238 = vxor.u32 %v4237, 2147483648
  %v4239 = vmul.f32 %v4238, 1.442695
  %v4240 = vpow.pop %v4239
  %v4241 = vadd.f32 %v4240, 1.0
  %v4242 = vrcp.pop %v4241
  %v4243 = vmul.f32 1.0, %v4242
  %4244 = vmatprep.subr.mxu0 0.0
  %4245 = vmatpush1.msra.mxu0 0.0
  %4246 = vmatprep.subr.mxu0 0.0
  %4247 = vmatpush1.msra.mxu0 0.0
  %4248 = vmatprep.subr.mxu0 0.0
  %4249 = vmatpush1.msra.mxu0 0.0
  %4250 = vmatprep.subr.mxu0 0.0
  %4251 = vmatpush1.msra.mxu0 0.0
  %4252 = vmatprep.subr.mxu0 0.0
  %4253 = vmatpush1.msra.mxu0 0.0
  %4254 = vmatprep.subr.mxu0 0.0
  %4255 = vmatpush1.msra.mxu0 0.0
  %4256 = vmatprep.subr.mxu0 0.0
  %4257 = vmatpush1.msra.mxu0 0.0
  %4258 = vmatprep.subr.mxu0 0.0
  %4259 = vmatpush1.msra.mxu0 0.0
  %4260 = vmatprep.subr.mxu0 0.0
  %4261 = vmatpush1.msra.mxu0 0.0
  %4262 = vmatprep.subr.mxu0 0.0
  %4263 = vmatpush1.msra.mxu0 0.0
  %4264 = vmatprep.subr.mxu0 0.0
  %4265 = vmatpush1.msra.mxu0 0.0
  %4266 = vmatprep.subr.mxu0 0.0
  %4267 = vmatpush1.msra.mxu0 0.0
  %4268 = vmatprep.subr.mxu0 0.0
  %4269 = vmatpush1.msra.mxu0 0.0
  %4270 = vmatprep.subr.mxu0 0.0
  %4271 = vmatpush1.msra.mxu0 0.0
  %4272 = vmatprep.subr.mxu0 0.0
  %4273 = vmatpush1.msra.mxu0 %v677
  %4274 = vmatprep.subr.mxu0 0.0
  %4275 = vmatpush1.msra.mxu0 %v676
  %4276 = vmatprep.subr.mxu0 0.0
  %4277 = vmatpush2.msra.mxu0 0.0
  %4278 = vmatprep.subr.mxu0 0.0
  %4279 = vmatpush2.msra.mxu0 0.0
  %4280 = vmatprep.subr.mxu0 0.0
  %4281 = vmatpush2.msra.mxu0 0.0
  %4282 = vmatprep.subr.mxu0 0.0
  %4283 = vmatpush2.msra.mxu0 0.0
  %4284 = vmatprep.subr.mxu0 0.0
  %4285 = vmatpush2.msra.mxu0 0.0
  %4286 = vmatprep.subr.mxu0 0.0
  %4287 = vmatpush2.msra.mxu0 0.0
  %4288 = vmatprep.subr.mxu0 0.0
  %4289 = vmatpush2.msra.mxu0 0.0
  %4290 = vmatprep.subr.mxu0 0.0
  %4291 = vmatpush2.msra.mxu0 0.0
  %4292 = vmatprep.subr.mxu0 0.0
  %4293 = vmatpush2.msra.mxu0 0.0
  %4294 = vmatprep.subr.mxu0 0.0
  %4295 = vmatpush2.msra.mxu0 0.0
  %4296 = vmatprep.subr.mxu0 0.0
  %4297 = vmatpush2.msra.mxu0 0.0
  %4298 = vmatprep.subr.mxu0 0.0
  %4299 = vmatpush2.msra.mxu0 0.0
  %4300 = vmatprep.subr.mxu0 0.0
  %4301 = vmatpush2.msra.mxu0 0.0
  %4302 = vmatprep.subr.mxu0 0.0
  %4303 = vmatpush2.msra.mxu0 0.0
  %4304 = vmatprep.subr.mxu0 0.0
  %4305 = vmatpush2.msra.mxu0 0.0
  %4306 = vmatprep.subr.mxu0 0.0
  %4307 = vmatpush2.msra.mxu0 0.0
  %4308 = vmatprep.mubr.f32.mxu0 0.0
  %4309 = vmatmul.mubr.f32.gmra.mxu0 %v4088
  %v4310 = vpop.f32.mrf.mxu0
  %v4311 = vadd.f32 %v691, %v4310
  %v4312 = vpop.f32.mrf.mxu0
  %4313 = vdwg.mxu0
  %v4314 = vmul.f32 %v4236, %v4311
  %v4315 = vadd.f32 %v4086, %v4314
  %v4316 = vtanh.pop %v4315
  %v4317 = vsub.f32 1.0, %v4243
  %v4318 = vmul.f32 %v4317, %v4316
  %v4319 = vmul.f32 %v4243, %v3836
  %v4320 = vadd.f32 %v4318, %v4319
  %v4321 = vld [vmem:[#allocation5] sm:$0xff]
  %v4322 = vld [vmem:[#allocation6] sm:$0xff]
  %v4323 = vld [vmem:[#allocation7] sm:$0xff]
  %v4325 = vsel %vm173, %v4076, 0
  %4327 = vmatprep.subr.mxu0 0.0
  %4328 = vmatpush1.msra.mxu0 0.0
  %4329 = vmatprep.subr.mxu0 0.0
  %4330 = vmatpush1.msra.mxu0 0.0
  %4331 = vmatprep.subr.mxu0 0.0
  %4332 = vmatpush1.msra.mxu0 0.0
  %4333 = vmatprep.subr.mxu0 0.0
  %4334 = vmatpush1.msra.mxu0 0.0
  %4335 = vmatprep.subr.mxu0 0.0
  %4336 = vmatpush1.msra.mxu0 0.0
  %4337 = vmatprep.subr.mxu0 0.0
  %4338 = vmatpush1.msra.mxu0 0.0
  %4339 = vmatprep.subr.mxu0 0.0
  %4340 = vmatpush1.msra.mxu0 0.0
  %4341 = vmatprep.subr.mxu0 0.0
  %4342 = vmatpush1.msra.mxu0 0.0
  %4343 = vmatprep.subr.mxu0 0.0
  %4344 = vmatpush1.msra.mxu0 0.0
  %4345 = vmatprep.subr.mxu0 0.0
  %4346 = vmatpush1.msra.mxu0 0.0
  %4347 = vmatprep.subr.mxu0 0.0
  %4348 = vmatpush1.msra.mxu0 0.0
  %4349 = vmatprep.subr.mxu0 0.0
  %4350 = vmatpush1.msra.mxu0 0.0
  %4351 = vmatprep.subr.mxu0 0.0
  %4352 = vmatpush1.msra.mxu0 0.0
  %4353 = vmatprep.subr.mxu0 0.0
  %4354 = vmatpush1.msra.mxu0 0.0
  %4355 = vmatprep.subr.mxu0 0.0
  %4356 = vmatpush1.msra.mxu0 %v679
  %4357 = vmatprep.subr.mxu0 0.0
  %4358 = vmatpush1.msra.mxu0 %v678
  %4359 = vmatprep.subr.mxu0 0.0
  %4360 = vmatpush2.msra.mxu0 0.0
  %4361 = vmatprep.subr.mxu0 0.0
  %4362 = vmatpush2.msra.mxu0 0.0
  %4363 = vmatprep.subr.mxu0 0.0
  %4364 = vmatpush2.msra.mxu0 0.0
  %4365 = vmatprep.subr.mxu0 0.0
  %4366 = vmatpush2.msra.mxu0 0.0
  %4367 = vmatprep.subr.mxu0 0.0
  %4368 = vmatpush2.msra.mxu0 0.0
  %4369 = vmatprep.subr.mxu0 0.0
  %4370 = vmatpush2.msra.mxu0 0.0
  %4371 = vmatprep.subr.mxu0 0.0
  %4372 = vmatpush2.msra.mxu0 0.0
  %4373 = vmatprep.subr.mxu0 0.0
  %4374 = vmatpush2.msra.mxu0 0.0
  %4375 = vmatprep.subr.mxu0 0.0
  %4376 = vmatpush2.msra.mxu0 0.0
  %4377 = vmatprep.subr.mxu0 0.0
  %4378 = vmatpush2.msra.mxu0 0.0
  %4379 = vmatprep.subr.mxu0 0.0
  %4380 = vmatpush2.msra.mxu0 0.0
  %4381 = vmatprep.subr.mxu0 0.0
  %4382 = vmatpush2.msra.mxu0 0.0
  %4383 = vmatprep.subr.mxu0 0.0
  %4384 = vmatpush2.msra.mxu0 0.0
  %4385 = vmatprep.subr.mxu0 0.0
  %4386 = vmatpush2.msra.mxu0 0.0
  %4387 = vmatprep.subr.mxu0 0.0
  %4388 = vmatpush2.msra.mxu0 0.0
  %4389 = vmatprep.subr.mxu0 0.0
  %4390 = vmatpush2.msra.mxu0 0.0
  %4391 = vmatprep.mubr.f32.mxu0 0.0
  %4392 = vmatmul.mubr.f32.gmra.mxu0 %v4325
  %v4393 = vpop.f32.mrf.mxu0
  %v4394 = vadd.f32 0.0, %v4393
  %v4395 = vpop.f32.mrf.mxu0
  %4396 = vdwg.mxu0
  %4397 = vmatprep.subr.mxu0 0.0
  %4398 = vmatpush1.msra.mxu0 0.0
  %4399 = vmatprep.subr.mxu0 0.0
  %4400 = vmatpush1.msra.mxu0 0.0
  %4401 = vmatprep.subr.mxu0 0.0
  %4402 = vmatpush1.msra.mxu0 0.0
  %4403 = vmatprep.subr.mxu0 0.0
  %4404 = vmatpush1.msra.mxu0 0.0
  %4405 = vmatprep.subr.mxu0 0.0
  %4406 = vmatpush1.msra.mxu0 0.0
  %4407 = vmatprep.subr.mxu0 0.0
  %4408 = vmatpush1.msra.mxu0 0.0
  %4409 = vmatprep.subr.mxu0 0.0
  %4410 = vmatpush1.msra.mxu0 0.0
  %4411 = vmatprep.subr.mxu0 0.0
  %4412 = vmatpush1.msra.mxu0 0.0
  %4413 = vmatprep.subr.mxu0 0.0
  %4414 = vmatpush1.msra.mxu0 0.0
  %4415 = vmatprep.subr.mxu0 0.0
  %4416 = vmatpush1.msra.mxu0 0.0
  %4417 = vmatprep.subr.mxu0 0.0
  %4418 = vmatpush1.msra.mxu0 0.0
  %4419 = vmatprep.subr.mxu0 0.0
  %4420 = vmatpush1.msra.mxu0 0.0
  %4421 = vmatprep.subr.mxu0 0.0
  %4422 = vmatpush1.msra.mxu0 0.0
  %4423 = vmatprep.subr.mxu0 0.0
  %4424 = vmatpush1.msra.mxu0 0.0
  %4425 = vmatprep.subr.mxu0 0.0
  %4426 = vmatpush1.msra.mxu0 %v682
  %4427 = vmatprep.subr.mxu0 0.0
  %4428 = vmatpush1.msra.mxu0 %v681
  %4429 = vmatprep.subr.mxu0 0.0
  %4430 = vmatpush2.msra.mxu0 0.0
  %4431 = vmatprep.subr.mxu0 0.0
  %4432 = vmatpush2.msra.mxu0 0.0
  %4433 = vmatprep.subr.mxu0 0.0
  %4434 = vmatpush2.msra.mxu0 0.0
  %4435 = vmatprep.subr.mxu0 0.0
  %4436 = vmatpush2.msra.mxu0 0.0
  %4437 = vmatprep.subr.mxu0 0.0
  %4438 = vmatpush2.msra.mxu0 0.0
  %4439 = vmatprep.subr.mxu0 0.0
  %4440 = vmatpush2.msra.mxu0 0.0
  %4441 = vmatprep.subr.mxu0 0.0
  %4442 = vmatpush2.msra.mxu0 0.0
  %4443 = vmatprep.subr.mxu0 0.0
  %4444 = vmatpush2.msra.mxu0 0.0
  %4445 = vmatprep.subr.mxu0 0.0
  %4446 = vmatpush2.msra.mxu0 0.0
  %4447 = vmatprep.subr.mxu0 0.0
  %4448 = vmatpush2.msra.mxu0 0.0
  %4449 = vmatprep.subr.mxu0 0.0
  %4450 = vmatpush2.msra.mxu0 0.0
  %4451 = vmatprep.subr.mxu0 0.0
  %4452 = vmatpush2.msra.mxu0 0.0
  %4453 = vmatprep.subr.mxu0 0.0
  %4454 = vmatpush2.msra.mxu0 0.0
  %4455 = vmatprep.subr.mxu0 0.0
  %4456 = vmatpush2.msra.mxu0 0.0
  %4457 = vmatprep.subr.mxu0 0.0
  %4458 = vmatpush2.msra.mxu0 0.0
  %4459 = vmatprep.subr.mxu0 0.0
  %4460 = vmatpush2.msra.mxu0 0.0
  %4461 = vmatprep.mubr.f32.mxu0 0.0
  %4462 = vmatmul.mubr.f32.gmra.mxu0 %v4325
  %v4463 = vpop.f32.mrf.mxu0
  %v4464 = vadd.f32 0.0, %v4463
  %v4465 = vpop.f32.mrf.mxu0
  %4466 = vdwg.mxu0
  %v4467 = vadd.f32 %v4321, %v4394
  %v4468 = vxor.u32 %v4467, 2147483648
  %v4469 = vmul.f32 %v4468, 1.442695
  %v4470 = vpow.pop %v4469
  %v4471 = vadd.f32 %v4470, 1.0
  %v4472 = vrcp.pop %v4471
  %v4473 = vmul.f32 1.0, %v4472
  %v4474 = vadd.f32 %v4322, %v4464
  %v4475 = vxor.u32 %v4474, 2147483648
  %v4476 = vmul.f32 %v4475, 1.442695
  %v4477 = vpow.pop %v4476
  %v4478 = vadd.f32 %v4477, 1.0
  %v4479 = vrcp.pop %v4478
  %v4480 = vmul.f32 1.0, %v4479
  %4481 = vmatprep.subr.mxu0 0.0
  %4482 = vmatpush1.msra.mxu0 0.0
  %4483 = vmatprep.subr.mxu0 0.0
  %4484 = vmatpush1.msra.mxu0 0.0
  %4485 = vmatprep.subr.mxu0 0.0
  %4486 = vmatpush1.msra.mxu0 0.0
  %4487 = vmatprep.subr.mxu0 0.0
  %4488 = vmatpush1.msra.mxu0 0.0
  %4489 = vmatprep.subr.mxu0 0.0
  %4490 = vmatpush1.msra.mxu0 0.0
  %4491 = vmatprep.subr.mxu0 0.0
  %4492 = vmatpush1.msra.mxu0 0.0
  %4493 = vmatprep.subr.mxu0 0.0
  %4494 = vmatpush1.msra.mxu0 0.0
  %4495 = vmatprep.subr.mxu0 0.0
  %4496 = vmatpush1.msra.mxu0 0.0
  %4497 = vmatprep.subr.mxu0 0.0
  %4498 = vmatpush1.msra.mxu0 0.0
  %4499 = vmatprep.subr.mxu0 0.0
  %4500 = vmatpush1.msra.mxu0 0.0
  %4501 = vmatprep.subr.mxu0 0.0
  %4502 = vmatpush1.msra.mxu0 0.0
  %4503 = vmatprep.subr.mxu0 0.0
  %4504 = vmatpush1.msra.mxu0 0.0
  %4505 = vmatprep.subr.mxu0 0.0
  %4506 = vmatpush1.msra.mxu0 0.0
  %4507 = vmatprep.subr.mxu0 0.0
  %4508 = vmatpush1.msra.mxu0 0.0
  %4509 = vmatprep.subr.mxu0 0.0
  %4510 = vmatpush1.msra.mxu0 %v685
  %4511 = vmatprep.subr.mxu0 0.0
  %4512 = vmatpush1.msra.mxu0 %v684
  %4513 = vmatprep.subr.mxu0 0.0
  %4514 = vmatpush2.msra.mxu0 0.0
  %4515 = vmatprep.subr.mxu0 0.0
  %4516 = vmatpush2.msra.mxu0 0.0
  %4517 = vmatprep.subr.mxu0 0.0
  %4518 = vmatpush2.msra.mxu0 0.0
  %4519 = vmatprep.subr.mxu0 0.0
  %4520 = vmatpush2.msra.mxu0 0.0
  %4521 = vmatprep.subr.mxu0 0.0
  %4522 = vmatpush2.msra.mxu0 0.0
  %4523 = vmatprep.subr.mxu0 0.0
  %4524 = vmatpush2.msra.mxu0 0.0
  %4525 = vmatprep.subr.mxu0 0.0
  %4526 = vmatpush2.msra.mxu0 0.0
  %4527 = vmatprep.subr.mxu0 0.0
  %4528 = vmatpush2.msra.mxu0 0.0
  %4529 = vmatprep.subr.mxu0 0.0
  %4530 = vmatpush2.msra.mxu0 0.0
  %4531 = vmatprep.subr.mxu0 0.0
  %4532 = vmatpush2.msra.mxu0 0.0
  %4533 = vmatprep.subr.mxu0 0.0
  %4534 = vmatpush2.msra.mxu0 0.0
  %4535 = vmatprep.subr.mxu0 0.0
  %4536 = vmatpush2.msra.mxu0 0.0
  %4537 = vmatprep.subr.mxu0 0.0
  %4538 = vmatpush2.msra.mxu0 0.0
  %4539 = vmatprep.subr.mxu0 0.0
  %4540 = vmatpush2.msra.mxu0 0.0
  %4541 = vmatprep.subr.mxu0 0.0
  %4542 = vmatpush2.msra.mxu0 0.0
  %4543 = vmatprep.subr.mxu0 0.0
  %4544 = vmatpush2.msra.mxu0 0.0
  %4545 = vmatprep.mubr.f32.mxu0 0.0
  %4546 = vmatmul.mubr.f32.gmra.mxu0 %v4325
  %v4547 = vpop.f32.mrf.mxu0
  %v4548 = vadd.f32 %v698, %v4547
  %v4549 = vpop.f32.mrf.mxu0
  %4550 = vdwg.mxu0
  %v4551 = vmul.f32 %v4473, %v4548
  %v4552 = vadd.f32 %v4323, %v4551
  %v4553 = vtanh.pop %v4552
  %v4554 = vsub.f32 1.0, %v4480
  %v4555 = vmul.f32 %v4554, %v4553
  %v4556 = vmul.f32 %v4480, %v4076
  %v4557 = vadd.f32 %v4555, %v4556
  %s4558 = scalar_lea.vmem [#allocation8], 56
  %4559 = vst.msk [vmem:[%s4558] sm:$0xff] %vm173, %v4320
  %4560 = vst.msk [vmem:[#allocation9] sm:$0xff] %vm173, %v4557
  %v4561 = vld [vmem:[#allocation8] sm:$0xff]
  %v4562 = vld [vmem:[#allocation8 + $0x8] sm:$0xff]
  %v4563 = vld [vmem:[#allocation8 + $0x10] sm:$0xff]
  %v4564 = vld [vmem:[#allocation8 + $0x18] sm:$0xff]
  %v4565 = vld [vmem:[#allocation8 + $0x20] sm:$0xff]
  %v4566 = vld [vmem:[#allocation8 + $0x28] sm:$0xff]
  %v4567 = vld [vmem:[#allocation8 + $0x30] sm:$0xff]
  %v4568 = vld [vmem:[#allocation8 + $0x38] sm:$0xff]
  %4569 = vst.msk [vmem:[%s12] sm:$0xff] %vm173, %v4561
  %4570 = vst.msk [vmem:[%s12 + $0x8] sm:$0xff] %vm173, %v4562
  %4571 = vst.msk [vmem:[%s12 + $0x10] sm:$0xff] %vm173, %v4563
  %4572 = vst.msk [vmem:[%s12 + $0x18] sm:$0xff] %vm173, %v4564
  %4573 = vst.msk [vmem:[%s12 + $0x20] sm:$0xff] %vm173, %v4565
  %4574 = vst.msk [vmem:[%s12 + $0x28] sm:$0xff] %vm173, %v4566
  %4575 = vst.msk [vmem:[%s12 + $0x30] sm:$0xff] %vm173, %v4567
  %4576 = vst.msk [vmem:[%s12 + $0x38] sm:$0xff] %vm173, %v4568
  %v4577 = vld [vmem:[#allocation9] sm:$0xff]
  %v4578 = vld [vmem:[#allocation9 + $0x8] sm:$0xff]
  %v4579 = vld [vmem:[#allocation9 + $0x10] sm:$0xff]
  %v4580 = vld [vmem:[#allocation9 + $0x18] sm:$0xff]
  %v4581 = vld [vmem:[#allocation9 + $0x20] sm:$0xff]
  %v4582 = vld [vmem:[#allocation9 + $0x28] sm:$0xff]
  %v4583 = vld [vmem:[#allocation9 + $0x30] sm:$0xff]
  %v4584 = vld [vmem:[#allocation9 + $0x38] sm:$0xff]
  %4593 = vrot.lane.b32.xlu0 %v4577, 16
  %v4594 = vpop.permute.xlu0 %4593
  %4595 = vrot.lane.b32.xlu0 %v4578, 16
  %v4596 = vpop.permute.xlu0 %4595
  %4597 = vrot.lane.b32.xlu0 %v4579, 16
  %v4598 = vpop.permute.xlu0 %4597
  %4599 = vrot.lane.b32.xlu0 %v4580, 16
  %v4600 = vpop.permute.xlu0 %4599
  %4601 = vrot.lane.b32.xlu0 %v4581, 16
  %v4602 = vpop.permute.xlu0 %4601
  %4603 = vrot.lane.b32.xlu0 %v4582, 16
  %v4604 = vpop.permute.xlu0 %4603
  %4605 = vrot.lane.b32.xlu0 %v4583, 16
  %v4606 = vpop.permute.xlu0 %4605
  %4607 = vrot.lane.b32.xlu0 %v4584, 16
  %v4608 = vpop.permute.xlu0 %4607
  %vm4617 = vcmask 261248
  %4618 = vst.msk [vmem:[%s12] sm:$0xff] %vm4617, %v4594
  %4619 = vst.msk [vmem:[%s12 + $0x8] sm:$0xff] %vm4617, %v4596
  %4620 = vst.msk [vmem:[%s12 + $0x10] sm:$0xff] %vm4617, %v4598
  %4621 = vst.msk [vmem:[%s12 + $0x18] sm:$0xff] %vm4617, %v4600
  %4622 = vst.msk [vmem:[%s12 + $0x20] sm:$0xff] %vm4617, %v4602
  %4623 = vst.msk [vmem:[%s12 + $0x28] sm:$0xff] %vm4617, %v4604
  %4624 = vst.msk [vmem:[%s12 + $0x30] sm:$0xff] %vm4617, %v4606
  %4625 = vst.msk [vmem:[%s12 + $0x38] sm:$0xff] %vm4617, %v4608
  %v4626 = vld [vmem:[%s9] sm:$0xff]
  %v4627 = vld [vmem:[%s9 + $0x8] sm:$0xff]
  %v4628 = vld [vmem:[%s10] sm:$0xff]
  %v4629 = vld [vmem:[%s10 + $0x8] sm:$0xff]
  %v4631 = vsel %vm173, %v4557, 0
  %4633 = vmatprep.subr.mxu0 0.0
  %4634 = vmatpush1.msra.mxu0 0.0
  %4635 = vmatprep.subr.mxu0 0.0
  %4636 = vmatpush1.msra.mxu0 0.0
  %4637 = vmatprep.subr.mxu0 0.0
  %4638 = vmatpush1.msra.mxu0 0.0
  %4639 = vmatprep.subr.mxu0 0.0
  %4640 = vmatpush1.msra.mxu0 0.0
  %4641 = vmatprep.subr.mxu0 0.0
  %4642 = vmatpush1.msra.mxu0 0.0
  %4643 = vmatprep.subr.mxu0 0.0
  %4644 = vmatpush1.msra.mxu0 0.0
  %4645 = vmatprep.subr.mxu0 0.0
  %4646 = vmatpush1.msra.mxu0 0.0
  %4647 = vmatprep.subr.mxu0 0.0
  %4648 = vmatpush1.msra.mxu0 0.0
  %4649 = vmatprep.subr.mxu0 0.0
  %4650 = vmatpush1.msra.mxu0 0.0
  %4651 = vmatprep.subr.mxu0 0.0
  %4652 = vmatpush1.msra.mxu0 0.0
  %4653 = vmatprep.subr.mxu0 0.0
  %4654 = vmatpush1.msra.mxu0 0.0
  %4655 = vmatprep.subr.mxu0 0.0
  %4656 = vmatpush1.msra.mxu0 0.0
  %4657 = vmatprep.subr.mxu0 0.0
  %4658 = vmatpush1.msra.mxu0 0.0
  %4659 = vmatprep.subr.mxu0 0.0
  %4660 = vmatpush1.msra.mxu0 0.0
  %4661 = vmatprep.subr.mxu0 0.0
  %4662 = vmatpush1.msra.mxu0 %v4629
  %4663 = vmatprep.subr.mxu0 0.0
  %4664 = vmatpush1.msra.mxu0 %v4628
  %4665 = vmatprep.subr.mxu0 0.0
  %4666 = vmatpush2.msra.mxu0 0.0
  %4667 = vmatprep.subr.mxu0 0.0
  %4668 = vmatpush2.msra.mxu0 0.0
  %4669 = vmatprep.subr.mxu0 0.0
  %4670 = vmatpush2.msra.mxu0 0.0
  %4671 = vmatprep.subr.mxu0 0.0
  %4672 = vmatpush2.msra.mxu0 0.0
  %4673 = vmatprep.subr.mxu0 0.0
  %4674 = vmatpush2.msra.mxu0 0.0
  %4675 = vmatprep.subr.mxu0 0.0
  %4676 = vmatpush2.msra.mxu0 0.0
  %4677 = vmatprep.subr.mxu0 0.0
  %4678 = vmatpush2.msra.mxu0 0.0
  %4679 = vmatprep.subr.mxu0 0.0
  %4680 = vmatpush2.msra.mxu0 0.0
  %4681 = vmatprep.subr.mxu0 0.0
  %4682 = vmatpush2.msra.mxu0 0.0
  %4683 = vmatprep.subr.mxu0 0.0
  %4684 = vmatpush2.msra.mxu0 0.0
  %4685 = vmatprep.subr.mxu0 0.0
  %4686 = vmatpush2.msra.mxu0 0.0
  %4687 = vmatprep.subr.mxu0 0.0
  %4688 = vmatpush2.msra.mxu0 0.0
  %4689 = vmatprep.subr.mxu0 0.0
  %4690 = vmatpush2.msra.mxu0 0.0
  %4691 = vmatprep.subr.mxu0 0.0
  %4692 = vmatpush2.msra.mxu0 0.0
  %4693 = vmatprep.subr.mxu0 0.0
  %4694 = vmatpush2.msra.mxu0 0.0
  %4695 = vmatprep.subr.mxu0 0.0
  %4696 = vmatpush2.msra.mxu0 0.0
  %4697 = vmatprep.mubr.f32.mxu0 0.0
  %4698 = vmatmul.mubr.f32.gmra.mxu0 %v4631
  %v4699 = vpop.f32.mrf.mxu0
  %v4700 = vadd.f32 0.0, %v4699
  %v4701 = vpop.f32.mrf.mxu0
  %4702 = vdwg.mxu0
  %v4704 = vsel %vm173, %v4320, 0
  %4706 = vmatprep.subr.mxu0 0.0
  %4707 = vmatpush1.msra.mxu0 0.0
  %4708 = vmatprep.subr.mxu0 0.0
  %4709 = vmatpush1.msra.mxu0 0.0
  %4710 = vmatprep.subr.mxu0 0.0
  %4711 = vmatpush1.msra.mxu0 0.0
  %4712 = vmatprep.subr.mxu0 0.0
  %4713 = vmatpush1.msra.mxu0 0.0
  %4714 = vmatprep.subr.mxu0 0.0
  %4715 = vmatpush1.msra.mxu0 0.0
  %4716 = vmatprep.subr.mxu0 0.0
  %4717 = vmatpush1.msra.mxu0 0.0
  %4718 = vmatprep.subr.mxu0 0.0
  %4719 = vmatpush1.msra.mxu0 0.0
  %4720 = vmatprep.subr.mxu0 0.0
  %4721 = vmatpush1.msra.mxu0 0.0
  %4722 = vmatprep.subr.mxu0 0.0
  %4723 = vmatpush1.msra.mxu0 0.0
  %4724 = vmatprep.subr.mxu0 0.0
  %4725 = vmatpush1.msra.mxu0 0.0
  %4726 = vmatprep.subr.mxu0 0.0
  %4727 = vmatpush1.msra.mxu0 0.0
  %4728 = vmatprep.subr.mxu0 0.0
  %4729 = vmatpush1.msra.mxu0 0.0
  %4730 = vmatprep.subr.mxu0 0.0
  %4731 = vmatpush1.msra.mxu0 0.0
  %4732 = vmatprep.subr.mxu0 0.0
  %4733 = vmatpush1.msra.mxu0 0.0
  %4734 = vmatprep.subr.mxu0 0.0
  %4735 = vmatpush1.msra.mxu0 %v4627
  %4736 = vmatprep.subr.mxu0 0.0
  %4737 = vmatpush1.msra.mxu0 %v4626
  %4738 = vmatprep.subr.mxu0 0.0
  %4739 = vmatpush2.msra.mxu0 0.0
  %4740 = vmatprep.subr.mxu0 0.0
  %4741 = vmatpush2.msra.mxu0 0.0
  %4742 = vmatprep.subr.mxu0 0.0
  %4743 = vmatpush2.msra.mxu0 0.0
  %4744 = vmatprep.subr.mxu0 0.0
  %4745 = vmatpush2.msra.mxu0 0.0
  %4746 = vmatprep.subr.mxu0 0.0
  %4747 = vmatpush2.msra.mxu0 0.0
  %4748 = vmatprep.subr.mxu0 0.0
  %4749 = vmatpush2.msra.mxu0 0.0
  %4750 = vmatprep.subr.mxu0 0.0
  %4751 = vmatpush2.msra.mxu0 0.0
  %4752 = vmatprep.subr.mxu0 0.0
  %4753 = vmatpush2.msra.mxu0 0.0
  %4754 = vmatprep.subr.mxu0 0.0
  %4755 = vmatpush2.msra.mxu0 0.0
  %4756 = vmatprep.subr.mxu0 0.0
  %4757 = vmatpush2.msra.mxu0 0.0
  %4758 = vmatprep.subr.mxu0 0.0
  %4759 = vmatpush2.msra.mxu0 0.0
  %4760 = vmatprep.subr.mxu0 0.0
  %4761 = vmatpush2.msra.mxu0 0.0
  %4762 = vmatprep.subr.mxu0 0.0
  %4763 = vmatpush2.msra.mxu0 0.0
  %4764 = vmatprep.subr.mxu0 0.0
  %4765 = vmatpush2.msra.mxu0 0.0
  %4766 = vmatprep.subr.mxu0 0.0
  %4767 = vmatpush2.msra.mxu0 0.0
  %4768 = vmatprep.subr.mxu0 0.0
  %4769 = vmatpush2.msra.mxu0 0.0
  %4770 = vmatprep.mubr.f32.mxu0 0.0
  %4771 = vmatmul.mubr.f32.gmra.mxu0 %v4704
  %v4772 = vpop.f32.mrf.mxu0
  %v4773 = vadd.f32 %v4700, %v4772
  %v4774 = vpop.f32.mrf.mxu0
  %4775 = vdwg.mxu0
  %v4776 = vld [vmem:[%s11] sm:$0x1]
  %v4778 = vlaneseq
  %v4779 = vshrl.u32 %v4778, 7
  %v4780 = vsub.s32 0, %v4779
  %v4781 = vrot.slane %v4776, %v4780
  %v4783 = vadd.f32 %v4773, %v4781
  %v4784 = vtanh.pop %v4783
  %4785 = vst.msk [vmem:[%s13] sm:$0xff] %vm95, %v4784
  // Predicated region
  $region50: #{encoder_forward.1} parent=0 // pred_check
    _
  $region51: #{encoder_forward.1} parent=0 // pred_check_branch
    %4787 = sbr.rel (0) target = $region53
  $region52: #{encoder_forward.1} parent=0 // pred_region
    _
  $region53: #{encoder_forward.1} parent=0 // pred_fallthru
    _
  // Predicated region
  $region54: #{encoder_forward.1} parent=0 // pred_check
    _
  $region55: #{encoder_forward.1} parent=0 // pred_check_branch
    %4789 = sbr.rel (0) target = $region57
  $region56: #{encoder_forward.1} parent=0 // pred_region
    _
  $region57: #{encoder_forward.1} parent=0 // pred_fallthru
    _
  // Predicated region
  $region58: #{encoder_forward.1} parent=0 // pred_check
    _
  $region59: #{encoder_forward.1} parent=0 // pred_check_branch
    %4791 = sbr.rel (0) target = $region61
  $region60: #{encoder_forward.1} parent=0 // pred_region
    _
  $region61: #{encoder_forward.1} parent=0 // pred_fallthru
    _
  // Predicated region
  $region62: #{encoder_forward.1} parent=0 // pred_check
    _
  $region63: #{encoder_forward.1} parent=0 // pred_check_branch
    %4793 = sbr.rel (0) target = $region65
  $region64: #{encoder_forward.1} parent=0 // pred_region
    _
  $region65: #{encoder_forward.1} parent=0 // pred_fallthru
    _

</llo_original>
